<compile_context>
chip_gen: v7x
topology: tpu7x:2x2x1
jax: 0.10.0
libtpu: 0.0.40
codegen_flags: <defaults>
</compile_context>

<pallas_src>
import jax
import jax.numpy as jnp
from jax.experimental import pallas as pl
from jax.experimental.pallas import tpu as pltpu

BN_EPS = 1e-5


def _matmul(x, w):
    # bf16 operands on the MXU, f32 accumulation.
    return jnp.dot(x.astype(jnp.bfloat16), w, preferred_element_type=jnp.float32)


def _bn_relu(h, p_ref, idx):
    """BatchNorm1d (training-mode, biased batch stats) + ReLU, affine folded.

    p_ref rows: [2*idx] = gamma, [2*idx + 1] = beta  (each (1, hidden))."""
    gamma = p_ref[2 * idx:2 * idx + 1, :]
    beta = p_ref[2 * idx + 1:2 * idx + 2, :]
    mean = jnp.mean(h, axis=0, keepdims=True)
    d = h - mean                                    # computed once, reused
    var = jnp.mean(d * d, axis=0, keepdims=True)    # biased variance (PyTorch)
    scale = gamma * jax.lax.rsqrt(var + BN_EPS)     # tiny (1, hidden) math
    return jnp.maximum(d * scale + beta, 0.0)       # f32 elementwise (v5e safe)


def vae_kernel(x_ref, eps_ref, w_ref, p_ref, recon_ref, mulv_ref):
    input_dim = x_ref.shape[1]
    latent = eps_ref.shape[1]
    hidden = p_ref.shape[1]
    n_out_chunks = input_dim // hidden   # fc_out split into 128-lane halves

    # static, 16-aligned row offsets into the packed bf16 weight buffer
    r0 = 0
    r1 = r0 + input_dim          # end we0        [input_dim, hidden]
    r2 = r1 + hidden             # end we1        [hidden, hidden]
    r3 = r2 + hidden             # end w_mu|logvar[hidden, 2*latent]
    r4 = r3 + latent             # end wd0        [latent, hidden]
    r5 = r4 + hidden             # end wd1        [hidden, hidden]
    # then n_out_chunks blocks of [hidden, hidden] for fc_out

    x = x_ref[...]               # already bf16 (cast in wrapper)

    # ---------------- encoder ----------------
    h = _bn_relu(_matmul(x, w_ref[r0:r1, :]), p_ref, 0)
    h = _bn_relu(_matmul(h, w_ref[r1:r2, :]), p_ref, 1)

    # ------ fused mu | logvar (one 128-lane matmul, unmasked store) ------
    mulv = _matmul(h, w_ref[r2:r3, :]) + p_ref[8:9, :]
    mulv_ref[...] = mulv

    # ------------- reparameterize (f32) -------------
    mu = mulv[:, :latent]
    logvar = mulv[:, latent:]
    z = mu + eps_ref[...] * jnp.exp(0.5 * logvar)

    # ---------------- decoder ----------------
    h = _bn_relu(_matmul(z, w_ref[r3:r4, :]), p_ref, 2)
    h = _bn_relu(_matmul(h, w_ref[r4:r5, :]), p_ref, 3)

    # fc_out as lane-dense 128-wide chunks, bias rows 9.. of p_ref
    h_bf = h.astype(jnp.bfloat16)
    for c in range(n_out_chunks):
        w_c = w_ref[r5 + c * hidden:r5 + (c + 1) * hidden, :]
        logits = jnp.dot(h_bf, w_c, preferred_element_type=jnp.float32) \
            + p_ref[9 + c:10 + c, :]
        recon_ref[:, c * hidden:(c + 1) * hidden] = jax.nn.sigmoid(logits)


def init_params(key, input_dim, hidden_dim, latent_dim):
    """Deterministic synthetic parameters packed for the kernel.

    Returns:
      w_packed: bf16 [input_dim + 4*hidden + latent + input_dim, hidden]
                rows = we0 | we1 | w_mu|logvar | wd0 | wd1 | wout halves
      p_packed: f32  [8 + 1 + input_dim//hidden, hidden]
                rows = 4x(gamma,beta) | b_mu|logvar | b_out halves
    """
    assert hidden_dim == 128, "packing scheme assumes hidden == 128 lanes"
    assert 2 * latent_dim == hidden_dim, "mu|logvar fused to 128 lanes"
    assert input_dim % hidden_dim == 0, "fc_out split into 128-lane chunks"

    ks = jax.random.split(key, 7)

    def w(k, din, dout):
        return (jax.random.normal(k, (din, dout), jnp.float32)
                / jnp.sqrt(jnp.float32(din))).astype(jnp.bfloat16)

    we0 = w(ks[0], input_dim, hidden_dim)
    we1 = w(ks[1], hidden_dim, hidden_dim)
    wmu = w(ks[2], hidden_dim, latent_dim)
    wlv = w(ks[3], hidden_dim, latent_dim)
    wmulv = jnp.concatenate([wmu, wlv], axis=1)          # [hidden, 2*latent]
    wd0 = w(ks[4], latent_dim, hidden_dim)
    wd1 = w(ks[5], hidden_dim, hidden_dim)
    wout = w(ks[6], hidden_dim, input_dim)               # [hidden, input_dim]
    wout_chunks = [wout[:, c * hidden_dim:(c + 1) * hidden_dim]
                   for c in range(input_dim // hidden_dim)]

    w_packed = jnp.concatenate([we0, we1, wmulv, wd0, wd1] + wout_chunks,
                               axis=0).astype(jnp.bfloat16)

    # BN gamma=1, beta=0 (PyTorch default); biases feeding BN are dropped
    # entirely (exactly cancelled by BN mean subtraction).
    gammas = jnp.ones((4, hidden_dim), jnp.float32)
    betas = jnp.zeros((4, hidden_dim), jnp.float32)
    bn_rows = [gammas[0], betas[0], gammas[1], betas[1],
               gammas[2], betas[2], gammas[3], betas[3]]
    bmulv = jnp.zeros((hidden_dim,), jnp.float32)        # fused mu|logvar bias
    bout = jnp.zeros((input_dim,), jnp.float32)
    bout_rows = [bout[c * hidden_dim:(c + 1) * hidden_dim]
                 for c in range(input_dim // hidden_dim)]
    p_packed = jnp.stack(bn_rows + [bmulv] + bout_rows, axis=0)

    return w_packed, p_packed


@jax.jit
def vae_forward(x, eps, w_packed, p_packed):
    B, input_dim = x.shape
    latent_dim = eps.shape[1]
    hidden_dim = p_packed.shape[1]

    x_bf = x.astype(jnp.bfloat16)   # halve the largest input DMA

    # derive a tight VMEM budget (fits v7x's 32 MiB scoped default)
    io_bytes = (x_bf.size * 2 + eps.size * 4 + w_packed.size * 2 +
                p_packed.size * 4 + B * input_dim * 4 + B * 2 * latent_dim * 4)
    act_bytes = 12 * B * max(input_dim, hidden_dim) * 4
    vmem_limit = int(min(max(2 * io_bytes + act_bytes + (2 << 20), 8 << 20),
                         32 << 20))

    vmem = pl.BlockSpec(memory_space=pltpu.MemorySpace.VMEM)
    recon, mulv = pl.pallas_call(
        vae_kernel,
        out_shape=(
            jax.ShapeDtypeStruct((B, input_dim), jnp.float32),       # recon
            jax.ShapeDtypeStruct((B, 2 * latent_dim), jnp.float32),  # mu|logvar
        ),
        in_specs=[vmem, vmem, vmem, vmem],
        out_specs=(vmem, vmem),
        compiler_params=pltpu.CompilerParams(vmem_limit_bytes=vmem_limit),
    )(x_bf, eps, w_packed, p_packed)
    # split the lane-dense combined output in the wrapper
    return recon, mulv[:, :latent_dim], mulv[:, latent_dim:]


if __name__ == "__main__":
    # small model dims consistent with the module (num_layers=2); batch sized
    # to fill the MXU row width (256 on v6e/v7x, 2x128 passes on v5e).
    B, INPUT_DIM, HIDDEN_DIM, LATENT_DIM = 256, 256, 128, 64

    key = jax.random.PRNGKey(0)
    kx, keps, kp = jax.random.split(key, 3)
    x = jax.random.uniform(kx, (B, INPUT_DIM), jnp.float32)       # e.g. flattened images
    eps = jax.random.normal(keps, (B, LATENT_DIM), jnp.float32)   # reparam noise
    w_packed, p_packed = init_params(kp, INPUT_DIM, HIDDEN_DIM, LATENT_DIM)

    recon, mu, logvar = vae_forward(x, eps, w_packed, p_packed)
    jax.block_until_ready((recon, mu, logvar))

    assert recon.shape == (B, INPUT_DIM)
    assert mu.shape == (B, LATENT_DIM) and logvar.shape == (B, LATENT_DIM)
    assert bool(jnp.all(jnp.isfinite(recon)))
    assert bool(jnp.all((recon >= 0.0) & (recon <= 1.0)))
    assert bool(jnp.all(jnp.isfinite(mu))) and bool(jnp.all(jnp.isfinite(logvar)))
    print("KERNEL_OK")
</pallas_src>

<mosaic_0001>
module attributes {stable_mosaic.version = 11 : i64} {
  func.func @vae_kernel(%arg0: memref<256x256xbf16, #tpu.memory_space<vmem>>, %arg1: memref<256x64xf32, #tpu.memory_space<vmem>>, %arg2: memref<960x128xbf16, #tpu.memory_space<vmem>>, %arg3: memref<11x128xf32, #tpu.memory_space<vmem>>, %arg4: memref<256x256xf32, #tpu.memory_space<vmem>>, %arg5: memref<256x128xf32, #tpu.memory_space<vmem>>) attributes {dimension_semantics = [], scalar_prefetch = 0 : i64, scratch_operands = 0 : i64, tpu.core_type = #tpu.core_type<tc>} {
    %c0 = arith.constant 0 : index
    %c0_0 = arith.constant 0 : index
    %0 = vector.load %arg0[%c0, %c0_0] : memref<256x256xbf16, #tpu.memory_space<vmem>>, vector<256x256xbf16>
    %c0_1 = arith.constant 0 : index
    %c0_2 = arith.constant 0 : index
    %1 = vector.load %arg2[%c0_1, %c0_2] : memref<960x128xbf16, #tpu.memory_space<vmem>>, vector<256x128xbf16>
    %cst = arith.constant dense<0.000000e+00> : vector<256x128xf32>
    %2 = tpu.matmul %0, %1, %cst {dimension_numbers = #tpu.dot_dimension_numbers<[1], [0], [0], [1], [0, 0, 1, 1], [], []>} : vector<256x256xbf16>, vector<256x128xbf16>, vector<256x128xf32> -> vector<256x128xf32>
    %c0_3 = arith.constant 0 : index
    %c0_4 = arith.constant 0 : index
    %3 = vector.load %arg3[%c0_3, %c0_4] : memref<11x128xf32, #tpu.memory_space<vmem>>, vector<1x128xf32>
    %c1 = arith.constant 1 : index
    %c0_5 = arith.constant 0 : index
    %4 = vector.load %arg3[%c1, %c0_5] : memref<11x128xf32, #tpu.memory_space<vmem>>, vector<1x128xf32>
    %cst_6 = arith.constant dense<0.000000e+00> : vector<128xf32>
    %5 = vector.multi_reduction <add>, %2, %cst_6 [0] : vector<256x128xf32> to vector<128xf32>
    %6 = vector.shape_cast %5 : vector<128xf32> to vector<1x128xf32>
    %cst_7 = arith.constant 2.560000e+02 : f32
    %7 = vector.broadcast %cst_7 : f32 to vector<1x128xf32>
    %8 = arith.divf %6, %7 : vector<1x128xf32>
    %9 = vector.broadcast %8 : vector<1x128xf32> to vector<256x128xf32>
    %10 = arith.subf %2, %9 : vector<256x128xf32>
    %11 = arith.mulf %10, %10 : vector<256x128xf32>
    %cst_8 = arith.constant dense<0.000000e+00> : vector<128xf32>
    %12 = vector.multi_reduction <add>, %11, %cst_8 [0] : vector<256x128xf32> to vector<128xf32>
    %13 = vector.shape_cast %12 : vector<128xf32> to vector<1x128xf32>
    %cst_9 = arith.constant 2.560000e+02 : f32
    %14 = vector.broadcast %cst_9 : f32 to vector<1x128xf32>
    %15 = arith.divf %13, %14 : vector<1x128xf32>
    %cst_10 = arith.constant 9.99999974E-6 : f32
    %16 = vector.broadcast %cst_10 : f32 to vector<1x128xf32>
    %17 = arith.addf %15, %16 : vector<1x128xf32>
    %18 = math.rsqrt %17 : vector<1x128xf32>
    %19 = arith.mulf %3, %18 : vector<1x128xf32>
    %20 = vector.broadcast %19 : vector<1x128xf32> to vector<256x128xf32>
    %21 = arith.mulf %10, %20 : vector<256x128xf32>
    %22 = vector.broadcast %4 : vector<1x128xf32> to vector<256x128xf32>
    %23 = arith.addf %21, %22 : vector<256x128xf32>
    %cst_11 = arith.constant 0.000000e+00 : f32
    %24 = vector.broadcast %cst_11 : f32 to vector<256x128xf32>
    %25 = arith.maximumf %23, %24 : vector<256x128xf32>
    %c256 = arith.constant 256 : index
    %c0_12 = arith.constant 0 : index
    %26 = vector.load %arg2[%c256, %c0_12] : memref<960x128xbf16, #tpu.memory_space<vmem>>, vector<128x128xbf16>
    %27 = arith.truncf %25 : vector<256x128xf32> to vector<256x128xbf16>
    %cst_13 = arith.constant dense<0.000000e+00> : vector<256x128xf32>
    %28 = tpu.matmul %27, %26, %cst_13 {dimension_numbers = #tpu.dot_dimension_numbers<[1], [0], [0], [1], [0, 0, 1, 1], [], []>} : vector<256x128xbf16>, vector<128x128xbf16>, vector<256x128xf32> -> vector<256x128xf32>
    %c2 = arith.constant 2 : index
    %c0_14 = arith.constant 0 : index
    %29 = vector.load %arg3[%c2, %c0_14] : memref<11x128xf32, #tpu.memory_space<vmem>>, vector<1x128xf32>
    %c3 = arith.constant 3 : index
    %c0_15 = arith.constant 0 : index
    %30 = vector.load %arg3[%c3, %c0_15] : memref<11x128xf32, #tpu.memory_space<vmem>>, vector<1x128xf32>
    %cst_16 = arith.constant dense<0.000000e+00> : vector<128xf32>
    %31 = vector.multi_reduction <add>, %28, %cst_16 [0] : vector<256x128xf32> to vector<128xf32>
    %32 = vector.shape_cast %31 : vector<128xf32> to vector<1x128xf32>
    %cst_17 = arith.constant 2.560000e+02 : f32
    %33 = vector.broadcast %cst_17 : f32 to vector<1x128xf32>
    %34 = arith.divf %32, %33 : vector<1x128xf32>
    %35 = vector.broadcast %34 : vector<1x128xf32> to vector<256x128xf32>
    %36 = arith.subf %28, %35 : vector<256x128xf32>
    %37 = arith.mulf %36, %36 : vector<256x128xf32>
    %cst_18 = arith.constant dense<0.000000e+00> : vector<128xf32>
    %38 = vector.multi_reduction <add>, %37, %cst_18 [0] : vector<256x128xf32> to vector<128xf32>
    %39 = vector.shape_cast %38 : vector<128xf32> to vector<1x128xf32>
    %cst_19 = arith.constant 2.560000e+02 : f32
    %40 = vector.broadcast %cst_19 : f32 to vector<1x128xf32>
    %41 = arith.divf %39, %40 : vector<1x128xf32>
    %cst_20 = arith.constant 9.99999974E-6 : f32
    %42 = vector.broadcast %cst_20 : f32 to vector<1x128xf32>
    %43 = arith.addf %41, %42 : vector<1x128xf32>
    %44 = math.rsqrt %43 : vector<1x128xf32>
    %45 = arith.mulf %29, %44 : vector<1x128xf32>
    %46 = vector.broadcast %45 : vector<1x128xf32> to vector<256x128xf32>
    %47 = arith.mulf %36, %46 : vector<256x128xf32>
    %48 = vector.broadcast %30 : vector<1x128xf32> to vector<256x128xf32>
    %49 = arith.addf %47, %48 : vector<256x128xf32>
    %cst_21 = arith.constant 0.000000e+00 : f32
    %50 = vector.broadcast %cst_21 : f32 to vector<256x128xf32>
    %51 = arith.maximumf %49, %50 : vector<256x128xf32>
    %c384 = arith.constant 384 : index
    %c0_22 = arith.constant 0 : index
    %52 = vector.load %arg2[%c384, %c0_22] : memref<960x128xbf16, #tpu.memory_space<vmem>>, vector<128x128xbf16>
    %53 = arith.truncf %51 : vector<256x128xf32> to vector<256x128xbf16>
    %cst_23 = arith.constant dense<0.000000e+00> : vector<256x128xf32>
    %54 = tpu.matmul %53, %52, %cst_23 {dimension_numbers = #tpu.dot_dimension_numbers<[1], [0], [0], [1], [0, 0, 1, 1], [], []>} : vector<256x128xbf16>, vector<128x128xbf16>, vector<256x128xf32> -> vector<256x128xf32>
    %c8 = arith.constant 8 : index
    %c0_24 = arith.constant 0 : index
    %55 = vector.load %arg3[%c8, %c0_24] : memref<11x128xf32, #tpu.memory_space<vmem>>, vector<1x128xf32>
    %56 = vector.broadcast %55 : vector<1x128xf32> to vector<256x128xf32>
    %57 = arith.addf %54, %56 : vector<256x128xf32>
    %c0_25 = arith.constant 0 : index
    %c0_26 = arith.constant 0 : index
    %58 = vector.load %arg5[%c0_25, %c0_26] : memref<256x128xf32, #tpu.memory_space<vmem>>, vector<256x128xf32>
    tpu.vector_store %arg5[%c0_25, %c0_26], %57 {strides = array<i32>} : memref<256x128xf32, #tpu.memory_space<vmem>>, vector<256x128xf32>,
    %59 = vector.extract_strided_slice %57 {offsets = [0, 0], sizes = [256, 64], strides = [1, 1]} : vector<256x128xf32> to vector<256x64xf32>
    %60 = vector.extract_strided_slice %57 {offsets = [0, 64], sizes = [256, 64], strides = [1, 1]} : vector<256x128xf32> to vector<256x64xf32>
    %c0_27 = arith.constant 0 : index
    %c0_28 = arith.constant 0 : index
    %61 = vector.load %arg1[%c0_27, %c0_28] : memref<256x64xf32, #tpu.memory_space<vmem>>, vector<256x64xf32>
    %cst_29 = arith.constant 5.000000e-01 : f32
    %62 = vector.broadcast %cst_29 : f32 to vector<256x64xf32>
    %63 = arith.mulf %62, %60 : vector<256x64xf32>
    %64 = math.exp %63 : vector<256x64xf32>
    %65 = arith.mulf %61, %64 : vector<256x64xf32>
    %66 = arith.addf %59, %65 : vector<256x64xf32>
    %c512 = arith.constant 512 : index
    %c0_30 = arith.constant 0 : index
    %67 = vector.load %arg2[%c512, %c0_30] : memref<960x128xbf16, #tpu.memory_space<vmem>>, vector<64x128xbf16>
    %68 = arith.truncf %66 : vector<256x64xf32> to vector<256x64xbf16>
    %cst_31 = arith.constant dense<0.000000e+00> : vector<256x128xf32>
    %69 = tpu.matmul %68, %67, %cst_31 {dimension_numbers = #tpu.dot_dimension_numbers<[1], [0], [0], [1], [0, 0, 1, 1], [], []>} : vector<256x64xbf16>, vector<64x128xbf16>, vector<256x128xf32> -> vector<256x128xf32>
    %c4 = arith.constant 4 : index
    %c0_32 = arith.constant 0 : index
    %70 = vector.load %arg3[%c4, %c0_32] : memref<11x128xf32, #tpu.memory_space<vmem>>, vector<1x128xf32>
    %c5 = arith.constant 5 : index
    %c0_33 = arith.constant 0 : index
    %71 = vector.load %arg3[%c5, %c0_33] : memref<11x128xf32, #tpu.memory_space<vmem>>, vector<1x128xf32>
    %cst_34 = arith.constant dense<0.000000e+00> : vector<128xf32>
    %72 = vector.multi_reduction <add>, %69, %cst_34 [0] : vector<256x128xf32> to vector<128xf32>
    %73 = vector.shape_cast %72 : vector<128xf32> to vector<1x128xf32>
    %cst_35 = arith.constant 2.560000e+02 : f32
    %74 = vector.broadcast %cst_35 : f32 to vector<1x128xf32>
    %75 = arith.divf %73, %74 : vector<1x128xf32>
    %76 = vector.broadcast %75 : vector<1x128xf32> to vector<256x128xf32>
    %77 = arith.subf %69, %76 : vector<256x128xf32>
    %78 = arith.mulf %77, %77 : vector<256x128xf32>
    %cst_36 = arith.constant dense<0.000000e+00> : vector<128xf32>
    %79 = vector.multi_reduction <add>, %78, %cst_36 [0] : vector<256x128xf32> to vector<128xf32>
    %80 = vector.shape_cast %79 : vector<128xf32> to vector<1x128xf32>
    %cst_37 = arith.constant 2.560000e+02 : f32
    %81 = vector.broadcast %cst_37 : f32 to vector<1x128xf32>
    %82 = arith.divf %80, %81 : vector<1x128xf32>
    %cst_38 = arith.constant 9.99999974E-6 : f32
    %83 = vector.broadcast %cst_38 : f32 to vector<1x128xf32>
    %84 = arith.addf %82, %83 : vector<1x128xf32>
    %85 = math.rsqrt %84 : vector<1x128xf32>
    %86 = arith.mulf %70, %85 : vector<1x128xf32>
    %87 = vector.broadcast %86 : vector<1x128xf32> to vector<256x128xf32>
    %88 = arith.mulf %77, %87 : vector<256x128xf32>
    %89 = vector.broadcast %71 : vector<1x128xf32> to vector<256x128xf32>
    %90 = arith.addf %88, %89 : vector<256x128xf32>
    %cst_39 = arith.constant 0.000000e+00 : f32
    %91 = vector.broadcast %cst_39 : f32 to vector<256x128xf32>
    %92 = arith.maximumf %90, %91 : vector<256x128xf32>
    %c576 = arith.constant 576 : index
    %c0_40 = arith.constant 0 : index
    %93 = vector.load %arg2[%c576, %c0_40] : memref<960x128xbf16, #tpu.memory_space<vmem>>, vector<128x128xbf16>
    %94 = arith.truncf %92 : vector<256x128xf32> to vector<256x128xbf16>
    %cst_41 = arith.constant dense<0.000000e+00> : vector<256x128xf32>
    %95 = tpu.matmul %94, %93, %cst_41 {dimension_numbers = #tpu.dot_dimension_numbers<[1], [0], [0], [1], [0, 0, 1, 1], [], []>} : vector<256x128xbf16>, vector<128x128xbf16>, vector<256x128xf32> -> vector<256x128xf32>
    %c6 = arith.constant 6 : index
    %c0_42 = arith.constant 0 : index
    %96 = vector.load %arg3[%c6, %c0_42] : memref<11x128xf32, #tpu.memory_space<vmem>>, vector<1x128xf32>
    %c7 = arith.constant 7 : index
    %c0_43 = arith.constant 0 : index
    %97 = vector.load %arg3[%c7, %c0_43] : memref<11x128xf32, #tpu.memory_space<vmem>>, vector<1x128xf32>
    %cst_44 = arith.constant dense<0.000000e+00> : vector<128xf32>
    %98 = vector.multi_reduction <add>, %95, %cst_44 [0] : vector<256x128xf32> to vector<128xf32>
    %99 = vector.shape_cast %98 : vector<128xf32> to vector<1x128xf32>
    %cst_45 = arith.constant 2.560000e+02 : f32
    %100 = vector.broadcast %cst_45 : f32 to vector<1x128xf32>
    %101 = arith.divf %99, %100 : vector<1x128xf32>
    %102 = vector.broadcast %101 : vector<1x128xf32> to vector<256x128xf32>
    %103 = arith.subf %95, %102 : vector<256x128xf32>
    %104 = arith.mulf %103, %103 : vector<256x128xf32>
    %cst_46 = arith.constant dense<0.000000e+00> : vector<128xf32>
    %105 = vector.multi_reduction <add>, %104, %cst_46 [0] : vector<256x128xf32> to vector<128xf32>
    %106 = vector.shape_cast %105 : vector<128xf32> to vector<1x128xf32>
    %cst_47 = arith.constant 2.560000e+02 : f32
    %107 = vector.broadcast %cst_47 : f32 to vector<1x128xf32>
    %108 = arith.divf %106, %107 : vector<1x128xf32>
    %cst_48 = arith.constant 9.99999974E-6 : f32
    %109 = vector.broadcast %cst_48 : f32 to vector<1x128xf32>
    %110 = arith.addf %108, %109 : vector<1x128xf32>
    %111 = math.rsqrt %110 : vector<1x128xf32>
    %112 = arith.mulf %96, %111 : vector<1x128xf32>
    %113 = vector.broadcast %112 : vector<1x128xf32> to vector<256x128xf32>
    %114 = arith.mulf %103, %113 : vector<256x128xf32>
    %115 = vector.broadcast %97 : vector<1x128xf32> to vector<256x128xf32>
    %116 = arith.addf %114, %115 : vector<256x128xf32>
    %cst_49 = arith.constant 0.000000e+00 : f32
    %117 = vector.broadcast %cst_49 : f32 to vector<256x128xf32>
    %118 = arith.maximumf %116, %117 : vector<256x128xf32>
    %119 = arith.truncf %118 : vector<256x128xf32> to vector<256x128xbf16>
    %c704 = arith.constant 704 : index
    %c0_50 = arith.constant 0 : index
    %120 = vector.load %arg2[%c704, %c0_50] : memref<960x128xbf16, #tpu.memory_space<vmem>>, vector<128x128xbf16>
    %cst_51 = arith.constant dense<0.000000e+00> : vector<256x128xf32>
    %121 = tpu.matmul %119, %120, %cst_51 {dimension_numbers = #tpu.dot_dimension_numbers<[1], [0], [0], [1], [0, 0, 1, 1], [], []>} : vector<256x128xbf16>, vector<128x128xbf16>, vector<256x128xf32> -> vector<256x128xf32>
    %c9 = arith.constant 9 : index
    %c0_52 = arith.constant 0 : index
    %122 = vector.load %arg3[%c9, %c0_52] : memref<11x128xf32, #tpu.memory_space<vmem>>, vector<1x128xf32>
    %123 = vector.broadcast %122 : vector<1x128xf32> to vector<256x128xf32>
    %124 = arith.addf %121, %123 : vector<256x128xf32>
    %125 = arith.negf %124 : vector<256x128xf32>
    %126 = math.exp %125 : vector<256x128xf32>
    %cst_53 = arith.constant 1.000000e+00 : f32
    %127 = vector.broadcast %cst_53 : f32 to vector<256x128xf32>
    %128 = arith.addf %127, %126 : vector<256x128xf32>
    %129 = arith.divf %127, %128 : vector<256x128xf32>
    %c0_54 = arith.constant 0 : index
    %c0_55 = arith.constant 0 : index
    %130 = vector.load %arg4[%c0_54, %c0_55] : memref<256x256xf32, #tpu.memory_space<vmem>>, vector<256x128xf32>
    tpu.vector_store %arg4[%c0_54, %c0_55], %129 {strides = array<i32>} : memref<256x256xf32, #tpu.memory_space<vmem>>, vector<256x128xf32>,
    %c832 = arith.constant 832 : index
    %c0_56 = arith.constant 0 : index
    %131 = vector.load %arg2[%c832, %c0_56] : memref<960x128xbf16, #tpu.memory_space<vmem>>, vector<128x128xbf16>
    %cst_57 = arith.constant dense<0.000000e+00> : vector<256x128xf32>
    %132 = tpu.matmul %119, %131, %cst_57 {dimension_numbers = #tpu.dot_dimension_numbers<[1], [0], [0], [1], [0, 0, 1, 1], [], []>} : vector<256x128xbf16>, vector<128x128xbf16>, vector<256x128xf32> -> vector<256x128xf32>
    %c10 = arith.constant 10 : index
    %c0_58 = arith.constant 0 : index
    %133 = vector.load %arg3[%c10, %c0_58] : memref<11x128xf32, #tpu.memory_space<vmem>>, vector<1x128xf32>
    %134 = vector.broadcast %133 : vector<1x128xf32> to vector<256x128xf32>
    %135 = arith.addf %132, %134 : vector<256x128xf32>
    %136 = arith.negf %135 : vector<256x128xf32>
    %137 = math.exp %136 : vector<256x128xf32>
    %cst_59 = arith.constant 1.000000e+00 : f32
    %138 = vector.broadcast %cst_59 : f32 to vector<256x128xf32>
    %139 = arith.addf %138, %137 : vector<256x128xf32>
    %140 = arith.divf %138, %139 : vector<256x128xf32>
    %c0_60 = arith.constant 0 : index
    %c128 = arith.constant 128 : index
    %141 = vector.load %arg4[%c0_60, %c128] : memref<256x256xf32, #tpu.memory_space<vmem>>, vector<256x128xf32>
    tpu.vector_store %arg4[%c0_60, %c128], %140 {strides = array<i32>} : memref<256x256xf32, #tpu.memory_space<vmem>>, vector<256x128xf32>,
    return
  }
}

</mosaic_0001>

<llo_original>
// kernel: vae_forward.1
$region0: #{vae_forward.1}
  #allocation0 [shape = 'u32[]', space=smem, size = 0x4, offset = 0x4, fixed_abs, tag = 'smem constant byte address 0x4 - core index']
  #allocation1 [shape = 'u32[144,128]{1,0:T(1,128)}', space=vmem, size = 0x12000, scoped, tag = 'internal scratch']
  %s0 = inlined_call_operand.vmem [shape: bf16[256,256], index: 0, kind: input, shape index: {}]
  %s1 = inlined_call_operand.vmem [shape: f32[256,64], index: 1, kind: input, shape index: {}]
  %s2 = inlined_call_operand.vmem [shape: bf16[960,128], index: 2, kind: input, shape index: {}]
  %s3 = inlined_call_operand.vmem [shape: f32[11,128], index: 3, kind: input, shape index: {}]
  %s4 = inlined_call_operand.hbm [shape: f32[256,256], index: 4, kind: output, shape index: {0}]
  %s5 = inlined_call_operand.vmem [shape: f32[256,128], index: 5, kind: output, shape index: {1}]
  %6 = xla_tuple %s4, %s5
  %s7 = sld [smem:[#allocation0]]
  $region34: #{vae_forward.1} parent=0
    _
  %s9 = ssub.s32 1, %s7
  %s10 = scalar_select 0, %s9, %s7
  $region1: #{vae_forward.1} parent=0
    #allocation2 [shape = 'u8[262144]{0}', space=vmem, size = 0x40000, scoped, tag = 'output window, operand 0, single buffered']
    #allocation3 [shape = 's32[1]{0}', space=sflag, size = 0x4, scoped, tag = 'scoped memory for vae_forward.1']
    %11 = vsyncpa [#allocation3], 0
    // Predicated region
    $region2: #{vae_forward.1} parent=1 // pred_check
      _
    $region3: #{vae_forward.1} parent=1 // pred_check_branch
      %13 = sbr.rel (0) target = $region5
    $region4: #{vae_forward.1} parent=1 // pred_region
      _
    $region5: #{vae_forward.1} parent=1 // pred_fallthru
      _
    // Predicated region
    $region6: #{vae_forward.1} parent=1 // pred_check
      _
    $region7: #{vae_forward.1} parent=1 // pred_check_branch
      %15 = sbr.rel (0) target = $region9
    $region8: #{vae_forward.1} parent=1 // pred_region
      _
    $region9: #{vae_forward.1} parent=1 // pred_fallthru
      _
    // Predicated region
    $region10: #{vae_forward.1} parent=1 // pred_check
      _
    $region11: #{vae_forward.1} parent=1 // pred_check_branch
      %17 = sbr.rel (0) target = $region13
    $region12: #{vae_forward.1} parent=1 // pred_region
      _
    $region13: #{vae_forward.1} parent=1 // pred_fallthru
      _
    // Predicated region
    $region14: #{vae_forward.1} parent=1 // pred_check
      _
    $region15: #{vae_forward.1} parent=1 // pred_check_branch
      %19 = sbr.rel (0) target = $region17
    $region16: #{vae_forward.1} parent=1 // pred_region
      _
    $region17: #{vae_forward.1} parent=1 // pred_fallthru
      _
    %v21 = vld [vmem:[%s0] sm:$0xff]
    %v22 = vld [vmem:[%s0 + $0x8] sm:$0xff]
    %v23 = vld [vmem:[%s0 + $0x10] sm:$0xff]
    %v24 = vld [vmem:[%s0 + $0x18] sm:$0xff]
    %v25 = vld [vmem:[%s0 + $0x20] sm:$0xff]
    %v26 = vld [vmem:[%s0 + $0x28] sm:$0xff]
    %v27 = vld [vmem:[%s0 + $0x30] sm:$0xff]
    %v28 = vld [vmem:[%s0 + $0x38] sm:$0xff]
    %v29 = vld [vmem:[%s0 + $0x40] sm:$0xff]
    %v30 = vld [vmem:[%s0 + $0x48] sm:$0xff]
    %v31 = vld [vmem:[%s0 + $0x50] sm:$0xff]
    %v32 = vld [vmem:[%s0 + $0x58] sm:$0xff]
    %v33 = vld [vmem:[%s0 + $0x60] sm:$0xff]
    %v34 = vld [vmem:[%s0 + $0x68] sm:$0xff]
    %v35 = vld [vmem:[%s0 + $0x70] sm:$0xff]
    %v36 = vld [vmem:[%s0 + $0x78] sm:$0xff]
    %v37 = vld [vmem:[%s0 + $0x80] sm:$0xff]
    %v38 = vld [vmem:[%s0 + $0x88] sm:$0xff]
    %v39 = vld [vmem:[%s0 + $0x90] sm:$0xff]
    %v40 = vld [vmem:[%s0 + $0x98] sm:$0xff]
    %v41 = vld [vmem:[%s0 + $0xa0] sm:$0xff]
    %v42 = vld [vmem:[%s0 + $0xa8] sm:$0xff]
    %v43 = vld [vmem:[%s0 + $0xb0] sm:$0xff]
    %v44 = vld [vmem:[%s0 + $0xb8] sm:$0xff]
    %v45 = vld [vmem:[%s0 + $0xc0] sm:$0xff]
    %v46 = vld [vmem:[%s0 + $0xc8] sm:$0xff]
    %v47 = vld [vmem:[%s0 + $0xd0] sm:$0xff]
    %v48 = vld [vmem:[%s0 + $0xd8] sm:$0xff]
    %v49 = vld [vmem:[%s0 + $0xe0] sm:$0xff]
    %v50 = vld [vmem:[%s0 + $0xe8] sm:$0xff]
    %v51 = vld [vmem:[%s0 + $0xf0] sm:$0xff]
    %v52 = vld [vmem:[%s0 + $0xf8] sm:$0xff]
    %v53 = vld [vmem:[%s2] sm:$0xf]
    %v54 = vld [vmem:[%s2 + $0x4] sm:$0xf]
    %v55 = vld [vmem:[%s2 + $0x8] sm:$0xf]
    %v56 = vld [vmem:[%s2 + $0xc] sm:$0xf]
    %v57 = vld [vmem:[%s2 + $0x10] sm:$0xf]
    %v58 = vld [vmem:[%s2 + $0x14] sm:$0xf]
    %v59 = vld [vmem:[%s2 + $0x18] sm:$0xf]
    %v60 = vld [vmem:[%s2 + $0x1c] sm:$0xf]
    %v61 = vld [vmem:[%s2 + $0x20] sm:$0xf]
    %v62 = vld [vmem:[%s2 + $0x24] sm:$0xf]
    %v63 = vld [vmem:[%s2 + $0x28] sm:$0xf]
    %v64 = vld [vmem:[%s2 + $0x2c] sm:$0xf]
    %v65 = vld [vmem:[%s2 + $0x30] sm:$0xf]
    %v66 = vld [vmem:[%s2 + $0x34] sm:$0xf]
    %v67 = vld [vmem:[%s2 + $0x38] sm:$0xf]
    %v68 = vld [vmem:[%s2 + $0x3c] sm:$0xf]
    %v69 = vld [vmem:[%s2 + $0x40] sm:$0xf]
    %v70 = vld [vmem:[%s2 + $0x44] sm:$0xf]
    %v71 = vld [vmem:[%s2 + $0x48] sm:$0xf]
    %v72 = vld [vmem:[%s2 + $0x4c] sm:$0xf]
    %v73 = vld [vmem:[%s2 + $0x50] sm:$0xf]
    %v74 = vld [vmem:[%s2 + $0x54] sm:$0xf]
    %v75 = vld [vmem:[%s2 + $0x58] sm:$0xf]
    %v76 = vld [vmem:[%s2 + $0x5c] sm:$0xf]
    %v77 = vld [vmem:[%s2 + $0x60] sm:$0xf]
    %v78 = vld [vmem:[%s2 + $0x64] sm:$0xf]
    %v79 = vld [vmem:[%s2 + $0x68] sm:$0xf]
    %v80 = vld [vmem:[%s2 + $0x6c] sm:$0xf]
    %v81 = vld [vmem:[%s2 + $0x70] sm:$0xf]
    %v82 = vld [vmem:[%s2 + $0x74] sm:$0xf]
    %v83 = vld [vmem:[%s2 + $0x78] sm:$0xf]
    %v84 = vld [vmem:[%s2 + $0x7c] sm:$0xf]
    %v117 = vunpack.c.l.b16 %v21
    %v118 = vunpack.c.h.b16 %v21
    %v119 = vunpack.c.l.b16 %v22
    %v120 = vunpack.c.h.b16 %v22
    %v121 = vunpack.c.l.b16 %v23
    %v122 = vunpack.c.h.b16 %v23
    %v123 = vunpack.c.l.b16 %v24
    %v124 = vunpack.c.h.b16 %v24
    %v125 = vunpack.c.l.b16 %v25
    %v126 = vunpack.c.h.b16 %v25
    %v127 = vunpack.c.l.b16 %v26
    %v128 = vunpack.c.h.b16 %v26
    %v129 = vunpack.c.l.b16 %v27
    %v130 = vunpack.c.h.b16 %v27
    %v131 = vunpack.c.l.b16 %v28
    %v132 = vunpack.c.h.b16 %v28
    %v133 = vunpack.c.l.b16 %v29
    %v134 = vunpack.c.h.b16 %v29
    %v135 = vunpack.c.l.b16 %v30
    %v136 = vunpack.c.h.b16 %v30
    %v137 = vunpack.c.l.b16 %v31
    %v138 = vunpack.c.h.b16 %v31
    %v139 = vunpack.c.l.b16 %v32
    %v140 = vunpack.c.h.b16 %v32
    %v141 = vunpack.c.l.b16 %v33
    %v142 = vunpack.c.h.b16 %v33
    %v143 = vunpack.c.l.b16 %v34
    %v144 = vunpack.c.h.b16 %v34
    %v145 = vunpack.c.l.b16 %v35
    %v146 = vunpack.c.h.b16 %v35
    %v147 = vunpack.c.l.b16 %v36
    %v148 = vunpack.c.h.b16 %v36
    %v149 = vunpack.c.l.b16 %v37
    %v150 = vunpack.c.h.b16 %v37
    %v151 = vunpack.c.l.b16 %v38
    %v152 = vunpack.c.h.b16 %v38
    %v153 = vunpack.c.l.b16 %v39
    %v154 = vunpack.c.h.b16 %v39
    %v155 = vunpack.c.l.b16 %v40
    %v156 = vunpack.c.h.b16 %v40
    %v157 = vunpack.c.l.b16 %v41
    %v158 = vunpack.c.h.b16 %v41
    %v159 = vunpack.c.l.b16 %v42
    %v160 = vunpack.c.h.b16 %v42
    %v161 = vunpack.c.l.b16 %v43
    %v162 = vunpack.c.h.b16 %v43
    %v163 = vunpack.c.l.b16 %v44
    %v164 = vunpack.c.h.b16 %v44
    %v165 = vunpack.c.l.b16 %v45
    %v166 = vunpack.c.h.b16 %v45
    %v167 = vunpack.c.l.b16 %v46
    %v168 = vunpack.c.h.b16 %v46
    %v169 = vunpack.c.l.b16 %v47
    %v170 = vunpack.c.h.b16 %v47
    %v171 = vunpack.c.l.b16 %v48
    %v172 = vunpack.c.h.b16 %v48
    %v173 = vunpack.c.l.b16 %v49
    %v174 = vunpack.c.h.b16 %v49
    %v175 = vunpack.c.l.b16 %v50
    %v176 = vunpack.c.h.b16 %v50
    %v177 = vunpack.c.l.b16 %v51
    %v178 = vunpack.c.h.b16 %v51
    %v179 = vunpack.c.l.b16 %v52
    %v180 = vunpack.c.h.b16 %v52
    %v181 = vpack.c.b16 %v119, %v117
    %v182 = vpack.c.b16 %v120, %v118
    %v183 = vpack.c.b16 %v123, %v121
    %v184 = vpack.c.b16 %v124, %v122
    %v185 = vpack.c.b16 %v127, %v125
    %v186 = vpack.c.b16 %v128, %v126
    %v187 = vpack.c.b16 %v131, %v129
    %v188 = vpack.c.b16 %v132, %v130
    %v189 = vpack.c.b16 %v135, %v133
    %v190 = vpack.c.b16 %v136, %v134
    %v191 = vpack.c.b16 %v139, %v137
    %v192 = vpack.c.b16 %v140, %v138
    %v193 = vpack.c.b16 %v143, %v141
    %v194 = vpack.c.b16 %v144, %v142
    %v195 = vpack.c.b16 %v147, %v145
    %v196 = vpack.c.b16 %v148, %v146
    %v197 = vpack.c.b16 %v151, %v149
    %v198 = vpack.c.b16 %v152, %v150
    %v199 = vpack.c.b16 %v155, %v153
    %v200 = vpack.c.b16 %v156, %v154
    %v201 = vpack.c.b16 %v159, %v157
    %v202 = vpack.c.b16 %v160, %v158
    %v203 = vpack.c.b16 %v163, %v161
    %v204 = vpack.c.b16 %v164, %v162
    %v205 = vpack.c.b16 %v167, %v165
    %v206 = vpack.c.b16 %v168, %v166
    %v207 = vpack.c.b16 %v171, %v169
    %v208 = vpack.c.b16 %v172, %v170
    %v209 = vpack.c.b16 %v175, %v173
    %v210 = vpack.c.b16 %v176, %v174
    %v211 = vpack.c.b16 %v179, %v177
    %v212 = vpack.c.b16 %v180, %v178
    %v277 = vunpack.c.l.b16 %v53
    %v278 = vunpack.c.l.b16 %v54
    %v279 = vunpack.c.l.b16 %v55
    %v280 = vunpack.c.l.b16 %v56
    %v281 = vunpack.c.l.b16 %v57
    %v282 = vunpack.c.l.b16 %v58
    %v283 = vunpack.c.l.b16 %v59
    %v284 = vunpack.c.l.b16 %v60
    %v285 = vunpack.c.l.b16 %v61
    %v286 = vunpack.c.l.b16 %v62
    %v287 = vunpack.c.l.b16 %v63
    %v288 = vunpack.c.l.b16 %v64
    %v289 = vunpack.c.l.b16 %v65
    %v290 = vunpack.c.l.b16 %v66
    %v291 = vunpack.c.l.b16 %v67
    %v292 = vunpack.c.l.b16 %v68
    %v293 = vunpack.c.l.b16 %v69
    %v294 = vunpack.c.l.b16 %v70
    %v295 = vunpack.c.l.b16 %v71
    %v296 = vunpack.c.l.b16 %v72
    %v297 = vunpack.c.l.b16 %v73
    %v298 = vunpack.c.l.b16 %v74
    %v299 = vunpack.c.l.b16 %v75
    %v300 = vunpack.c.l.b16 %v76
    %v301 = vunpack.c.l.b16 %v77
    %v302 = vunpack.c.l.b16 %v78
    %v303 = vunpack.c.l.b16 %v79
    %v304 = vunpack.c.l.b16 %v80
    %v305 = vunpack.c.l.b16 %v81
    %v306 = vunpack.c.l.b16 %v82
    %v307 = vunpack.c.l.b16 %v83
    %v308 = vunpack.c.l.b16 %v84
    %v309 = vpack.c.b16 %v278, %v277
    %v310 = vpack.c.b16 %v280, %v279
    %v311 = vpack.c.b16 %v282, %v281
    %v312 = vpack.c.b16 %v284, %v283
    %v313 = vpack.c.b16 %v286, %v285
    %v314 = vpack.c.b16 %v288, %v287
    %v315 = vpack.c.b16 %v290, %v289
    %v316 = vpack.c.b16 %v292, %v291
    %v317 = vpack.c.b16 %v294, %v293
    %v318 = vpack.c.b16 %v296, %v295
    %v319 = vpack.c.b16 %v298, %v297
    %v320 = vpack.c.b16 %v300, %v299
    %v321 = vpack.c.b16 %v302, %v301
    %v322 = vpack.c.b16 %v304, %v303
    %v323 = vpack.c.b16 %v306, %v305
    %v324 = vpack.c.b16 %v308, %v307
    %341 = vmatprep.subr.bf16.mxu0 0
    %342 = vmatpush1.bf16.msra.mxu0 %v309
    %343 = vmatprep.subr.bf16.mxu0 0
    %344 = vmatpush1.bf16.msra.mxu0 %v310
    %345 = vmatprep.subr.bf16.mxu0 0
    %346 = vmatpush1.bf16.msra.mxu0 %v311
    %347 = vmatprep.subr.bf16.mxu0 0
    %348 = vmatpush1.bf16.msra.mxu0 %v312
    %349 = vmatprep.subr.bf16.mxu0 0
    %350 = vmatpush1.bf16.msra.mxu0 %v313
    %351 = vmatprep.subr.bf16.mxu0 0
    %352 = vmatpush1.bf16.msra.mxu0 %v314
    %353 = vmatprep.subr.bf16.mxu0 0
    %354 = vmatpush1.bf16.msra.mxu0 %v315
    %355 = vmatprep.subr.bf16.mxu0 0
    %356 = vmatpush1.bf16.msra.mxu0 %v316
    %357 = vmatprep.subr.bf16.mxu0 0
    %358 = vmatpush1.bf16.msra.mxu0 %v317
    %359 = vmatprep.subr.bf16.mxu0 0
    %360 = vmatpush1.bf16.msra.mxu0 %v318
    %361 = vmatprep.subr.bf16.mxu0 0
    %362 = vmatpush1.bf16.msra.mxu0 %v319
    %363 = vmatprep.subr.bf16.mxu0 0
    %364 = vmatpush1.bf16.msra.mxu0 %v320
    %365 = vmatprep.subr.bf16.mxu0 0
    %366 = vmatpush1.bf16.msra.mxu0 %v321
    %367 = vmatprep.subr.bf16.mxu0 0
    %368 = vmatpush1.bf16.msra.mxu0 %v322
    %369 = vmatprep.subr.bf16.mxu0 0
    %370 = vmatpush1.bf16.msra.mxu0 %v323
    %371 = vmatprep.subr.bf16.mxu0 0
    %372 = vmatpush1.bf16.msra.mxu0 %v324
    %373 = vmatprep.mubr.bf16.mxu0 %v182
    %374 = vmatmul.mubr.bf16.gmra.mrb[0].mxu0 %v181
    %v375 = vpop.f32.mrb[0].mxu0
    %v376 = vadd.f32 0.0, %v375
    %v377 = vpop.f32.mrb[0].mxu0
    %v378 = vpop.f32.mrb[0].mxu0
    %v379 = vadd.f32 0.0, %v378
    %v380 = vpop.f32.mrb[0].mxu0
    %381 = vmatprep.mubr.bf16.mxu0 %v184
    %382 = vmatmul.mubr.bf16.gmra.mrb[0].mxu0 %v183
    %v383 = vpop.f32.mrb[0].mxu0
    %v384 = vadd.f32 0.0, %v383
    %v385 = vpop.f32.mrb[0].mxu0
    %v386 = vpop.f32.mrb[0].mxu0
    %v387 = vadd.f32 0.0, %v386
    %v388 = vpop.f32.mrb[0].mxu0
    %389 = vmatprep.mubr.bf16.mxu0 %v186
    %390 = vmatmul.mubr.bf16.gmra.mrb[0].mxu0 %v185
    %v391 = vpop.f32.mrb[0].mxu0
    %v392 = vadd.f32 0.0, %v391
    %v393 = vpop.f32.mrb[0].mxu0
    %v394 = vpop.f32.mrb[0].mxu0
    %v395 = vadd.f32 0.0, %v394
    %v396 = vpop.f32.mrb[0].mxu0
    %397 = vmatprep.mubr.bf16.mxu0 %v188
    %398 = vmatmul.mubr.bf16.gmra.mrb[0].mxu0 %v187
    %v399 = vpop.f32.mrb[0].mxu0
    %v400 = vadd.f32 0.0, %v399
    %v401 = vpop.f32.mrb[0].mxu0
    %v402 = vpop.f32.mrb[0].mxu0
    %v403 = vadd.f32 0.0, %v402
    %v404 = vpop.f32.mrb[0].mxu0
    %405 = vmatprep.mubr.bf16.mxu0 %v190
    %406 = vmatmul.mubr.bf16.gmra.mrb[0].mxu0 %v189
    %v407 = vpop.f32.mrb[0].mxu0
    %v408 = vadd.f32 0.0, %v407
    %v409 = vpop.f32.mrb[0].mxu0
    %v410 = vpop.f32.mrb[0].mxu0
    %v411 = vadd.f32 0.0, %v410
    %v412 = vpop.f32.mrb[0].mxu0
    %413 = vmatprep.mubr.bf16.mxu0 %v192
    %414 = vmatmul.mubr.bf16.gmra.mrb[0].mxu0 %v191
    %v415 = vpop.f32.mrb[0].mxu0
    %v416 = vadd.f32 0.0, %v415
    %v417 = vpop.f32.mrb[0].mxu0
    %v418 = vpop.f32.mrb[0].mxu0
    %v419 = vadd.f32 0.0, %v418
    %v420 = vpop.f32.mrb[0].mxu0
    %421 = vmatprep.mubr.bf16.mxu0 %v194
    %422 = vmatmul.mubr.bf16.gmra.mrb[0].mxu0 %v193
    %v423 = vpop.f32.mrb[0].mxu0
    %v424 = vadd.f32 0.0, %v423
    %v425 = vpop.f32.mrb[0].mxu0
    %v426 = vpop.f32.mrb[0].mxu0
    %v427 = vadd.f32 0.0, %v426
    %v428 = vpop.f32.mrb[0].mxu0
    %429 = vmatprep.mubr.bf16.mxu0 %v196
    %430 = vmatmul.mubr.bf16.gmra.mrb[0].mxu0 %v195
    %v431 = vpop.f32.mrb[0].mxu0
    %v432 = vadd.f32 0.0, %v431
    %v433 = vpop.f32.mrb[0].mxu0
    %v434 = vpop.f32.mrb[0].mxu0
    %v435 = vadd.f32 0.0, %v434
    %v436 = vpop.f32.mrb[0].mxu0
    %437 = vmatprep.mubr.bf16.mxu0 %v198
    %438 = vmatmul.mubr.bf16.gmra.mrb[0].mxu0 %v197
    %v439 = vpop.f32.mrb[0].mxu0
    %v440 = vadd.f32 0.0, %v439
    %v441 = vpop.f32.mrb[0].mxu0
    %v442 = vpop.f32.mrb[0].mxu0
    %v443 = vadd.f32 0.0, %v442
    %v444 = vpop.f32.mrb[0].mxu0
    %445 = vmatprep.mubr.bf16.mxu0 %v200
    %446 = vmatmul.mubr.bf16.gmra.mrb[0].mxu0 %v199
    %v447 = vpop.f32.mrb[0].mxu0
    %v448 = vadd.f32 0.0, %v447
    %v449 = vpop.f32.mrb[0].mxu0
    %v450 = vpop.f32.mrb[0].mxu0
    %v451 = vadd.f32 0.0, %v450
    %v452 = vpop.f32.mrb[0].mxu0
    %453 = vmatprep.mubr.bf16.mxu0 %v202
    %454 = vmatmul.mubr.bf16.gmra.mrb[0].mxu0 %v201
    %v455 = vpop.f32.mrb[0].mxu0
    %v456 = vadd.f32 0.0, %v455
    %v457 = vpop.f32.mrb[0].mxu0
    %v458 = vpop.f32.mrb[0].mxu0
    %v459 = vadd.f32 0.0, %v458
    %v460 = vpop.f32.mrb[0].mxu0
    %461 = vmatprep.mubr.bf16.mxu0 %v204
    %462 = vmatmul.mubr.bf16.gmra.mrb[0].mxu0 %v203
    %v463 = vpop.f32.mrb[0].mxu0
    %v464 = vadd.f32 0.0, %v463
    %v465 = vpop.f32.mrb[0].mxu0
    %v466 = vpop.f32.mrb[0].mxu0
    %v467 = vadd.f32 0.0, %v466
    %v468 = vpop.f32.mrb[0].mxu0
    %469 = vmatprep.mubr.bf16.mxu0 %v206
    %470 = vmatmul.mubr.bf16.gmra.mrb[0].mxu0 %v205
    %v471 = vpop.f32.mrb[0].mxu0
    %v472 = vadd.f32 0.0, %v471
    %v473 = vpop.f32.mrb[0].mxu0
    %v474 = vpop.f32.mrb[0].mxu0
    %v475 = vadd.f32 0.0, %v474
    %v476 = vpop.f32.mrb[0].mxu0
    %477 = vmatprep.mubr.bf16.mxu0 %v208
    %478 = vmatmul.mubr.bf16.gmra.mrb[0].mxu0 %v207
    %v479 = vpop.f32.mrb[0].mxu0
    %v480 = vadd.f32 0.0, %v479
    %v481 = vpop.f32.mrb[0].mxu0
    %v482 = vpop.f32.mrb[0].mxu0
    %v483 = vadd.f32 0.0, %v482
    %v484 = vpop.f32.mrb[0].mxu0
    %485 = vmatprep.mubr.bf16.mxu0 %v210
    %486 = vmatmul.mubr.bf16.gmra.mrb[0].mxu0 %v209
    %v487 = vpop.f32.mrb[0].mxu0
    %v488 = vadd.f32 0.0, %v487
    %v489 = vpop.f32.mrb[0].mxu0
    %v490 = vpop.f32.mrb[0].mxu0
    %v491 = vadd.f32 0.0, %v490
    %v492 = vpop.f32.mrb[0].mxu0
    %493 = vmatprep.mubr.bf16.mxu0 %v212
    %494 = vmatmul.mubr.bf16.gmra.mrb[0].mxu0 %v211
    %v495 = vpop.f32.mrb[0].mxu0
    %v496 = vadd.f32 0.0, %v495
    %v497 = vpop.f32.mrb[0].mxu0
    %v498 = vpop.f32.mrb[0].mxu0
    %v499 = vadd.f32 0.0, %v498
    %v500 = vpop.f32.mrb[0].mxu0
    %501 = vdwg.mxu0
    %v502 = vld [vmem:[%s3] sm:$0x1]
    %v503 = vld [vmem:[%s3 + $0x1] sm:$0x1]
    %v504 = vadd.f32 %v376, %v379
    %v505 = vadd.f32 %v504, %v384
    %v506 = vadd.f32 %v505, %v387
    %v507 = vadd.f32 %v506, %v392
    %v508 = vadd.f32 %v507, %v395
    %v509 = vadd.f32 %v508, %v400
    %v510 = vadd.f32 %v509, %v403
    %v511 = vadd.f32 %v510, %v408
    %v512 = vadd.f32 %v511, %v411
    %v513 = vadd.f32 %v512, %v416
    %v514 = vadd.f32 %v513, %v419
    %v515 = vadd.f32 %v514, %v424
    %v516 = vadd.f32 %v515, %v427
    %v517 = vadd.f32 %v516, %v432
    %v518 = vadd.f32 %v517, %v435
    %v519 = vadd.f32 %v518, %v440
    %v520 = vadd.f32 %v519, %v443
    %v521 = vadd.f32 %v520, %v448
    %v522 = vadd.f32 %v521, %v451
    %v523 = vadd.f32 %v522, %v456
    %v524 = vadd.f32 %v523, %v459
    %v525 = vadd.f32 %v524, %v464
    %v526 = vadd.f32 %v525, %v467
    %v527 = vadd.f32 %v526, %v472
    %v528 = vadd.f32 %v527, %v475
    %v529 = vadd.f32 %v528, %v480
    %v530 = vadd.f32 %v529, %v483
    %v531 = vadd.f32 %v530, %v488
    %v532 = vadd.f32 %v531, %v491
    %v533 = vadd.f32 %v532, %v496
    %v534 = vadd.f32 %v533, %v499
    %v535 = vrot.slane %v534, 4
    %v536 = vadd.f32 %v534, %v535
    %v537 = vrot.slane %v536, 2
    %v538 = vadd.f32 %v536, %v537
    %v539 = vrot.slane %v538, 1
    %v540 = vadd.f32 %v538, %v539
    %v541 = vrcp.pop 256.0
    %v542 = vmul.f32 %v540, %v541
    %v543 = vsub.f32 %v376, %v542
    %v544 = vsub.f32 %v379, %v542
    %v545 = vsub.f32 %v384, %v542
    %v546 = vsub.f32 %v387, %v542
    %v547 = vsub.f32 %v392, %v542
    %v548 = vsub.f32 %v395, %v542
    %v549 = vsub.f32 %v400, %v542
    %v550 = vsub.f32 %v403, %v542
    %v551 = vsub.f32 %v408, %v542
    %v552 = vsub.f32 %v411, %v542
    %v553 = vsub.f32 %v416, %v542
    %v554 = vsub.f32 %v419, %v542
    %v555 = vsub.f32 %v424, %v542
    %v556 = vsub.f32 %v427, %v542
    %v557 = vsub.f32 %v432, %v542
    %v558 = vsub.f32 %v435, %v542
    %v559 = vsub.f32 %v440, %v542
    %v560 = vsub.f32 %v443, %v542
    %v561 = vsub.f32 %v448, %v542
    %v562 = vsub.f32 %v451, %v542
    %v563 = vsub.f32 %v456, %v542
    %v564 = vsub.f32 %v459, %v542
    %v565 = vsub.f32 %v464, %v542
    %v566 = vsub.f32 %v467, %v542
    %v567 = vsub.f32 %v472, %v542
    %v568 = vsub.f32 %v475, %v542
    %v569 = vsub.f32 %v480, %v542
    %v570 = vsub.f32 %v483, %v542
    %v571 = vsub.f32 %v488, %v542
    %v572 = vsub.f32 %v491, %v542
    %v573 = vsub.f32 %v496, %v542
    %v574 = vsub.f32 %v499, %v542
    %v575 = vmul.f32 %v543, %v543
    %v576 = vmul.f32 %v544, %v544
    %v577 = vmul.f32 %v545, %v545
    %v578 = vmul.f32 %v546, %v546
    %v579 = vmul.f32 %v547, %v547
    %v580 = vmul.f32 %v548, %v548
    %v581 = vmul.f32 %v549, %v549
    %v582 = vmul.f32 %v550, %v550
    %v583 = vmul.f32 %v551, %v551
    %v584 = vmul.f32 %v552, %v552
    %v585 = vmul.f32 %v553, %v553
    %v586 = vmul.f32 %v554, %v554
    %v587 = vmul.f32 %v555, %v555
    %v588 = vmul.f32 %v556, %v556
    %v589 = vmul.f32 %v557, %v557
    %v590 = vmul.f32 %v558, %v558
    %v591 = vmul.f32 %v559, %v559
    %v592 = vmul.f32 %v560, %v560
    %v593 = vmul.f32 %v561, %v561
    %v594 = vmul.f32 %v562, %v562
    %v595 = vmul.f32 %v563, %v563
    %v596 = vmul.f32 %v564, %v564
    %v597 = vmul.f32 %v565, %v565
    %v598 = vmul.f32 %v566, %v566
    %v599 = vmul.f32 %v567, %v567
    %v600 = vmul.f32 %v568, %v568
    %v601 = vmul.f32 %v569, %v569
    %v602 = vmul.f32 %v570, %v570
    %v603 = vmul.f32 %v571, %v571
    %v604 = vmul.f32 %v572, %v572
    %v605 = vmul.f32 %v573, %v573
    %v606 = vmul.f32 %v574, %v574
    %v607 = vadd.f32 %v575, %v576
    %v608 = vadd.f32 %v607, %v577
    %v609 = vadd.f32 %v608, %v578
    %v610 = vadd.f32 %v609, %v579
    %v611 = vadd.f32 %v610, %v580
    %v612 = vadd.f32 %v611, %v581
    %v613 = vadd.f32 %v612, %v582
    %v614 = vadd.f32 %v613, %v583
    %v615 = vadd.f32 %v614, %v584
    %v616 = vadd.f32 %v615, %v585
    %v617 = vadd.f32 %v616, %v586
    %v618 = vadd.f32 %v617, %v587
    %v619 = vadd.f32 %v618, %v588
    %v620 = vadd.f32 %v619, %v589
    %v621 = vadd.f32 %v620, %v590
    %v622 = vadd.f32 %v621, %v591
    %v623 = vadd.f32 %v622, %v592
    %v624 = vadd.f32 %v623, %v593
    %v625 = vadd.f32 %v624, %v594
    %v626 = vadd.f32 %v625, %v595
    %v627 = vadd.f32 %v626, %v596
    %v628 = vadd.f32 %v627, %v597
    %v629 = vadd.f32 %v628, %v598
    %v630 = vadd.f32 %v629, %v599
    %v631 = vadd.f32 %v630, %v600
    %v632 = vadd.f32 %v631, %v601
    %v633 = vadd.f32 %v632, %v602
    %v634 = vadd.f32 %v633, %v603
    %v635 = vadd.f32 %v634, %v604
    %v636 = vadd.f32 %v635, %v605
    %v637 = vadd.f32 %v636, %v606
    %v638 = vrot.slane %v637, 4
    %v639 = vadd.f32 %v637, %v638
    %v640 = vrot.slane %v639, 2
    %v641 = vadd.f32 %v639, %v640
    %v642 = vrot.slane %v641, 1
    %v643 = vadd.f32 %v641, %v642
    %v644 = vmul.f32 %v643, %v541
    %v645 = vadd.f32 %v644, 1e-05
    %v646 = vrsqrt.pop %v645
    %v647 = vmul.f32 %v502, %v646
    %v648 = vlaneseq
    %v649 = vshrl.u32 %v648, 7
    %v650 = vsub.s32 0, %v649
    %v651 = vrot.slane %v647, %v650
    %v652 = vmul.f32 %v543, %v651
    %v653 = vmul.f32 %v544, %v651
    %v654 = vmul.f32 %v545, %v651
    %v655 = vmul.f32 %v546, %v651
    %v656 = vmul.f32 %v547, %v651
    %v657 = vmul.f32 %v548, %v651
    %v658 = vmul.f32 %v549, %v651
    %v659 = vmul.f32 %v550, %v651
    %v660 = vmul.f32 %v551, %v651
    %v661 = vmul.f32 %v552, %v651
    %v662 = vmul.f32 %v553, %v651
    %v663 = vmul.f32 %v554, %v651
    %v664 = vmul.f32 %v555, %v651
    %v665 = vmul.f32 %v556, %v651
    %v666 = vmul.f32 %v557, %v651
    %v667 = vmul.f32 %v558, %v651
    %v668 = vmul.f32 %v559, %v651
    %v669 = vmul.f32 %v560, %v651
    %v670 = vmul.f32 %v561, %v651
    %v671 = vmul.f32 %v562, %v651
    %v672 = vmul.f32 %v563, %v651
    %v673 = vmul.f32 %v564, %v651
    %v674 = vmul.f32 %v565, %v651
    %v675 = vmul.f32 %v566, %v651
    %v676 = vmul.f32 %v567, %v651
    %v677 = vmul.f32 %v568, %v651
    %v678 = vmul.f32 %v569, %v651
    %v679 = vmul.f32 %v570, %v651
    %v680 = vmul.f32 %v571, %v651
    %v681 = vmul.f32 %v572, %v651
    %v682 = vmul.f32 %v573, %v651
    %v683 = vmul.f32 %v574, %v651
    %v684 = vlaneseq
    %v685 = vshrl.u32 %v684, 7
    %v686 = vsub.s32 0, %v685
    %v687 = vrot.slane %v503, %v686
    %v688 = vadd.f32 %v652, %v687
    %v689 = vadd.f32 %v653, %v687
    %v690 = vadd.f32 %v654, %v687
    %v691 = vadd.f32 %v655, %v687
    %v692 = vadd.f32 %v656, %v687
    %v693 = vadd.f32 %v657, %v687
    %v694 = vadd.f32 %v658, %v687
    %v695 = vadd.f32 %v659, %v687
    %v696 = vadd.f32 %v660, %v687
    %v697 = vadd.f32 %v661, %v687
    %v698 = vadd.f32 %v662, %v687
    %v699 = vadd.f32 %v663, %v687
    %v700 = vadd.f32 %v664, %v687
    %v701 = vadd.f32 %v665, %v687
    %v702 = vadd.f32 %v666, %v687
    %v703 = vadd.f32 %v667, %v687
    %v704 = vadd.f32 %v668, %v687
    %v705 = vadd.f32 %v669, %v687
    %v706 = vadd.f32 %v670, %v687
    %v707 = vadd.f32 %v671, %v687
    %v708 = vadd.f32 %v672, %v687
    %v709 = vadd.f32 %v673, %v687
    %v710 = vadd.f32 %v674, %v687
    %v711 = vadd.f32 %v675, %v687
    %v712 = vadd.f32 %v676, %v687
    %v713 = vadd.f32 %v677, %v687
    %v714 = vadd.f32 %v678, %v687
    %v715 = vadd.f32 %v679, %v687
    %v716 = vadd.f32 %v680, %v687
    %v717 = vadd.f32 %v681, %v687
    %v718 = vadd.f32 %v682, %v687
    %v719 = vadd.f32 %v683, %v687
    %v720 = vmax.f32 %v688, 0.0
    %v721 = vmax.f32 %v689, 0.0
    %v722 = vmax.f32 %v690, 0.0
    %v723 = vmax.f32 %v691, 0.0
    %v724 = vmax.f32 %v692, 0.0
    %v725 = vmax.f32 %v693, 0.0
    %v726 = vmax.f32 %v694, 0.0
    %v727 = vmax.f32 %v695, 0.0
    %v728 = vmax.f32 %v696, 0.0
    %v729 = vmax.f32 %v697, 0.0
    %v730 = vmax.f32 %v698, 0.0
    %v731 = vmax.f32 %v699, 0.0
    %v732 = vmax.f32 %v700, 0.0
    %v733 = vmax.f32 %v701, 0.0
    %v734 = vmax.f32 %v702, 0.0
    %v735 = vmax.f32 %v703, 0.0
    %v736 = vmax.f32 %v704, 0.0
    %v737 = vmax.f32 %v705, 0.0
    %v738 = vmax.f32 %v706, 0.0
    %v739 = vmax.f32 %v707, 0.0
    %v740 = vmax.f32 %v708, 0.0
    %v741 = vmax.f32 %v709, 0.0
    %v742 = vmax.f32 %v710, 0.0
    %v743 = vmax.f32 %v711, 0.0
    %v744 = vmax.f32 %v712, 0.0
    %v745 = vmax.f32 %v713, 0.0
    %v746 = vmax.f32 %v714, 0.0
    %v747 = vmax.f32 %v715, 0.0
    %v748 = vmax.f32 %v716, 0.0
    %v749 = vmax.f32 %v717, 0.0
    %v750 = vmax.f32 %v718, 0.0
    %v751 = vmax.f32 %v719, 0.0
    %v752 = vld [vmem:[%s2 + $0x80] sm:$0xf]
    %v753 = vld [vmem:[%s2 + $0x84] sm:$0xf]
    %v754 = vld [vmem:[%s2 + $0x88] sm:$0xf]
    %v755 = vld [vmem:[%s2 + $0x8c] sm:$0xf]
    %v756 = vld [vmem:[%s2 + $0x90] sm:$0xf]
    %v757 = vld [vmem:[%s2 + $0x94] sm:$0xf]
    %v758 = vld [vmem:[%s2 + $0x98] sm:$0xf]
    %v759 = vld [vmem:[%s2 + $0x9c] sm:$0xf]
    %v760 = vld [vmem:[%s2 + $0xa0] sm:$0xf]
    %v761 = vld [vmem:[%s2 + $0xa4] sm:$0xf]
    %v762 = vld [vmem:[%s2 + $0xa8] sm:$0xf]
    %v763 = vld [vmem:[%s2 + $0xac] sm:$0xf]
    %v764 = vld [vmem:[%s2 + $0xb0] sm:$0xf]
    %v765 = vld [vmem:[%s2 + $0xb4] sm:$0xf]
    %v766 = vld [vmem:[%s2 + $0xb8] sm:$0xf]
    %v767 = vld [vmem:[%s2 + $0xbc] sm:$0xf]
    %v768 = vpack.c.bf16 %v721, %v720
    %v769 = vpack.c.bf16 %v723, %v722
    %v770 = vpack.c.bf16 %v725, %v724
    %v771 = vpack.c.bf16 %v727, %v726
    %v772 = vpack.c.bf16 %v729, %v728
    %v773 = vpack.c.bf16 %v731, %v730
    %v774 = vpack.c.bf16 %v733, %v732
    %v775 = vpack.c.bf16 %v735, %v734
    %v776 = vpack.c.bf16 %v737, %v736
    %v777 = vpack.c.bf16 %v739, %v738
    %v778 = vpack.c.bf16 %v741, %v740
    %v779 = vpack.c.bf16 %v743, %v742
    %v780 = vpack.c.bf16 %v745, %v744
    %v781 = vpack.c.bf16 %v747, %v746
    %v782 = vpack.c.bf16 %v749, %v748
    %v783 = vpack.c.bf16 %v751, %v750
    %v800 = vunpack.c.l.b16 %v752
    %v801 = vunpack.c.l.b16 %v753
    %v802 = vunpack.c.l.b16 %v754
    %v803 = vunpack.c.l.b16 %v755
    %v804 = vunpack.c.l.b16 %v756
    %v805 = vunpack.c.l.b16 %v757
    %v806 = vunpack.c.l.b16 %v758
    %v807 = vunpack.c.l.b16 %v759
    %v808 = vunpack.c.l.b16 %v760
    %v809 = vunpack.c.l.b16 %v761
    %v810 = vunpack.c.l.b16 %v762
    %v811 = vunpack.c.l.b16 %v763
    %v812 = vunpack.c.l.b16 %v764
    %v813 = vunpack.c.l.b16 %v765
    %v814 = vunpack.c.l.b16 %v766
    %v815 = vunpack.c.l.b16 %v767
    %v816 = vpack.c.b16 %v801, %v800
    %v817 = vpack.c.b16 %v803, %v802
    %v818 = vpack.c.b16 %v805, %v804
    %v819 = vpack.c.b16 %v807, %v806
    %v820 = vpack.c.b16 %v809, %v808
    %v821 = vpack.c.b16 %v811, %v810
    %v822 = vpack.c.b16 %v813, %v812
    %v823 = vpack.c.b16 %v815, %v814
    %832 = vmatprep.subr.bf16.mxu0 0
    %833 = vmatpush1.bf16.msra.mxu0 %v816
    %834 = vmatprep.subr.bf16.mxu0 0
    %835 = vmatpush1.bf16.msra.mxu0 %v817
    %836 = vmatprep.subr.bf16.mxu0 0
    %837 = vmatpush1.bf16.msra.mxu0 %v818
    %838 = vmatprep.subr.bf16.mxu0 0
    %839 = vmatpush1.bf16.msra.mxu0 %v819
    %840 = vmatprep.subr.bf16.mxu0 0
    %841 = vmatpush1.bf16.msra.mxu0 %v820
    %842 = vmatprep.subr.bf16.mxu0 0
    %843 = vmatpush1.bf16.msra.mxu0 %v821
    %844 = vmatprep.subr.bf16.mxu0 0
    %845 = vmatpush1.bf16.msra.mxu0 %v822
    %846 = vmatprep.subr.bf16.mxu0 0
    %847 = vmatpush1.bf16.msra.mxu0 %v823
    %848 = vmatprep.subr.bf16.mxu0 0
    %849 = vmatpush1.bf16.msra.mxu0 0
    %850 = vmatprep.subr.bf16.mxu0 0
    %851 = vmatpush1.bf16.msra.mxu0 0
    %852 = vmatprep.subr.bf16.mxu0 0
    %853 = vmatpush1.bf16.msra.mxu0 0
    %854 = vmatprep.subr.bf16.mxu0 0
    %855 = vmatpush1.bf16.msra.mxu0 0
    %856 = vmatprep.subr.bf16.mxu0 0
    %857 = vmatpush1.bf16.msra.mxu0 0
    %858 = vmatprep.subr.bf16.mxu0 0
    %859 = vmatpush1.bf16.msra.mxu0 0
    %860 = vmatprep.subr.bf16.mxu0 0
    %861 = vmatpush1.bf16.msra.mxu0 0
    %862 = vmatprep.subr.bf16.mxu0 0
    %863 = vmatpush1.bf16.msra.mxu0 0
    %864 = vmatprep.mubr.bf16.mxu0 0
    %865 = vmatmul.mubr.bf16.gmra.mrb[0].mxu0 %v768
    %v866 = vpop.f32.mrb[0].mxu0
    %v867 = vadd.f32 0.0, %v866
    %v868 = vpop.f32.mrb[0].mxu0
    %v869 = vpop.f32.mrb[0].mxu0
    %v870 = vadd.f32 0.0, %v869
    %v871 = vpop.f32.mrb[0].mxu0
    %872 = vmatprep.mubr.bf16.mxu0 0
    %873 = vmatmul.mubr.bf16.gmra.mrb[0].mxu0 %v769
    %v874 = vpop.f32.mrb[0].mxu0
    %v875 = vadd.f32 0.0, %v874
    %v876 = vpop.f32.mrb[0].mxu0
    %v877 = vpop.f32.mrb[0].mxu0
    %v878 = vadd.f32 0.0, %v877
    %v879 = vpop.f32.mrb[0].mxu0
    %880 = vmatprep.mubr.bf16.mxu0 0
    %881 = vmatmul.mubr.bf16.gmra.mrb[0].mxu0 %v770
    %v882 = vpop.f32.mrb[0].mxu0
    %v883 = vadd.f32 0.0, %v882
    %v884 = vpop.f32.mrb[0].mxu0
    %v885 = vpop.f32.mrb[0].mxu0
    %v886 = vadd.f32 0.0, %v885
    %v887 = vpop.f32.mrb[0].mxu0
    %888 = vmatprep.mubr.bf16.mxu0 0
    %889 = vmatmul.mubr.bf16.gmra.mrb[0].mxu0 %v771
    %v890 = vpop.f32.mrb[0].mxu0
    %v891 = vadd.f32 0.0, %v890
    %v892 = vpop.f32.mrb[0].mxu0
    %v893 = vpop.f32.mrb[0].mxu0
    %v894 = vadd.f32 0.0, %v893
    %v895 = vpop.f32.mrb[0].mxu0
    %896 = vmatprep.mubr.bf16.mxu0 0
    %897 = vmatmul.mubr.bf16.gmra.mrb[0].mxu0 %v772
    %v898 = vpop.f32.mrb[0].mxu0
    %v899 = vadd.f32 0.0, %v898
    %v900 = vpop.f32.mrb[0].mxu0
    %v901 = vpop.f32.mrb[0].mxu0
    %v902 = vadd.f32 0.0, %v901
    %v903 = vpop.f32.mrb[0].mxu0
    %904 = vmatprep.mubr.bf16.mxu0 0
    %905 = vmatmul.mubr.bf16.gmra.mrb[0].mxu0 %v773
    %v906 = vpop.f32.mrb[0].mxu0
    %v907 = vadd.f32 0.0, %v906
    %v908 = vpop.f32.mrb[0].mxu0
    %v909 = vpop.f32.mrb[0].mxu0
    %v910 = vadd.f32 0.0, %v909
    %v911 = vpop.f32.mrb[0].mxu0
    %912 = vmatprep.mubr.bf16.mxu0 0
    %913 = vmatmul.mubr.bf16.gmra.mrb[0].mxu0 %v774
    %v914 = vpop.f32.mrb[0].mxu0
    %v915 = vadd.f32 0.0, %v914
    %v916 = vpop.f32.mrb[0].mxu0
    %v917 = vpop.f32.mrb[0].mxu0
    %v918 = vadd.f32 0.0, %v917
    %v919 = vpop.f32.mrb[0].mxu0
    %920 = vmatprep.mubr.bf16.mxu0 0
    %921 = vmatmul.mubr.bf16.gmra.mrb[0].mxu0 %v775
    %v922 = vpop.f32.mrb[0].mxu0
    %v923 = vadd.f32 0.0, %v922
    %v924 = vpop.f32.mrb[0].mxu0
    %v925 = vpop.f32.mrb[0].mxu0
    %v926 = vadd.f32 0.0, %v925
    %v927 = vpop.f32.mrb[0].mxu0
    %928 = vmatprep.mubr.bf16.mxu0 0
    %929 = vmatmul.mubr.bf16.gmra.mrb[0].mxu0 %v776
    %v930 = vpop.f32.mrb[0].mxu0
    %v931 = vadd.f32 0.0, %v930
    %v932 = vpop.f32.mrb[0].mxu0
    %v933 = vpop.f32.mrb[0].mxu0
    %v934 = vadd.f32 0.0, %v933
    %v935 = vpop.f32.mrb[0].mxu0
    %936 = vmatprep.mubr.bf16.mxu0 0
    %937 = vmatmul.mubr.bf16.gmra.mrb[0].mxu0 %v777
    %v938 = vpop.f32.mrb[0].mxu0
    %v939 = vadd.f32 0.0, %v938
    %v940 = vpop.f32.mrb[0].mxu0
    %v941 = vpop.f32.mrb[0].mxu0
    %v942 = vadd.f32 0.0, %v941
    %v943 = vpop.f32.mrb[0].mxu0
    %944 = vmatprep.mubr.bf16.mxu0 0
    %945 = vmatmul.mubr.bf16.gmra.mrb[0].mxu0 %v778
    %v946 = vpop.f32.mrb[0].mxu0
    %v947 = vadd.f32 0.0, %v946
    %v948 = vpop.f32.mrb[0].mxu0
    %v949 = vpop.f32.mrb[0].mxu0
    %v950 = vadd.f32 0.0, %v949
    %v951 = vpop.f32.mrb[0].mxu0
    %952 = vmatprep.mubr.bf16.mxu0 0
    %953 = vmatmul.mubr.bf16.gmra.mrb[0].mxu0 %v779
    %v954 = vpop.f32.mrb[0].mxu0
    %v955 = vadd.f32 0.0, %v954
    %v956 = vpop.f32.mrb[0].mxu0
    %v957 = vpop.f32.mrb[0].mxu0
    %v958 = vadd.f32 0.0, %v957
    %v959 = vpop.f32.mrb[0].mxu0
    %960 = vmatprep.mubr.bf16.mxu0 0
    %961 = vmatmul.mubr.bf16.gmra.mrb[0].mxu0 %v780
    %v962 = vpop.f32.mrb[0].mxu0
    %v963 = vadd.f32 0.0, %v962
    %v964 = vpop.f32.mrb[0].mxu0
    %v965 = vpop.f32.mrb[0].mxu0
    %v966 = vadd.f32 0.0, %v965
    %v967 = vpop.f32.mrb[0].mxu0
    %968 = vmatprep.mubr.bf16.mxu0 0
    %969 = vmatmul.mubr.bf16.gmra.mrb[0].mxu0 %v781
    %v970 = vpop.f32.mrb[0].mxu0
    %v971 = vadd.f32 0.0, %v970
    %v972 = vpop.f32.mrb[0].mxu0
    %v973 = vpop.f32.mrb[0].mxu0
    %v974 = vadd.f32 0.0, %v973
    %v975 = vpop.f32.mrb[0].mxu0
    %976 = vmatprep.mubr.bf16.mxu0 0
    %977 = vmatmul.mubr.bf16.gmra.mrb[0].mxu0 %v782
    %v978 = vpop.f32.mrb[0].mxu0
    %v979 = vadd.f32 0.0, %v978
    %v980 = vpop.f32.mrb[0].mxu0
    %v981 = vpop.f32.mrb[0].mxu0
    %v982 = vadd.f32 0.0, %v981
    %v983 = vpop.f32.mrb[0].mxu0
    %984 = vmatprep.mubr.bf16.mxu0 0
    %985 = vmatmul.mubr.bf16.gmra.mrb[0].mxu0 %v783
    %v986 = vpop.f32.mrb[0].mxu0
    %v987 = vadd.f32 0.0, %v986
    %v988 = vpop.f32.mrb[0].mxu0
    %v989 = vpop.f32.mrb[0].mxu0
    %v990 = vadd.f32 0.0, %v989
    %v991 = vpop.f32.mrb[0].mxu0
    %992 = vdwg.mxu0
    %v993 = vld [vmem:[%s3 + $0x2] sm:$0x1]
    %v994 = vld [vmem:[%s3 + $0x3] sm:$0x1]
    %v995 = vadd.f32 %v867, %v870
    %v996 = vadd.f32 %v995, %v875
    %v997 = vadd.f32 %v996, %v878
    %v998 = vadd.f32 %v997, %v883
    %v999 = vadd.f32 %v998, %v886
    %v1000 = vadd.f32 %v999, %v891
    %v1001 = vadd.f32 %v1000, %v894
    %v1002 = vadd.f32 %v1001, %v899
    %v1003 = vadd.f32 %v1002, %v902
    %v1004 = vadd.f32 %v1003, %v907
    %v1005 = vadd.f32 %v1004, %v910
    %v1006 = vadd.f32 %v1005, %v915
    %v1007 = vadd.f32 %v1006, %v918
    %v1008 = vadd.f32 %v1007, %v923
    %v1009 = vadd.f32 %v1008, %v926
    %v1010 = vadd.f32 %v1009, %v931
    %v1011 = vadd.f32 %v1010, %v934
    %v1012 = vadd.f32 %v1011, %v939
    %v1013 = vadd.f32 %v1012, %v942
    %v1014 = vadd.f32 %v1013, %v947
    %v1015 = vadd.f32 %v1014, %v950
    %v1016 = vadd.f32 %v1015, %v955
    %v1017 = vadd.f32 %v1016, %v958
    %v1018 = vadd.f32 %v1017, %v963
    %v1019 = vadd.f32 %v1018, %v966
    %v1020 = vadd.f32 %v1019, %v971
    %v1021 = vadd.f32 %v1020, %v974
    %v1022 = vadd.f32 %v1021, %v979
    %v1023 = vadd.f32 %v1022, %v982
    %v1024 = vadd.f32 %v1023, %v987
    %v1025 = vadd.f32 %v1024, %v990
    %v1026 = vrot.slane %v1025, 4
    %v1027 = vadd.f32 %v1025, %v1026
    %v1028 = vrot.slane %v1027, 2
    %v1029 = vadd.f32 %v1027, %v1028
    %v1030 = vrot.slane %v1029, 1
    %v1031 = vadd.f32 %v1029, %v1030
    %v1032 = vmul.f32 %v1031, %v541
    %v1033 = vsub.f32 %v867, %v1032
    %v1034 = vsub.f32 %v870, %v1032
    %v1035 = vsub.f32 %v875, %v1032
    %v1036 = vsub.f32 %v878, %v1032
    %v1037 = vsub.f32 %v883, %v1032
    %v1038 = vsub.f32 %v886, %v1032
    %v1039 = vsub.f32 %v891, %v1032
    %v1040 = vsub.f32 %v894, %v1032
    %v1041 = vsub.f32 %v899, %v1032
    %v1042 = vsub.f32 %v902, %v1032
    %v1043 = vsub.f32 %v907, %v1032
    %v1044 = vsub.f32 %v910, %v1032
    %v1045 = vsub.f32 %v915, %v1032
    %v1046 = vsub.f32 %v918, %v1032
    %v1047 = vsub.f32 %v923, %v1032
    %v1048 = vsub.f32 %v926, %v1032
    %v1049 = vsub.f32 %v931, %v1032
    %v1050 = vsub.f32 %v934, %v1032
    %v1051 = vsub.f32 %v939, %v1032
    %v1052 = vsub.f32 %v942, %v1032
    %v1053 = vsub.f32 %v947, %v1032
    %v1054 = vsub.f32 %v950, %v1032
    %v1055 = vsub.f32 %v955, %v1032
    %v1056 = vsub.f32 %v958, %v1032
    %v1057 = vsub.f32 %v963, %v1032
    %v1058 = vsub.f32 %v966, %v1032
    %v1059 = vsub.f32 %v971, %v1032
    %v1060 = vsub.f32 %v974, %v1032
    %v1061 = vsub.f32 %v979, %v1032
    %v1062 = vsub.f32 %v982, %v1032
    %v1063 = vsub.f32 %v987, %v1032
    %v1064 = vsub.f32 %v990, %v1032
    %v1065 = vmul.f32 %v1033, %v1033
    %v1066 = vmul.f32 %v1034, %v1034
    %v1067 = vmul.f32 %v1035, %v1035
    %v1068 = vmul.f32 %v1036, %v1036
    %v1069 = vmul.f32 %v1037, %v1037
    %v1070 = vmul.f32 %v1038, %v1038
    %v1071 = vmul.f32 %v1039, %v1039
    %v1072 = vmul.f32 %v1040, %v1040
    %v1073 = vmul.f32 %v1041, %v1041
    %v1074 = vmul.f32 %v1042, %v1042
    %v1075 = vmul.f32 %v1043, %v1043
    %v1076 = vmul.f32 %v1044, %v1044
    %v1077 = vmul.f32 %v1045, %v1045
    %v1078 = vmul.f32 %v1046, %v1046
    %v1079 = vmul.f32 %v1047, %v1047
    %v1080 = vmul.f32 %v1048, %v1048
    %v1081 = vmul.f32 %v1049, %v1049
    %v1082 = vmul.f32 %v1050, %v1050
    %v1083 = vmul.f32 %v1051, %v1051
    %v1084 = vmul.f32 %v1052, %v1052
    %v1085 = vmul.f32 %v1053, %v1053
    %v1086 = vmul.f32 %v1054, %v1054
    %v1087 = vmul.f32 %v1055, %v1055
    %v1088 = vmul.f32 %v1056, %v1056
    %v1089 = vmul.f32 %v1057, %v1057
    %v1090 = vmul.f32 %v1058, %v1058
    %v1091 = vmul.f32 %v1059, %v1059
    %v1092 = vmul.f32 %v1060, %v1060
    %v1093 = vmul.f32 %v1061, %v1061
    %v1094 = vmul.f32 %v1062, %v1062
    %v1095 = vmul.f32 %v1063, %v1063
    %v1096 = vmul.f32 %v1064, %v1064
    %v1097 = vadd.f32 %v1065, %v1066
    %v1098 = vadd.f32 %v1097, %v1067
    %v1099 = vadd.f32 %v1098, %v1068
    %v1100 = vadd.f32 %v1099, %v1069
    %v1101 = vadd.f32 %v1100, %v1070
    %v1102 = vadd.f32 %v1101, %v1071
    %v1103 = vadd.f32 %v1102, %v1072
    %v1104 = vadd.f32 %v1103, %v1073
    %v1105 = vadd.f32 %v1104, %v1074
    %v1106 = vadd.f32 %v1105, %v1075
    %v1107 = vadd.f32 %v1106, %v1076
    %v1108 = vadd.f32 %v1107, %v1077
    %v1109 = vadd.f32 %v1108, %v1078
    %v1110 = vadd.f32 %v1109, %v1079
    %v1111 = vadd.f32 %v1110, %v1080
    %v1112 = vadd.f32 %v1111, %v1081
    %v1113 = vadd.f32 %v1112, %v1082
    %v1114 = vadd.f32 %v1113, %v1083
    %v1115 = vadd.f32 %v1114, %v1084
    %v1116 = vadd.f32 %v1115, %v1085
    %v1117 = vadd.f32 %v1116, %v1086
    %v1118 = vadd.f32 %v1117, %v1087
    %v1119 = vadd.f32 %v1118, %v1088
    %v1120 = vadd.f32 %v1119, %v1089
    %v1121 = vadd.f32 %v1120, %v1090
    %v1122 = vadd.f32 %v1121, %v1091
    %v1123 = vadd.f32 %v1122, %v1092
    %v1124 = vadd.f32 %v1123, %v1093
    %v1125 = vadd.f32 %v1124, %v1094
    %v1126 = vadd.f32 %v1125, %v1095
    %v1127 = vadd.f32 %v1126, %v1096
    %v1128 = vrot.slane %v1127, 4
    %v1129 = vadd.f32 %v1127, %v1128
    %v1130 = vrot.slane %v1129, 2
    %v1131 = vadd.f32 %v1129, %v1130
    %v1132 = vrot.slane %v1131, 1
    %v1133 = vadd.f32 %v1131, %v1132
    %v1134 = vmul.f32 %v1133, %v541
    %v1135 = vadd.f32 %v1134, 1e-05
    %v1136 = vrsqrt.pop %v1135
    %v1137 = vmul.f32 %v993, %v1136
    %v1138 = vlaneseq
    %v1139 = vshrl.u32 %v1138, 7
    %v1140 = vsub.s32 0, %v1139
    %v1141 = vrot.slane %v1137, %v1140
    %v1142 = vmul.f32 %v1033, %v1141
    %v1143 = vmul.f32 %v1034, %v1141
    %v1144 = vmul.f32 %v1035, %v1141
    %v1145 = vmul.f32 %v1036, %v1141
    %v1146 = vmul.f32 %v1037, %v1141
    %v1147 = vmul.f32 %v1038, %v1141
    %v1148 = vmul.f32 %v1039, %v1141
    %v1149 = vmul.f32 %v1040, %v1141
    %v1150 = vmul.f32 %v1041, %v1141
    %v1151 = vmul.f32 %v1042, %v1141
    %v1152 = vmul.f32 %v1043, %v1141
    %v1153 = vmul.f32 %v1044, %v1141
    %v1154 = vmul.f32 %v1045, %v1141
    %v1155 = vmul.f32 %v1046, %v1141
    %v1156 = vmul.f32 %v1047, %v1141
    %v1157 = vmul.f32 %v1048, %v1141
    %v1158 = vmul.f32 %v1049, %v1141
    %v1159 = vmul.f32 %v1050, %v1141
    %v1160 = vmul.f32 %v1051, %v1141
    %v1161 = vmul.f32 %v1052, %v1141
    %v1162 = vmul.f32 %v1053, %v1141
    %v1163 = vmul.f32 %v1054, %v1141
    %v1164 = vmul.f32 %v1055, %v1141
    %v1165 = vmul.f32 %v1056, %v1141
    %v1166 = vmul.f32 %v1057, %v1141
    %v1167 = vmul.f32 %v1058, %v1141
    %v1168 = vmul.f32 %v1059, %v1141
    %v1169 = vmul.f32 %v1060, %v1141
    %v1170 = vmul.f32 %v1061, %v1141
    %v1171 = vmul.f32 %v1062, %v1141
    %v1172 = vmul.f32 %v1063, %v1141
    %v1173 = vmul.f32 %v1064, %v1141
    %v1174 = vlaneseq
    %v1175 = vshrl.u32 %v1174, 7
    %v1176 = vsub.s32 0, %v1175
    %v1177 = vrot.slane %v994, %v1176
    %v1178 = vadd.f32 %v1142, %v1177
    %v1179 = vadd.f32 %v1143, %v1177
    %v1180 = vadd.f32 %v1144, %v1177
    %v1181 = vadd.f32 %v1145, %v1177
    %v1182 = vadd.f32 %v1146, %v1177
    %v1183 = vadd.f32 %v1147, %v1177
    %v1184 = vadd.f32 %v1148, %v1177
    %v1185 = vadd.f32 %v1149, %v1177
    %v1186 = vadd.f32 %v1150, %v1177
    %v1187 = vadd.f32 %v1151, %v1177
    %v1188 = vadd.f32 %v1152, %v1177
    %v1189 = vadd.f32 %v1153, %v1177
    %v1190 = vadd.f32 %v1154, %v1177
    %v1191 = vadd.f32 %v1155, %v1177
    %v1192 = vadd.f32 %v1156, %v1177
    %v1193 = vadd.f32 %v1157, %v1177
    %v1194 = vadd.f32 %v1158, %v1177
    %v1195 = vadd.f32 %v1159, %v1177
    %v1196 = vadd.f32 %v1160, %v1177
    %v1197 = vadd.f32 %v1161, %v1177
    %v1198 = vadd.f32 %v1162, %v1177
    %v1199 = vadd.f32 %v1163, %v1177
    %v1200 = vadd.f32 %v1164, %v1177
    %v1201 = vadd.f32 %v1165, %v1177
    %v1202 = vadd.f32 %v1166, %v1177
    %v1203 = vadd.f32 %v1167, %v1177
    %v1204 = vadd.f32 %v1168, %v1177
    %v1205 = vadd.f32 %v1169, %v1177
    %v1206 = vadd.f32 %v1170, %v1177
    %v1207 = vadd.f32 %v1171, %v1177
    %v1208 = vadd.f32 %v1172, %v1177
    %v1209 = vadd.f32 %v1173, %v1177
    %v1210 = vmax.f32 %v1178, 0.0
    %v1211 = vmax.f32 %v1179, 0.0
    %v1212 = vmax.f32 %v1180, 0.0
    %v1213 = vmax.f32 %v1181, 0.0
    %v1214 = vmax.f32 %v1182, 0.0
    %v1215 = vmax.f32 %v1183, 0.0
    %v1216 = vmax.f32 %v1184, 0.0
    %v1217 = vmax.f32 %v1185, 0.0
    %v1218 = vmax.f32 %v1186, 0.0
    %v1219 = vmax.f32 %v1187, 0.0
    %v1220 = vmax.f32 %v1188, 0.0
    %v1221 = vmax.f32 %v1189, 0.0
    %v1222 = vmax.f32 %v1190, 0.0
    %v1223 = vmax.f32 %v1191, 0.0
    %v1224 = vmax.f32 %v1192, 0.0
    %v1225 = vmax.f32 %v1193, 0.0
    %v1226 = vmax.f32 %v1194, 0.0
    %v1227 = vmax.f32 %v1195, 0.0
    %v1228 = vmax.f32 %v1196, 0.0
    %v1229 = vmax.f32 %v1197, 0.0
    %v1230 = vmax.f32 %v1198, 0.0
    %v1231 = vmax.f32 %v1199, 0.0
    %v1232 = vmax.f32 %v1200, 0.0
    %v1233 = vmax.f32 %v1201, 0.0
    %v1234 = vmax.f32 %v1202, 0.0
    %v1235 = vmax.f32 %v1203, 0.0
    %v1236 = vmax.f32 %v1204, 0.0
    %v1237 = vmax.f32 %v1205, 0.0
    %v1238 = vmax.f32 %v1206, 0.0
    %v1239 = vmax.f32 %v1207, 0.0
    %v1240 = vmax.f32 %v1208, 0.0
    %v1241 = vmax.f32 %v1209, 0.0
    %v1242 = vld [vmem:[%s2 + $0xc0] sm:$0xf]
    %v1243 = vld [vmem:[%s2 + $0xc4] sm:$0xf]
    %v1244 = vld [vmem:[%s2 + $0xc8] sm:$0xf]
    %v1245 = vld [vmem:[%s2 + $0xcc] sm:$0xf]
    %v1246 = vld [vmem:[%s2 + $0xd0] sm:$0xf]
    %v1247 = vld [vmem:[%s2 + $0xd4] sm:$0xf]
    %v1248 = vld [vmem:[%s2 + $0xd8] sm:$0xf]
    %v1249 = vld [vmem:[%s2 + $0xdc] sm:$0xf]
    %v1250 = vld [vmem:[%s2 + $0xe0] sm:$0xf]
    %v1251 = vld [vmem:[%s2 + $0xe4] sm:$0xf]
    %v1252 = vld [vmem:[%s2 + $0xe8] sm:$0xf]
    %v1253 = vld [vmem:[%s2 + $0xec] sm:$0xf]
    %v1254 = vld [vmem:[%s2 + $0xf0] sm:$0xf]
    %v1255 = vld [vmem:[%s2 + $0xf4] sm:$0xf]
    %v1256 = vld [vmem:[%s2 + $0xf8] sm:$0xf]
    %v1257 = vld [vmem:[%s2 + $0xfc] sm:$0xf]
    %v1258 = vpack.c.bf16 %v1211, %v1210
    %v1259 = vpack.c.bf16 %v1213, %v1212
    %v1260 = vpack.c.bf16 %v1215, %v1214
    %v1261 = vpack.c.bf16 %v1217, %v1216
    %v1262 = vpack.c.bf16 %v1219, %v1218
    %v1263 = vpack.c.bf16 %v1221, %v1220
    %v1264 = vpack.c.bf16 %v1223, %v1222
    %v1265 = vpack.c.bf16 %v1225, %v1224
    %v1266 = vpack.c.bf16 %v1227, %v1226
    %v1267 = vpack.c.bf16 %v1229, %v1228
    %v1268 = vpack.c.bf16 %v1231, %v1230
    %v1269 = vpack.c.bf16 %v1233, %v1232
    %v1270 = vpack.c.bf16 %v1235, %v1234
    %v1271 = vpack.c.bf16 %v1237, %v1236
    %v1272 = vpack.c.bf16 %v1239, %v1238
    %v1273 = vpack.c.bf16 %v1241, %v1240
    %v1274 = vld [vmem:[%s3 + $0x8] sm:$0x1]
    %v1275 = vlaneseq
    %v1276 = vshrl.u32 %v1275, 7
    %v1277 = vsub.s32 0, %v1276
    %v1278 = vrot.slane %v1274, %v1277
    %v1295 = vunpack.c.l.b16 %v1242
    %v1296 = vunpack.c.l.b16 %v1243
    %v1297 = vunpack.c.l.b16 %v1244
    %v1298 = vunpack.c.l.b16 %v1245
    %v1299 = vunpack.c.l.b16 %v1246
    %v1300 = vunpack.c.l.b16 %v1247
    %v1301 = vunpack.c.l.b16 %v1248
    %v1302 = vunpack.c.l.b16 %v1249
    %v1303 = vunpack.c.l.b16 %v1250
    %v1304 = vunpack.c.l.b16 %v1251
    %v1305 = vunpack.c.l.b16 %v1252
    %v1306 = vunpack.c.l.b16 %v1253
    %v1307 = vunpack.c.l.b16 %v1254
    %v1308 = vunpack.c.l.b16 %v1255
    %v1309 = vunpack.c.l.b16 %v1256
    %v1310 = vunpack.c.l.b16 %v1257
    %v1311 = vpack.c.b16 %v1296, %v1295
    %v1312 = vpack.c.b16 %v1298, %v1297
    %v1313 = vpack.c.b16 %v1300, %v1299
    %v1314 = vpack.c.b16 %v1302, %v1301
    %v1315 = vpack.c.b16 %v1304, %v1303
    %v1316 = vpack.c.b16 %v1306, %v1305
    %v1317 = vpack.c.b16 %v1308, %v1307
    %v1318 = vpack.c.b16 %v1310, %v1309
    %1327 = vmatprep.subr.bf16.mxu0 0
    %1328 = vmatpush1.bf16.msra.mxu0 %v1311
    %1329 = vmatprep.subr.bf16.mxu0 0
    %1330 = vmatpush1.bf16.msra.mxu0 %v1312
    %1331 = vmatprep.subr.bf16.mxu0 0
    %1332 = vmatpush1.bf16.msra.mxu0 %v1313
    %1333 = vmatprep.subr.bf16.mxu0 0
    %1334 = vmatpush1.bf16.msra.mxu0 %v1314
    %1335 = vmatprep.subr.bf16.mxu0 0
    %1336 = vmatpush1.bf16.msra.mxu0 %v1315
    %1337 = vmatprep.subr.bf16.mxu0 0
    %1338 = vmatpush1.bf16.msra.mxu0 %v1316
    %1339 = vmatprep.subr.bf16.mxu0 0
    %1340 = vmatpush1.bf16.msra.mxu0 %v1317
    %1341 = vmatprep.subr.bf16.mxu0 0
    %1342 = vmatpush1.bf16.msra.mxu0 %v1318
    %1343 = vmatprep.subr.bf16.mxu0 0
    %1344 = vmatpush1.bf16.msra.mxu0 0
    %1345 = vmatprep.subr.bf16.mxu0 0
    %1346 = vmatpush1.bf16.msra.mxu0 0
    %1347 = vmatprep.subr.bf16.mxu0 0
    %1348 = vmatpush1.bf16.msra.mxu0 0
    %1349 = vmatprep.subr.bf16.mxu0 0
    %1350 = vmatpush1.bf16.msra.mxu0 0
    %1351 = vmatprep.subr.bf16.mxu0 0
    %1352 = vmatpush1.bf16.msra.mxu0 0
    %1353 = vmatprep.subr.bf16.mxu0 0
    %1354 = vmatpush1.bf16.msra.mxu0 0
    %1355 = vmatprep.subr.bf16.mxu0 0
    %1356 = vmatpush1.bf16.msra.mxu0 0
    %1357 = vmatprep.subr.bf16.mxu0 0
    %1358 = vmatpush1.bf16.msra.mxu0 0
    %1359 = vmatprep.mubr.bf16.mxu0 0
    %1360 = vmatmul.mubr.bf16.gmra.mrb[0].mxu0 %v1258
    %v1361 = vpop.f32.mrb[0].mxu0
    %v1362 = vadd.f32 %v1278, %v1361
    %v1363 = vpop.f32.mrb[0].mxu0
    %v1364 = vpop.f32.mrb[0].mxu0
    %v1365 = vadd.f32 %v1278, %v1364
    %v1366 = vpop.f32.mrb[0].mxu0
    %1367 = vmatprep.mubr.bf16.mxu0 0
    %1368 = vmatmul.mubr.bf16.gmra.mrb[0].mxu0 %v1259
    %v1369 = vpop.f32.mrb[0].mxu0
    %v1370 = vadd.f32 %v1278, %v1369
    %v1371 = vpop.f32.mrb[0].mxu0
    %v1372 = vpop.f32.mrb[0].mxu0
    %v1373 = vadd.f32 %v1278, %v1372
    %v1374 = vpop.f32.mrb[0].mxu0
    %1375 = vmatprep.mubr.bf16.mxu0 0
    %1376 = vmatmul.mubr.bf16.gmra.mrb[0].mxu0 %v1260
    %v1377 = vpop.f32.mrb[0].mxu0
    %v1378 = vadd.f32 %v1278, %v1377
    %v1379 = vpop.f32.mrb[0].mxu0
    %v1380 = vpop.f32.mrb[0].mxu0
    %v1381 = vadd.f32 %v1278, %v1380
    %v1382 = vpop.f32.mrb[0].mxu0
    %1383 = vmatprep.mubr.bf16.mxu0 0
    %1384 = vmatmul.mubr.bf16.gmra.mrb[0].mxu0 %v1261
    %v1385 = vpop.f32.mrb[0].mxu0
    %v1386 = vadd.f32 %v1278, %v1385
    %v1387 = vpop.f32.mrb[0].mxu0
    %v1388 = vpop.f32.mrb[0].mxu0
    %v1389 = vadd.f32 %v1278, %v1388
    %v1390 = vpop.f32.mrb[0].mxu0
    %1391 = vmatprep.mubr.bf16.mxu0 0
    %1392 = vmatmul.mubr.bf16.gmra.mrb[0].mxu0 %v1262
    %v1393 = vpop.f32.mrb[0].mxu0
    %v1394 = vadd.f32 %v1278, %v1393
    %v1395 = vpop.f32.mrb[0].mxu0
    %v1396 = vpop.f32.mrb[0].mxu0
    %v1397 = vadd.f32 %v1278, %v1396
    %v1398 = vpop.f32.mrb[0].mxu0
    %1399 = vmatprep.mubr.bf16.mxu0 0
    %1400 = vmatmul.mubr.bf16.gmra.mrb[0].mxu0 %v1263
    %v1401 = vpop.f32.mrb[0].mxu0
    %v1402 = vadd.f32 %v1278, %v1401
    %v1403 = vpop.f32.mrb[0].mxu0
    %v1404 = vpop.f32.mrb[0].mxu0
    %v1405 = vadd.f32 %v1278, %v1404
    %v1406 = vpop.f32.mrb[0].mxu0
    %1407 = vmatprep.mubr.bf16.mxu0 0
    %1408 = vmatmul.mubr.bf16.gmra.mrb[0].mxu0 %v1264
    %v1409 = vpop.f32.mrb[0].mxu0
    %v1410 = vadd.f32 %v1278, %v1409
    %v1411 = vpop.f32.mrb[0].mxu0
    %v1412 = vpop.f32.mrb[0].mxu0
    %v1413 = vadd.f32 %v1278, %v1412
    %v1414 = vpop.f32.mrb[0].mxu0
    %1415 = vmatprep.mubr.bf16.mxu0 0
    %1416 = vmatmul.mubr.bf16.gmra.mrb[0].mxu0 %v1265
    %v1417 = vpop.f32.mrb[0].mxu0
    %v1418 = vadd.f32 %v1278, %v1417
    %v1419 = vpop.f32.mrb[0].mxu0
    %v1420 = vpop.f32.mrb[0].mxu0
    %v1421 = vadd.f32 %v1278, %v1420
    %v1422 = vpop.f32.mrb[0].mxu0
    %1423 = vmatprep.mubr.bf16.mxu0 0
    %1424 = vmatmul.mubr.bf16.gmra.mrb[0].mxu0 %v1266
    %v1425 = vpop.f32.mrb[0].mxu0
    %v1426 = vadd.f32 %v1278, %v1425
    %v1427 = vpop.f32.mrb[0].mxu0
    %v1428 = vpop.f32.mrb[0].mxu0
    %v1429 = vadd.f32 %v1278, %v1428
    %v1430 = vpop.f32.mrb[0].mxu0
    %1431 = vmatprep.mubr.bf16.mxu0 0
    %1432 = vmatmul.mubr.bf16.gmra.mrb[0].mxu0 %v1267
    %v1433 = vpop.f32.mrb[0].mxu0
    %v1434 = vadd.f32 %v1278, %v1433
    %v1435 = vpop.f32.mrb[0].mxu0
    %v1436 = vpop.f32.mrb[0].mxu0
    %v1437 = vadd.f32 %v1278, %v1436
    %v1438 = vpop.f32.mrb[0].mxu0
    %1439 = vmatprep.mubr.bf16.mxu0 0
    %1440 = vmatmul.mubr.bf16.gmra.mrb[0].mxu0 %v1268
    %v1441 = vpop.f32.mrb[0].mxu0
    %v1442 = vadd.f32 %v1278, %v1441
    %v1443 = vpop.f32.mrb[0].mxu0
    %v1444 = vpop.f32.mrb[0].mxu0
    %v1445 = vadd.f32 %v1278, %v1444
    %v1446 = vpop.f32.mrb[0].mxu0
    %1447 = vmatprep.mubr.bf16.mxu0 0
    %1448 = vmatmul.mubr.bf16.gmra.mrb[0].mxu0 %v1269
    %v1449 = vpop.f32.mrb[0].mxu0
    %v1450 = vadd.f32 %v1278, %v1449
    %v1451 = vpop.f32.mrb[0].mxu0
    %v1452 = vpop.f32.mrb[0].mxu0
    %v1453 = vadd.f32 %v1278, %v1452
    %v1454 = vpop.f32.mrb[0].mxu0
    %1455 = vmatprep.mubr.bf16.mxu0 0
    %1456 = vmatmul.mubr.bf16.gmra.mrb[0].mxu0 %v1270
    %v1457 = vpop.f32.mrb[0].mxu0
    %v1458 = vadd.f32 %v1278, %v1457
    %v1459 = vpop.f32.mrb[0].mxu0
    %v1460 = vpop.f32.mrb[0].mxu0
    %v1461 = vadd.f32 %v1278, %v1460
    %v1462 = vpop.f32.mrb[0].mxu0
    %1463 = vmatprep.mubr.bf16.mxu0 0
    %1464 = vmatmul.mubr.bf16.gmra.mrb[0].mxu0 %v1271
    %v1465 = vpop.f32.mrb[0].mxu0
    %v1466 = vadd.f32 %v1278, %v1465
    %v1467 = vpop.f32.mrb[0].mxu0
    %v1468 = vpop.f32.mrb[0].mxu0
    %v1469 = vadd.f32 %v1278, %v1468
    %v1470 = vpop.f32.mrb[0].mxu0
    %1471 = vmatprep.mubr.bf16.mxu0 0
    %1472 = vmatmul.mubr.bf16.gmra.mrb[0].mxu0 %v1272
    %v1473 = vpop.f32.mrb[0].mxu0
    %v1474 = vadd.f32 %v1278, %v1473
    %v1475 = vpop.f32.mrb[0].mxu0
    %v1476 = vpop.f32.mrb[0].mxu0
    %v1477 = vadd.f32 %v1278, %v1476
    %v1478 = vpop.f32.mrb[0].mxu0
    %1479 = vmatprep.mubr.bf16.mxu0 0
    %1480 = vmatmul.mubr.bf16.gmra.mrb[0].mxu0 %v1273
    %v1481 = vpop.f32.mrb[0].mxu0
    %v1482 = vadd.f32 %v1278, %v1481
    %v1483 = vpop.f32.mrb[0].mxu0
    %v1484 = vpop.f32.mrb[0].mxu0
    %v1485 = vadd.f32 %v1278, %v1484
    %v1486 = vpop.f32.mrb[0].mxu0
    %1487 = vdwg.mxu0
    %1488 = vst [vmem:[%s5] sm:$0xff] %v1362
    %1489 = vst [vmem:[%s5 + $0x8] sm:$0xff] %v1365
    %1490 = vst [vmem:[%s5 + $0x10] sm:$0xff] %v1370
    %1491 = vst [vmem:[%s5 + $0x18] sm:$0xff] %v1373
    %1492 = vst [vmem:[%s5 + $0x20] sm:$0xff] %v1378
    %1493 = vst [vmem:[%s5 + $0x28] sm:$0xff] %v1381
    %1494 = vst [vmem:[%s5 + $0x30] sm:$0xff] %v1386
    %1495 = vst [vmem:[%s5 + $0x38] sm:$0xff] %v1389
    %1496 = vst [vmem:[%s5 + $0x40] sm:$0xff] %v1394
    %1497 = vst [vmem:[%s5 + $0x48] sm:$0xff] %v1397
    %1498 = vst [vmem:[%s5 + $0x50] sm:$0xff] %v1402
    %1499 = vst [vmem:[%s5 + $0x58] sm:$0xff] %v1405
    %1500 = vst [vmem:[%s5 + $0x60] sm:$0xff] %v1410
    %1501 = vst [vmem:[%s5 + $0x68] sm:$0xff] %v1413
    %1502 = vst [vmem:[%s5 + $0x70] sm:$0xff] %v1418
    %1503 = vst [vmem:[%s5 + $0x78] sm:$0xff] %v1421
    %1504 = vst [vmem:[%s5 + $0x80] sm:$0xff] %v1426
    %1505 = vst [vmem:[%s5 + $0x88] sm:$0xff] %v1429
    %1506 = vst [vmem:[%s5 + $0x90] sm:$0xff] %v1434
    %1507 = vst [vmem:[%s5 + $0x98] sm:$0xff] %v1437
    %1508 = vst [vmem:[%s5 + $0xa0] sm:$0xff] %v1442
    %1509 = vst [vmem:[%s5 + $0xa8] sm:$0xff] %v1445
    %1510 = vst [vmem:[%s5 + $0xb0] sm:$0xff] %v1450
    %1511 = vst [vmem:[%s5 + $0xb8] sm:$0xff] %v1453
    %1512 = vst [vmem:[%s5 + $0xc0] sm:$0xff] %v1458
    %1513 = vst [vmem:[%s5 + $0xc8] sm:$0xff] %v1461
    %1514 = vst [vmem:[%s5 + $0xd0] sm:$0xff] %v1466
    %1515 = vst [vmem:[%s5 + $0xd8] sm:$0xff] %v1469
    %1516 = vst [vmem:[%s5 + $0xe0] sm:$0xff] %v1474
    %1517 = vst [vmem:[%s5 + $0xe8] sm:$0xff] %v1477
    %1518 = vst [vmem:[%s5 + $0xf0] sm:$0xff] %v1482
    %1519 = vst [vmem:[%s5 + $0xf8] sm:$0xff] %v1485
    %v1520 = vld [vmem:[%s1] sm:$0xff]
    %v1521 = vld [vmem:[%s1 + $0x8] sm:$0xff]
    %v1522 = vld [vmem:[%s1 + $0x10] sm:$0xff]
    %v1523 = vld [vmem:[%s1 + $0x18] sm:$0xff]
    %v1524 = vld [vmem:[%s1 + $0x20] sm:$0xff]
    %v1525 = vld [vmem:[%s1 + $0x28] sm:$0xff]
    %v1526 = vld [vmem:[%s1 + $0x30] sm:$0xff]
    %v1527 = vld [vmem:[%s1 + $0x38] sm:$0xff]
    %v1528 = vld [vmem:[%s1 + $0x40] sm:$0xff]
    %v1529 = vld [vmem:[%s1 + $0x48] sm:$0xff]
    %v1530 = vld [vmem:[%s1 + $0x50] sm:$0xff]
    %v1531 = vld [vmem:[%s1 + $0x58] sm:$0xff]
    %v1532 = vld [vmem:[%s1 + $0x60] sm:$0xff]
    %v1533 = vld [vmem:[%s1 + $0x68] sm:$0xff]
    %v1534 = vld [vmem:[%s1 + $0x70] sm:$0xff]
    %v1535 = vld [vmem:[%s1 + $0x78] sm:$0xff]
    %v1536 = vld [vmem:[%s1 + $0x80] sm:$0xff]
    %v1537 = vld [vmem:[%s1 + $0x88] sm:$0xff]
    %v1538 = vld [vmem:[%s1 + $0x90] sm:$0xff]
    %v1539 = vld [vmem:[%s1 + $0x98] sm:$0xff]
    %v1540 = vld [vmem:[%s1 + $0xa0] sm:$0xff]
    %v1541 = vld [vmem:[%s1 + $0xa8] sm:$0xff]
    %v1542 = vld [vmem:[%s1 + $0xb0] sm:$0xff]
    %v1543 = vld [vmem:[%s1 + $0xb8] sm:$0xff]
    %v1544 = vld [vmem:[%s1 + $0xc0] sm:$0xff]
    %v1545 = vld [vmem:[%s1 + $0xc8] sm:$0xff]
    %v1546 = vld [vmem:[%s1 + $0xd0] sm:$0xff]
    %v1547 = vld [vmem:[%s1 + $0xd8] sm:$0xff]
    %v1548 = vld [vmem:[%s1 + $0xe0] sm:$0xff]
    %v1549 = vld [vmem:[%s1 + $0xe8] sm:$0xff]
    %v1550 = vld [vmem:[%s1 + $0xf0] sm:$0xff]
    %v1551 = vld [vmem:[%s1 + $0xf8] sm:$0xff]
    %v1552 = vmul.f32 %v1362, 0.5
    %v1553 = vmul.f32 %v1365, 0.5
    %v1554 = vmul.f32 %v1370, 0.5
    %v1555 = vmul.f32 %v1373, 0.5
    %v1556 = vmul.f32 %v1378, 0.5
    %v1557 = vmul.f32 %v1381, 0.5
    %v1558 = vmul.f32 %v1386, 0.5
    %v1559 = vmul.f32 %v1389, 0.5
    %v1560 = vmul.f32 %v1394, 0.5
    %v1561 = vmul.f32 %v1397, 0.5
    %v1562 = vmul.f32 %v1402, 0.5
    %v1563 = vmul.f32 %v1405, 0.5
    %v1564 = vmul.f32 %v1410, 0.5
    %v1565 = vmul.f32 %v1413, 0.5
    %v1566 = vmul.f32 %v1418, 0.5
    %v1567 = vmul.f32 %v1421, 0.5
    %v1568 = vmul.f32 %v1426, 0.5
    %v1569 = vmul.f32 %v1429, 0.5
    %v1570 = vmul.f32 %v1434, 0.5
    %v1571 = vmul.f32 %v1437, 0.5
    %v1572 = vmul.f32 %v1442, 0.5
    %v1573 = vmul.f32 %v1445, 0.5
    %v1574 = vmul.f32 %v1450, 0.5
    %v1575 = vmul.f32 %v1453, 0.5
    %v1576 = vmul.f32 %v1458, 0.5
    %v1577 = vmul.f32 %v1461, 0.5
    %v1578 = vmul.f32 %v1466, 0.5
    %v1579 = vmul.f32 %v1469, 0.5
    %v1580 = vmul.f32 %v1474, 0.5
    %v1581 = vmul.f32 %v1477, 0.5
    %v1582 = vmul.f32 %v1482, 0.5
    %v1583 = vmul.f32 %v1485, 0.5
    %v1584 = vmul.f32 %v1552, 1.442695
    %v1585 = vpow.pop %v1584
    %v1586 = vmul.f32 %v1553, 1.442695
    %v1587 = vpow.pop %v1586
    %v1588 = vmul.f32 %v1554, 1.442695
    %v1589 = vpow.pop %v1588
    %v1590 = vmul.f32 %v1555, 1.442695
    %v1591 = vpow.pop %v1590
    %v1592 = vmul.f32 %v1556, 1.442695
    %v1593 = vpow.pop %v1592
    %v1594 = vmul.f32 %v1557, 1.442695
    %v1595 = vpow.pop %v1594
    %v1596 = vmul.f32 %v1558, 1.442695
    %v1597 = vpow.pop %v1596
    %v1598 = vmul.f32 %v1559, 1.442695
    %v1599 = vpow.pop %v1598
    %v1600 = vmul.f32 %v1560, 1.442695
    %v1601 = vpow.pop %v1600
    %v1602 = vmul.f32 %v1561, 1.442695
    %v1603 = vpow.pop %v1602
    %v1604 = vmul.f32 %v1562, 1.442695
    %v1605 = vpow.pop %v1604
    %v1606 = vmul.f32 %v1563, 1.442695
    %v1607 = vpow.pop %v1606
    %v1608 = vmul.f32 %v1564, 1.442695
    %v1609 = vpow.pop %v1608
    %v1610 = vmul.f32 %v1565, 1.442695
    %v1611 = vpow.pop %v1610
    %v1612 = vmul.f32 %v1566, 1.442695
    %v1613 = vpow.pop %v1612
    %v1614 = vmul.f32 %v1567, 1.442695
    %v1615 = vpow.pop %v1614
    %v1616 = vmul.f32 %v1568, 1.442695
    %v1617 = vpow.pop %v1616
    %v1618 = vmul.f32 %v1569, 1.442695
    %v1619 = vpow.pop %v1618
    %v1620 = vmul.f32 %v1570, 1.442695
    %v1621 = vpow.pop %v1620
    %v1622 = vmul.f32 %v1571, 1.442695
    %v1623 = vpow.pop %v1622
    %v1624 = vmul.f32 %v1572, 1.442695
    %v1625 = vpow.pop %v1624
    %v1626 = vmul.f32 %v1573, 1.442695
    %v1627 = vpow.pop %v1626
    %v1628 = vmul.f32 %v1574, 1.442695
    %v1629 = vpow.pop %v1628
    %v1630 = vmul.f32 %v1575, 1.442695
    %v1631 = vpow.pop %v1630
    %v1632 = vmul.f32 %v1576, 1.442695
    %v1633 = vpow.pop %v1632
    %v1634 = vmul.f32 %v1577, 1.442695
    %v1635 = vpow.pop %v1634
    %v1636 = vmul.f32 %v1578, 1.442695
    %v1637 = vpow.pop %v1636
    %v1638 = vmul.f32 %v1579, 1.442695
    %v1639 = vpow.pop %v1638
    %v1640 = vmul.f32 %v1580, 1.442695
    %v1641 = vpow.pop %v1640
    %v1642 = vmul.f32 %v1581, 1.442695
    %v1643 = vpow.pop %v1642
    %v1644 = vmul.f32 %v1582, 1.442695
    %v1645 = vpow.pop %v1644
    %v1646 = vmul.f32 %v1583, 1.442695
    %v1647 = vpow.pop %v1646
    %1680 = vrot.lane.b32.xlu0 %v1585, 64
    %v1681 = vpop.permute.xlu0 %1680
    %1682 = vrot.lane.b32.xlu0 %v1587, 64
    %v1683 = vpop.permute.xlu0 %1682
    %1684 = vrot.lane.b32.xlu0 %v1589, 64
    %v1685 = vpop.permute.xlu0 %1684
    %1686 = vrot.lane.b32.xlu0 %v1591, 64
    %v1687 = vpop.permute.xlu0 %1686
    %1688 = vrot.lane.b32.xlu0 %v1593, 64
    %v1689 = vpop.permute.xlu0 %1688
    %1690 = vrot.lane.b32.xlu0 %v1595, 64
    %v1691 = vpop.permute.xlu0 %1690
    %1692 = vrot.lane.b32.xlu0 %v1597, 64
    %v1693 = vpop.permute.xlu0 %1692
    %1694 = vrot.lane.b32.xlu0 %v1599, 64
    %v1695 = vpop.permute.xlu0 %1694
    %1696 = vrot.lane.b32.xlu0 %v1601, 64
    %v1697 = vpop.permute.xlu0 %1696
    %1698 = vrot.lane.b32.xlu0 %v1603, 64
    %v1699 = vpop.permute.xlu0 %1698
    %1700 = vrot.lane.b32.xlu0 %v1605, 64
    %v1701 = vpop.permute.xlu0 %1700
    %1702 = vrot.lane.b32.xlu0 %v1607, 64
    %v1703 = vpop.permute.xlu0 %1702
    %1704 = vrot.lane.b32.xlu0 %v1609, 64
    %v1705 = vpop.permute.xlu0 %1704
    %1706 = vrot.lane.b32.xlu0 %v1611, 64
    %v1707 = vpop.permute.xlu0 %1706
    %1708 = vrot.lane.b32.xlu0 %v1613, 64
    %v1709 = vpop.permute.xlu0 %1708
    %1710 = vrot.lane.b32.xlu0 %v1615, 64
    %v1711 = vpop.permute.xlu0 %1710
    %1712 = vrot.lane.b32.xlu0 %v1617, 64
    %v1713 = vpop.permute.xlu0 %1712
    %1714 = vrot.lane.b32.xlu0 %v1619, 64
    %v1715 = vpop.permute.xlu0 %1714
    %1716 = vrot.lane.b32.xlu0 %v1621, 64
    %v1717 = vpop.permute.xlu0 %1716
    %1718 = vrot.lane.b32.xlu0 %v1623, 64
    %v1719 = vpop.permute.xlu0 %1718
    %1720 = vrot.lane.b32.xlu0 %v1625, 64
    %v1721 = vpop.permute.xlu0 %1720
    %1722 = vrot.lane.b32.xlu0 %v1627, 64
    %v1723 = vpop.permute.xlu0 %1722
    %1724 = vrot.lane.b32.xlu0 %v1629, 64
    %v1725 = vpop.permute.xlu0 %1724
    %1726 = vrot.lane.b32.xlu0 %v1631, 64
    %v1727 = vpop.permute.xlu0 %1726
    %1728 = vrot.lane.b32.xlu0 %v1633, 64
    %v1729 = vpop.permute.xlu0 %1728
    %1730 = vrot.lane.b32.xlu0 %v1635, 64
    %v1731 = vpop.permute.xlu0 %1730
    %1732 = vrot.lane.b32.xlu0 %v1637, 64
    %v1733 = vpop.permute.xlu0 %1732
    %1734 = vrot.lane.b32.xlu0 %v1639, 64
    %v1735 = vpop.permute.xlu0 %1734
    %1736 = vrot.lane.b32.xlu0 %v1641, 64
    %v1737 = vpop.permute.xlu0 %1736
    %1738 = vrot.lane.b32.xlu0 %v1643, 64
    %v1739 = vpop.permute.xlu0 %1738
    %1740 = vrot.lane.b32.xlu0 %v1645, 64
    %v1741 = vpop.permute.xlu0 %1740
    %1742 = vrot.lane.b32.xlu0 %v1647, 64
    %v1743 = vpop.permute.xlu0 %1742
    %v1776 = vmul.f32 %v1520, %v1681
    %v1777 = vmul.f32 %v1521, %v1683
    %v1778 = vmul.f32 %v1522, %v1685
    %v1779 = vmul.f32 %v1523, %v1687
    %v1780 = vmul.f32 %v1524, %v1689
    %v1781 = vmul.f32 %v1525, %v1691
    %v1782 = vmul.f32 %v1526, %v1693
    %v1783 = vmul.f32 %v1527, %v1695
    %v1784 = vmul.f32 %v1528, %v1697
    %v1785 = vmul.f32 %v1529, %v1699
    %v1786 = vmul.f32 %v1530, %v1701
    %v1787 = vmul.f32 %v1531, %v1703
    %v1788 = vmul.f32 %v1532, %v1705
    %v1789 = vmul.f32 %v1533, %v1707
    %v1790 = vmul.f32 %v1534, %v1709
    %v1791 = vmul.f32 %v1535, %v1711
    %v1792 = vmul.f32 %v1536, %v1713
    %v1793 = vmul.f32 %v1537, %v1715
    %v1794 = vmul.f32 %v1538, %v1717
    %v1795 = vmul.f32 %v1539, %v1719
    %v1796 = vmul.f32 %v1540, %v1721
    %v1797 = vmul.f32 %v1541, %v1723
    %v1798 = vmul.f32 %v1542, %v1725
    %v1799 = vmul.f32 %v1543, %v1727
    %v1800 = vmul.f32 %v1544, %v1729
    %v1801 = vmul.f32 %v1545, %v1731
    %v1802 = vmul.f32 %v1546, %v1733
    %v1803 = vmul.f32 %v1547, %v1735
    %v1804 = vmul.f32 %v1548, %v1737
    %v1805 = vmul.f32 %v1549, %v1739
    %v1806 = vmul.f32 %v1550, %v1741
    %v1807 = vmul.f32 %v1551, %v1743
    %v1808 = vadd.f32 %v1362, %v1776
    %v1809 = vadd.f32 %v1365, %v1777
    %v1810 = vadd.f32 %v1370, %v1778
    %v1811 = vadd.f32 %v1373, %v1779
    %v1812 = vadd.f32 %v1378, %v1780
    %v1813 = vadd.f32 %v1381, %v1781
    %v1814 = vadd.f32 %v1386, %v1782
    %v1815 = vadd.f32 %v1389, %v1783
    %v1816 = vadd.f32 %v1394, %v1784
    %v1817 = vadd.f32 %v1397, %v1785
    %v1818 = vadd.f32 %v1402, %v1786
    %v1819 = vadd.f32 %v1405, %v1787
    %v1820 = vadd.f32 %v1410, %v1788
    %v1821 = vadd.f32 %v1413, %v1789
    %v1822 = vadd.f32 %v1418, %v1790
    %v1823 = vadd.f32 %v1421, %v1791
    %v1824 = vadd.f32 %v1426, %v1792
    %v1825 = vadd.f32 %v1429, %v1793
    %v1826 = vadd.f32 %v1434, %v1794
    %v1827 = vadd.f32 %v1437, %v1795
    %v1828 = vadd.f32 %v1442, %v1796
    %v1829 = vadd.f32 %v1445, %v1797
    %v1830 = vadd.f32 %v1450, %v1798
    %v1831 = vadd.f32 %v1453, %v1799
    %v1832 = vadd.f32 %v1458, %v1800
    %v1833 = vadd.f32 %v1461, %v1801
    %v1834 = vadd.f32 %v1466, %v1802
    %v1835 = vadd.f32 %v1469, %v1803
    %v1836 = vadd.f32 %v1474, %v1804
    %v1837 = vadd.f32 %v1477, %v1805
    %v1838 = vadd.f32 %v1482, %v1806
    %v1839 = vadd.f32 %v1485, %v1807
    %v1840 = vld [vmem:[%s2 + $0x100] sm:$0xf]
    %v1841 = vld [vmem:[%s2 + $0x104] sm:$0xf]
    %v1842 = vld [vmem:[%s2 + $0x108] sm:$0xf]
    %v1843 = vld [vmem:[%s2 + $0x10c] sm:$0xf]
    %v1844 = vld [vmem:[%s2 + $0x110] sm:$0xf]
    %v1845 = vld [vmem:[%s2 + $0x114] sm:$0xf]
    %v1846 = vld [vmem:[%s2 + $0x118] sm:$0xf]
    %v1847 = vld [vmem:[%s2 + $0x11c] sm:$0xf]
    %v1848 = vpack.c.bf16 %v1809, %v1808
    %v1849 = vpack.c.bf16 %v1811, %v1810
    %v1850 = vpack.c.bf16 %v1813, %v1812
    %v1851 = vpack.c.bf16 %v1815, %v1814
    %v1852 = vpack.c.bf16 %v1817, %v1816
    %v1853 = vpack.c.bf16 %v1819, %v1818
    %v1854 = vpack.c.bf16 %v1821, %v1820
    %v1855 = vpack.c.bf16 %v1823, %v1822
    %v1856 = vpack.c.bf16 %v1825, %v1824
    %v1857 = vpack.c.bf16 %v1827, %v1826
    %v1858 = vpack.c.bf16 %v1829, %v1828
    %v1859 = vpack.c.bf16 %v1831, %v1830
    %v1860 = vpack.c.bf16 %v1833, %v1832
    %v1861 = vpack.c.bf16 %v1835, %v1834
    %v1862 = vpack.c.bf16 %v1837, %v1836
    %v1863 = vpack.c.bf16 %v1839, %v1838
    %v1872 = vunpack.c.l.b16 %v1840
    %v1873 = vunpack.c.l.b16 %v1841
    %v1874 = vunpack.c.l.b16 %v1842
    %v1875 = vunpack.c.l.b16 %v1843
    %v1876 = vunpack.c.l.b16 %v1844
    %v1877 = vunpack.c.l.b16 %v1845
    %v1878 = vunpack.c.l.b16 %v1846
    %v1879 = vunpack.c.l.b16 %v1847
    %v1880 = vpack.c.b16 %v1873, %v1872
    %v1881 = vpack.c.b16 %v1875, %v1874
    %v1882 = vpack.c.b16 %v1877, %v1876
    %v1883 = vpack.c.b16 %v1879, %v1878
    %vm1888 = vcmask 523264
    %v1890 = vsel %vm1888, %v1848, 0
    %v1893 = vsel %vm1888, %v1849, 0
    %v1896 = vsel %vm1888, %v1850, 0
    %v1899 = vsel %vm1888, %v1851, 0
    %v1902 = vsel %vm1888, %v1852, 0
    %v1905 = vsel %vm1888, %v1853, 0
    %v1908 = vsel %vm1888, %v1854, 0
    %v1911 = vsel %vm1888, %v1855, 0
    %v1914 = vsel %vm1888, %v1856, 0
    %v1917 = vsel %vm1888, %v1857, 0
    %v1920 = vsel %vm1888, %v1858, 0
    %v1923 = vsel %vm1888, %v1859, 0
    %v1926 = vsel %vm1888, %v1860, 0
    %v1929 = vsel %vm1888, %v1861, 0
    %v1932 = vsel %vm1888, %v1862, 0
    %v1935 = vsel %vm1888, %v1863, 0
    %1937 = vmatprep.subr.bf16.mxu0 0
    %1938 = vmatpush1.bf16.msra.mxu0 %v1880
    %1939 = vmatprep.subr.bf16.mxu0 0
    %1940 = vmatpush1.bf16.msra.mxu0 %v1881
    %1941 = vmatprep.subr.bf16.mxu0 0
    %1942 = vmatpush1.bf16.msra.mxu0 %v1882
    %1943 = vmatprep.subr.bf16.mxu0 0
    %1944 = vmatpush1.bf16.msra.mxu0 %v1883
    %1945 = vmatprep.subr.bf16.mxu0 0
    %1946 = vmatpush1.bf16.msra.mxu0 0
    %1947 = vmatprep.subr.bf16.mxu0 0
    %1948 = vmatpush1.bf16.msra.mxu0 0
    %1949 = vmatprep.subr.bf16.mxu0 0
    %1950 = vmatpush1.bf16.msra.mxu0 0
    %1951 = vmatprep.subr.bf16.mxu0 0
    %1952 = vmatpush1.bf16.msra.mxu0 0
    %1953 = vmatprep.subr.bf16.mxu0 0
    %1954 = vmatpush1.bf16.msra.mxu0 0
    %1955 = vmatprep.subr.bf16.mxu0 0
    %1956 = vmatpush1.bf16.msra.mxu0 0
    %1957 = vmatprep.subr.bf16.mxu0 0
    %1958 = vmatpush1.bf16.msra.mxu0 0
    %1959 = vmatprep.subr.bf16.mxu0 0
    %1960 = vmatpush1.bf16.msra.mxu0 0
    %1961 = vmatprep.subr.bf16.mxu0 0
    %1962 = vmatpush1.bf16.msra.mxu0 0
    %1963 = vmatprep.subr.bf16.mxu0 0
    %1964 = vmatpush1.bf16.msra.mxu0 0
    %1965 = vmatprep.subr.bf16.mxu0 0
    %1966 = vmatpush1.bf16.msra.mxu0 0
    %1967 = vmatprep.subr.bf16.mxu0 0
    %1968 = vmatpush1.bf16.msra.mxu0 0
    %1969 = vmatprep.mubr.bf16.mxu0 0
    %1970 = vmatmul.mubr.bf16.gmra.mrb[0].mxu0 %v1890
    %v1971 = vpop.f32.mrb[0].mxu0
    %v1972 = vadd.f32 0.0, %v1971
    %v1973 = vpop.f32.mrb[0].mxu0
    %v1974 = vpop.f32.mrb[0].mxu0
    %v1975 = vadd.f32 0.0, %v1974
    %v1976 = vpop.f32.mrb[0].mxu0
    %1977 = vmatprep.mubr.bf16.mxu0 0
    %1978 = vmatmul.mubr.bf16.gmra.mrb[0].mxu0 %v1893
    %v1979 = vpop.f32.mrb[0].mxu0
    %v1980 = vadd.f32 0.0, %v1979
    %v1981 = vpop.f32.mrb[0].mxu0
    %v1982 = vpop.f32.mrb[0].mxu0
    %v1983 = vadd.f32 0.0, %v1982
    %v1984 = vpop.f32.mrb[0].mxu0
    %1985 = vmatprep.mubr.bf16.mxu0 0
    %1986 = vmatmul.mubr.bf16.gmra.mrb[0].mxu0 %v1896
    %v1987 = vpop.f32.mrb[0].mxu0
    %v1988 = vadd.f32 0.0, %v1987
    %v1989 = vpop.f32.mrb[0].mxu0
    %v1990 = vpop.f32.mrb[0].mxu0
    %v1991 = vadd.f32 0.0, %v1990
    %v1992 = vpop.f32.mrb[0].mxu0
    %1993 = vmatprep.mubr.bf16.mxu0 0
    %1994 = vmatmul.mubr.bf16.gmra.mrb[0].mxu0 %v1899
    %v1995 = vpop.f32.mrb[0].mxu0
    %v1996 = vadd.f32 0.0, %v1995
    %v1997 = vpop.f32.mrb[0].mxu0
    %v1998 = vpop.f32.mrb[0].mxu0
    %v1999 = vadd.f32 0.0, %v1998
    %v2000 = vpop.f32.mrb[0].mxu0
    %2001 = vmatprep.mubr.bf16.mxu0 0
    %2002 = vmatmul.mubr.bf16.gmra.mrb[0].mxu0 %v1902
    %v2003 = vpop.f32.mrb[0].mxu0
    %v2004 = vadd.f32 0.0, %v2003
    %v2005 = vpop.f32.mrb[0].mxu0
    %v2006 = vpop.f32.mrb[0].mxu0
    %v2007 = vadd.f32 0.0, %v2006
    %v2008 = vpop.f32.mrb[0].mxu0
    %2009 = vmatprep.mubr.bf16.mxu0 0
    %2010 = vmatmul.mubr.bf16.gmra.mrb[0].mxu0 %v1905
    %v2011 = vpop.f32.mrb[0].mxu0
    %v2012 = vadd.f32 0.0, %v2011
    %v2013 = vpop.f32.mrb[0].mxu0
    %v2014 = vpop.f32.mrb[0].mxu0
    %v2015 = vadd.f32 0.0, %v2014
    %v2016 = vpop.f32.mrb[0].mxu0
    %2017 = vmatprep.mubr.bf16.mxu0 0
    %2018 = vmatmul.mubr.bf16.gmra.mrb[0].mxu0 %v1908
    %v2019 = vpop.f32.mrb[0].mxu0
    %v2020 = vadd.f32 0.0, %v2019
    %v2021 = vpop.f32.mrb[0].mxu0
    %v2022 = vpop.f32.mrb[0].mxu0
    %v2023 = vadd.f32 0.0, %v2022
    %v2024 = vpop.f32.mrb[0].mxu0
    %2025 = vmatprep.mubr.bf16.mxu0 0
    %2026 = vmatmul.mubr.bf16.gmra.mrb[0].mxu0 %v1911
    %v2027 = vpop.f32.mrb[0].mxu0
    %v2028 = vadd.f32 0.0, %v2027
    %v2029 = vpop.f32.mrb[0].mxu0
    %v2030 = vpop.f32.mrb[0].mxu0
    %v2031 = vadd.f32 0.0, %v2030
    %v2032 = vpop.f32.mrb[0].mxu0
    %2033 = vmatprep.mubr.bf16.mxu0 0
    %2034 = vmatmul.mubr.bf16.gmra.mrb[0].mxu0 %v1914
    %v2035 = vpop.f32.mrb[0].mxu0
    %v2036 = vadd.f32 0.0, %v2035
    %v2037 = vpop.f32.mrb[0].mxu0
    %v2038 = vpop.f32.mrb[0].mxu0
    %v2039 = vadd.f32 0.0, %v2038
    %v2040 = vpop.f32.mrb[0].mxu0
    %2041 = vmatprep.mubr.bf16.mxu0 0
    %2042 = vmatmul.mubr.bf16.gmra.mrb[0].mxu0 %v1917
    %v2043 = vpop.f32.mrb[0].mxu0
    %v2044 = vadd.f32 0.0, %v2043
    %v2045 = vpop.f32.mrb[0].mxu0
    %v2046 = vpop.f32.mrb[0].mxu0
    %v2047 = vadd.f32 0.0, %v2046
    %v2048 = vpop.f32.mrb[0].mxu0
    %2049 = vmatprep.mubr.bf16.mxu0 0
    %2050 = vmatmul.mubr.bf16.gmra.mrb[0].mxu0 %v1920
    %v2051 = vpop.f32.mrb[0].mxu0
    %v2052 = vadd.f32 0.0, %v2051
    %v2053 = vpop.f32.mrb[0].mxu0
    %v2054 = vpop.f32.mrb[0].mxu0
    %v2055 = vadd.f32 0.0, %v2054
    %v2056 = vpop.f32.mrb[0].mxu0
    %2057 = vmatprep.mubr.bf16.mxu0 0
    %2058 = vmatmul.mubr.bf16.gmra.mrb[0].mxu0 %v1923
    %v2059 = vpop.f32.mrb[0].mxu0
    %v2060 = vadd.f32 0.0, %v2059
    %v2061 = vpop.f32.mrb[0].mxu0
    %v2062 = vpop.f32.mrb[0].mxu0
    %v2063 = vadd.f32 0.0, %v2062
    %v2064 = vpop.f32.mrb[0].mxu0
    %2065 = vmatprep.mubr.bf16.mxu0 0
    %2066 = vmatmul.mubr.bf16.gmra.mrb[0].mxu0 %v1926
    %v2067 = vpop.f32.mrb[0].mxu0
    %v2068 = vadd.f32 0.0, %v2067
    %v2069 = vpop.f32.mrb[0].mxu0
    %v2070 = vpop.f32.mrb[0].mxu0
    %v2071 = vadd.f32 0.0, %v2070
    %v2072 = vpop.f32.mrb[0].mxu0
    %2073 = vmatprep.mubr.bf16.mxu0 0
    %2074 = vmatmul.mubr.bf16.gmra.mrb[0].mxu0 %v1929
    %v2075 = vpop.f32.mrb[0].mxu0
    %v2076 = vadd.f32 0.0, %v2075
    %v2077 = vpop.f32.mrb[0].mxu0
    %v2078 = vpop.f32.mrb[0].mxu0
    %v2079 = vadd.f32 0.0, %v2078
    %v2080 = vpop.f32.mrb[0].mxu0
    %2081 = vmatprep.mubr.bf16.mxu0 0
    %2082 = vmatmul.mubr.bf16.gmra.mrb[0].mxu0 %v1932
    %v2083 = vpop.f32.mrb[0].mxu0
    %v2084 = vadd.f32 0.0, %v2083
    %v2085 = vpop.f32.mrb[0].mxu0
    %v2086 = vpop.f32.mrb[0].mxu0
    %v2087 = vadd.f32 0.0, %v2086
    %v2088 = vpop.f32.mrb[0].mxu0
    %2089 = vmatprep.mubr.bf16.mxu0 0
    %2090 = vmatmul.mubr.bf16.gmra.mrb[0].mxu0 %v1935
    %v2091 = vpop.f32.mrb[0].mxu0
    %v2092 = vadd.f32 0.0, %v2091
    %v2093 = vpop.f32.mrb[0].mxu0
    %v2094 = vpop.f32.mrb[0].mxu0
    %v2095 = vadd.f32 0.0, %v2094
    %v2096 = vpop.f32.mrb[0].mxu0
    %2097 = vdwg.mxu0
    %v2098 = vld [vmem:[%s3 + $0x4] sm:$0x1]
    %v2099 = vld [vmem:[%s3 + $0x5] sm:$0x1]
    %v2100 = vadd.f32 %v1972, %v1975
    %v2101 = vadd.f32 %v2100, %v1980
    %v2102 = vadd.f32 %v2101, %v1983
    %v2103 = vadd.f32 %v2102, %v1988
    %v2104 = vadd.f32 %v2103, %v1991
    %v2105 = vadd.f32 %v2104, %v1996
    %v2106 = vadd.f32 %v2105, %v1999
    %v2107 = vadd.f32 %v2106, %v2004
    %v2108 = vadd.f32 %v2107, %v2007
    %v2109 = vadd.f32 %v2108, %v2012
    %v2110 = vadd.f32 %v2109, %v2015
    %v2111 = vadd.f32 %v2110, %v2020
    %v2112 = vadd.f32 %v2111, %v2023
    %v2113 = vadd.f32 %v2112, %v2028
    %v2114 = vadd.f32 %v2113, %v2031
    %v2115 = vadd.f32 %v2114, %v2036
    %v2116 = vadd.f32 %v2115, %v2039
    %v2117 = vadd.f32 %v2116, %v2044
    %v2118 = vadd.f32 %v2117, %v2047
    %v2119 = vadd.f32 %v2118, %v2052
    %v2120 = vadd.f32 %v2119, %v2055
    %v2121 = vadd.f32 %v2120, %v2060
    %v2122 = vadd.f32 %v2121, %v2063
    %v2123 = vadd.f32 %v2122, %v2068
    %v2124 = vadd.f32 %v2123, %v2071
    %v2125 = vadd.f32 %v2124, %v2076
    %v2126 = vadd.f32 %v2125, %v2079
    %v2127 = vadd.f32 %v2126, %v2084
    %v2128 = vadd.f32 %v2127, %v2087
    %v2129 = vadd.f32 %v2128, %v2092
    %v2130 = vadd.f32 %v2129, %v2095
    %v2131 = vrot.slane %v2130, 4
    %v2132 = vadd.f32 %v2130, %v2131
    %v2133 = vrot.slane %v2132, 2
    %v2134 = vadd.f32 %v2132, %v2133
    %v2135 = vrot.slane %v2134, 1
    %v2136 = vadd.f32 %v2134, %v2135
    %v2137 = vmul.f32 %v2136, %v541
    %v2138 = vsub.f32 %v1972, %v2137
    %v2139 = vsub.f32 %v1975, %v2137
    %v2140 = vsub.f32 %v1980, %v2137
    %v2141 = vsub.f32 %v1983, %v2137
    %v2142 = vsub.f32 %v1988, %v2137
    %v2143 = vsub.f32 %v1991, %v2137
    %v2144 = vsub.f32 %v1996, %v2137
    %v2145 = vsub.f32 %v1999, %v2137
    %v2146 = vsub.f32 %v2004, %v2137
    %v2147 = vsub.f32 %v2007, %v2137
    %v2148 = vsub.f32 %v2012, %v2137
    %v2149 = vsub.f32 %v2015, %v2137
    %v2150 = vsub.f32 %v2020, %v2137
    %v2151 = vsub.f32 %v2023, %v2137
    %v2152 = vsub.f32 %v2028, %v2137
    %v2153 = vsub.f32 %v2031, %v2137
    %v2154 = vsub.f32 %v2036, %v2137
    %v2155 = vsub.f32 %v2039, %v2137
    %v2156 = vsub.f32 %v2044, %v2137
    %v2157 = vsub.f32 %v2047, %v2137
    %v2158 = vsub.f32 %v2052, %v2137
    %v2159 = vsub.f32 %v2055, %v2137
    %v2160 = vsub.f32 %v2060, %v2137
    %v2161 = vsub.f32 %v2063, %v2137
    %v2162 = vsub.f32 %v2068, %v2137
    %v2163 = vsub.f32 %v2071, %v2137
    %v2164 = vsub.f32 %v2076, %v2137
    %v2165 = vsub.f32 %v2079, %v2137
    %v2166 = vsub.f32 %v2084, %v2137
    %v2167 = vsub.f32 %v2087, %v2137
    %v2168 = vsub.f32 %v2092, %v2137
    %v2169 = vsub.f32 %v2095, %v2137
    %v2170 = vmul.f32 %v2138, %v2138
    %v2171 = vmul.f32 %v2139, %v2139
    %v2172 = vmul.f32 %v2140, %v2140
    %v2173 = vmul.f32 %v2141, %v2141
    %v2174 = vmul.f32 %v2142, %v2142
    %v2175 = vmul.f32 %v2143, %v2143
    %v2176 = vmul.f32 %v2144, %v2144
    %v2177 = vmul.f32 %v2145, %v2145
    %v2178 = vmul.f32 %v2146, %v2146
    %v2179 = vmul.f32 %v2147, %v2147
    %v2180 = vmul.f32 %v2148, %v2148
    %v2181 = vmul.f32 %v2149, %v2149
    %v2182 = vmul.f32 %v2150, %v2150
    %v2183 = vmul.f32 %v2151, %v2151
    %v2184 = vmul.f32 %v2152, %v2152
    %v2185 = vmul.f32 %v2153, %v2153
    %v2186 = vmul.f32 %v2154, %v2154
    %v2187 = vmul.f32 %v2155, %v2155
    %v2188 = vmul.f32 %v2156, %v2156
    %v2189 = vmul.f32 %v2157, %v2157
    %v2190 = vmul.f32 %v2158, %v2158
    %v2191 = vmul.f32 %v2159, %v2159
    %v2192 = vmul.f32 %v2160, %v2160
    %v2193 = vmul.f32 %v2161, %v2161
    %v2194 = vmul.f32 %v2162, %v2162
    %v2195 = vmul.f32 %v2163, %v2163
    %v2196 = vmul.f32 %v2164, %v2164
    %v2197 = vmul.f32 %v2165, %v2165
    %v2198 = vmul.f32 %v2166, %v2166
    %v2199 = vmul.f32 %v2167, %v2167
    %v2200 = vmul.f32 %v2168, %v2168
    %v2201 = vmul.f32 %v2169, %v2169
    %v2202 = vadd.f32 %v2170, %v2171
    %v2203 = vadd.f32 %v2202, %v2172
    %v2204 = vadd.f32 %v2203, %v2173
    %v2205 = vadd.f32 %v2204, %v2174
    %v2206 = vadd.f32 %v2205, %v2175
    %v2207 = vadd.f32 %v2206, %v2176
    %v2208 = vadd.f32 %v2207, %v2177
    %v2209 = vadd.f32 %v2208, %v2178
    %v2210 = vadd.f32 %v2209, %v2179
    %v2211 = vadd.f32 %v2210, %v2180
    %v2212 = vadd.f32 %v2211, %v2181
    %v2213 = vadd.f32 %v2212, %v2182
    %v2214 = vadd.f32 %v2213, %v2183
    %v2215 = vadd.f32 %v2214, %v2184
    %v2216 = vadd.f32 %v2215, %v2185
    %v2217 = vadd.f32 %v2216, %v2186
    %v2218 = vadd.f32 %v2217, %v2187
    %v2219 = vadd.f32 %v2218, %v2188
    %v2220 = vadd.f32 %v2219, %v2189
    %v2221 = vadd.f32 %v2220, %v2190
    %v2222 = vadd.f32 %v2221, %v2191
    %v2223 = vadd.f32 %v2222, %v2192
    %v2224 = vadd.f32 %v2223, %v2193
    %v2225 = vadd.f32 %v2224, %v2194
    %v2226 = vadd.f32 %v2225, %v2195
    %v2227 = vadd.f32 %v2226, %v2196
    %v2228 = vadd.f32 %v2227, %v2197
    %v2229 = vadd.f32 %v2228, %v2198
    %v2230 = vadd.f32 %v2229, %v2199
    %v2231 = vadd.f32 %v2230, %v2200
    %v2232 = vadd.f32 %v2231, %v2201
    %v2233 = vrot.slane %v2232, 4
    %v2234 = vadd.f32 %v2232, %v2233
    %v2235 = vrot.slane %v2234, 2
    %v2236 = vadd.f32 %v2234, %v2235
    %v2237 = vrot.slane %v2236, 1
    %v2238 = vadd.f32 %v2236, %v2237
    %v2239 = vmul.f32 %v2238, %v541
    %v2240 = vadd.f32 %v2239, 1e-05
    %v2241 = vrsqrt.pop %v2240
    %v2242 = vmul.f32 %v2098, %v2241
    %v2243 = vlaneseq
    %v2244 = vshrl.u32 %v2243, 7
    %v2245 = vsub.s32 0, %v2244
    %v2246 = vrot.slane %v2242, %v2245
    %v2247 = vmul.f32 %v2138, %v2246
    %v2248 = vmul.f32 %v2139, %v2246
    %v2249 = vmul.f32 %v2140, %v2246
    %v2250 = vmul.f32 %v2141, %v2246
    %v2251 = vmul.f32 %v2142, %v2246
    %v2252 = vmul.f32 %v2143, %v2246
    %v2253 = vmul.f32 %v2144, %v2246
    %v2254 = vmul.f32 %v2145, %v2246
    %v2255 = vmul.f32 %v2146, %v2246
    %v2256 = vmul.f32 %v2147, %v2246
    %v2257 = vmul.f32 %v2148, %v2246
    %v2258 = vmul.f32 %v2149, %v2246
    %v2259 = vmul.f32 %v2150, %v2246
    %v2260 = vmul.f32 %v2151, %v2246
    %v2261 = vmul.f32 %v2152, %v2246
    %v2262 = vmul.f32 %v2153, %v2246
    %v2263 = vmul.f32 %v2154, %v2246
    %v2264 = vmul.f32 %v2155, %v2246
    %v2265 = vmul.f32 %v2156, %v2246
    %v2266 = vmul.f32 %v2157, %v2246
    %v2267 = vmul.f32 %v2158, %v2246
    %v2268 = vmul.f32 %v2159, %v2246
    %v2269 = vmul.f32 %v2160, %v2246
    %v2270 = vmul.f32 %v2161, %v2246
    %v2271 = vmul.f32 %v2162, %v2246
    %v2272 = vmul.f32 %v2163, %v2246
    %v2273 = vmul.f32 %v2164, %v2246
    %v2274 = vmul.f32 %v2165, %v2246
    %v2275 = vmul.f32 %v2166, %v2246
    %v2276 = vmul.f32 %v2167, %v2246
    %v2277 = vmul.f32 %v2168, %v2246
    %v2278 = vmul.f32 %v2169, %v2246
    %v2279 = vlaneseq
    %v2280 = vshrl.u32 %v2279, 7
    %v2281 = vsub.s32 0, %v2280
    %v2282 = vrot.slane %v2099, %v2281
    %v2283 = vadd.f32 %v2247, %v2282
    %v2284 = vadd.f32 %v2248, %v2282
    %v2285 = vadd.f32 %v2249, %v2282
    %v2286 = vadd.f32 %v2250, %v2282
    %v2287 = vadd.f32 %v2251, %v2282
    %v2288 = vadd.f32 %v2252, %v2282
    %v2289 = vadd.f32 %v2253, %v2282
    %v2290 = vadd.f32 %v2254, %v2282
    %v2291 = vadd.f32 %v2255, %v2282
    %v2292 = vadd.f32 %v2256, %v2282
    %v2293 = vadd.f32 %v2257, %v2282
    %v2294 = vadd.f32 %v2258, %v2282
    %v2295 = vadd.f32 %v2259, %v2282
    %v2296 = vadd.f32 %v2260, %v2282
    %v2297 = vadd.f32 %v2261, %v2282
    %v2298 = vadd.f32 %v2262, %v2282
    %v2299 = vadd.f32 %v2263, %v2282
    %v2300 = vadd.f32 %v2264, %v2282
    %v2301 = vadd.f32 %v2265, %v2282
    %v2302 = vadd.f32 %v2266, %v2282
    %v2303 = vadd.f32 %v2267, %v2282
    %v2304 = vadd.f32 %v2268, %v2282
    %v2305 = vadd.f32 %v2269, %v2282
    %v2306 = vadd.f32 %v2270, %v2282
    %v2307 = vadd.f32 %v2271, %v2282
    %v2308 = vadd.f32 %v2272, %v2282
    %v2309 = vadd.f32 %v2273, %v2282
    %v2310 = vadd.f32 %v2274, %v2282
    %v2311 = vadd.f32 %v2275, %v2282
    %v2312 = vadd.f32 %v2276, %v2282
    %v2313 = vadd.f32 %v2277, %v2282
    %v2314 = vadd.f32 %v2278, %v2282
    %v2315 = vmax.f32 %v2283, 0.0
    %v2316 = vmax.f32 %v2284, 0.0
    %v2317 = vmax.f32 %v2285, 0.0
    %v2318 = vmax.f32 %v2286, 0.0
    %v2319 = vmax.f32 %v2287, 0.0
    %v2320 = vmax.f32 %v2288, 0.0
    %v2321 = vmax.f32 %v2289, 0.0
    %v2322 = vmax.f32 %v2290, 0.0
    %v2323 = vmax.f32 %v2291, 0.0
    %v2324 = vmax.f32 %v2292, 0.0
    %v2325 = vmax.f32 %v2293, 0.0
    %v2326 = vmax.f32 %v2294, 0.0
    %v2327 = vmax.f32 %v2295, 0.0
    %v2328 = vmax.f32 %v2296, 0.0
    %v2329 = vmax.f32 %v2297, 0.0
    %v2330 = vmax.f32 %v2298, 0.0
    %v2331 = vmax.f32 %v2299, 0.0
    %v2332 = vmax.f32 %v2300, 0.0
    %v2333 = vmax.f32 %v2301, 0.0
    %v2334 = vmax.f32 %v2302, 0.0
    %v2335 = vmax.f32 %v2303, 0.0
    %v2336 = vmax.f32 %v2304, 0.0
    %v2337 = vmax.f32 %v2305, 0.0
    %v2338 = vmax.f32 %v2306, 0.0
    %v2339 = vmax.f32 %v2307, 0.0
    %v2340 = vmax.f32 %v2308, 0.0
    %v2341 = vmax.f32 %v2309, 0.0
    %v2342 = vmax.f32 %v2310, 0.0
    %v2343 = vmax.f32 %v2311, 0.0
    %v2344 = vmax.f32 %v2312, 0.0
    %v2345 = vmax.f32 %v2313, 0.0
    %v2346 = vmax.f32 %v2314, 0.0
    %v2347 = vld [vmem:[%s2 + $0x120] sm:$0xf]
    %v2348 = vld [vmem:[%s2 + $0x124] sm:$0xf]
    %v2349 = vld [vmem:[%s2 + $0x128] sm:$0xf]
    %v2350 = vld [vmem:[%s2 + $0x12c] sm:$0xf]
    %v2351 = vld [vmem:[%s2 + $0x130] sm:$0xf]
    %v2352 = vld [vmem:[%s2 + $0x134] sm:$0xf]
    %v2353 = vld [vmem:[%s2 + $0x138] sm:$0xf]
    %v2354 = vld [vmem:[%s2 + $0x13c] sm:$0xf]
    %v2355 = vld [vmem:[%s2 + $0x140] sm:$0xf]
    %v2356 = vld [vmem:[%s2 + $0x144] sm:$0xf]
    %v2357 = vld [vmem:[%s2 + $0x148] sm:$0xf]
    %v2358 = vld [vmem:[%s2 + $0x14c] sm:$0xf]
    %v2359 = vld [vmem:[%s2 + $0x150] sm:$0xf]
    %v2360 = vld [vmem:[%s2 + $0x154] sm:$0xf]
    %v2361 = vld [vmem:[%s2 + $0x158] sm:$0xf]
    %v2362 = vld [vmem:[%s2 + $0x15c] sm:$0xf]
    %v2363 = vpack.c.bf16 %v2316, %v2315
    %v2364 = vpack.c.bf16 %v2318, %v2317
    %v2365 = vpack.c.bf16 %v2320, %v2319
    %v2366 = vpack.c.bf16 %v2322, %v2321
    %v2367 = vpack.c.bf16 %v2324, %v2323
    %v2368 = vpack.c.bf16 %v2326, %v2325
    %v2369 = vpack.c.bf16 %v2328, %v2327
    %v2370 = vpack.c.bf16 %v2330, %v2329
    %v2371 = vpack.c.bf16 %v2332, %v2331
    %v2372 = vpack.c.bf16 %v2334, %v2333
    %v2373 = vpack.c.bf16 %v2336, %v2335
    %v2374 = vpack.c.bf16 %v2338, %v2337
    %v2375 = vpack.c.bf16 %v2340, %v2339
    %v2376 = vpack.c.bf16 %v2342, %v2341
    %v2377 = vpack.c.bf16 %v2344, %v2343
    %v2378 = vpack.c.bf16 %v2346, %v2345
    %v2395 = vunpack.c.l.b16 %v2347
    %v2396 = vunpack.c.l.b16 %v2348
    %v2397 = vunpack.c.l.b16 %v2349
    %v2398 = vunpack.c.l.b16 %v2350
    %v2399 = vunpack.c.l.b16 %v2351
    %v2400 = vunpack.c.l.b16 %v2352
    %v2401 = vunpack.c.l.b16 %v2353
    %v2402 = vunpack.c.l.b16 %v2354
    %v2403 = vunpack.c.l.b16 %v2355
    %v2404 = vunpack.c.l.b16 %v2356
    %v2405 = vunpack.c.l.b16 %v2357
    %v2406 = vunpack.c.l.b16 %v2358
    %v2407 = vunpack.c.l.b16 %v2359
    %v2408 = vunpack.c.l.b16 %v2360
    %v2409 = vunpack.c.l.b16 %v2361
    %v2410 = vunpack.c.l.b16 %v2362
    %v2411 = vpack.c.b16 %v2396, %v2395
    %v2412 = vpack.c.b16 %v2398, %v2397
    %v2413 = vpack.c.b16 %v2400, %v2399
    %v2414 = vpack.c.b16 %v2402, %v2401
    %v2415 = vpack.c.b16 %v2404, %v2403
    %v2416 = vpack.c.b16 %v2406, %v2405
    %v2417 = vpack.c.b16 %v2408, %v2407
    %v2418 = vpack.c.b16 %v2410, %v2409
    %2427 = vmatprep.subr.bf16.mxu0 0
    %2428 = vmatpush1.bf16.msra.mxu0 %v2411
    %2429 = vmatprep.subr.bf16.mxu0 0
    %2430 = vmatpush1.bf16.msra.mxu0 %v2412
    %2431 = vmatprep.subr.bf16.mxu0 0
    %2432 = vmatpush1.bf16.msra.mxu0 %v2413
    %2433 = vmatprep.subr.bf16.mxu0 0
    %2434 = vmatpush1.bf16.msra.mxu0 %v2414
    %2435 = vmatprep.subr.bf16.mxu0 0
    %2436 = vmatpush1.bf16.msra.mxu0 %v2415
    %2437 = vmatprep.subr.bf16.mxu0 0
    %2438 = vmatpush1.bf16.msra.mxu0 %v2416
    %2439 = vmatprep.subr.bf16.mxu0 0
    %2440 = vmatpush1.bf16.msra.mxu0 %v2417
    %2441 = vmatprep.subr.bf16.mxu0 0
    %2442 = vmatpush1.bf16.msra.mxu0 %v2418
    %2443 = vmatprep.subr.bf16.mxu0 0
    %2444 = vmatpush1.bf16.msra.mxu0 0
    %2445 = vmatprep.subr.bf16.mxu0 0
    %2446 = vmatpush1.bf16.msra.mxu0 0
    %2447 = vmatprep.subr.bf16.mxu0 0
    %2448 = vmatpush1.bf16.msra.mxu0 0
    %2449 = vmatprep.subr.bf16.mxu0 0
    %2450 = vmatpush1.bf16.msra.mxu0 0
    %2451 = vmatprep.subr.bf16.mxu0 0
    %2452 = vmatpush1.bf16.msra.mxu0 0
    %2453 = vmatprep.subr.bf16.mxu0 0
    %2454 = vmatpush1.bf16.msra.mxu0 0
    %2455 = vmatprep.subr.bf16.mxu0 0
    %2456 = vmatpush1.bf16.msra.mxu0 0
    %2457 = vmatprep.subr.bf16.mxu0 0
    %2458 = vmatpush1.bf16.msra.mxu0 0
    %2459 = vmatprep.mubr.bf16.mxu0 0
    %2460 = vmatmul.mubr.bf16.gmra.mrb[0].mxu0 %v2363
    %v2461 = vpop.f32.mrb[0].mxu0
    %v2462 = vadd.f32 0.0, %v2461
    %v2463 = vpop.f32.mrb[0].mxu0
    %v2464 = vpop.f32.mrb[0].mxu0
    %v2465 = vadd.f32 0.0, %v2464
    %v2466 = vpop.f32.mrb[0].mxu0
    %2467 = vmatprep.mubr.bf16.mxu0 0
    %2468 = vmatmul.mubr.bf16.gmra.mrb[0].mxu0 %v2364
    %v2469 = vpop.f32.mrb[0].mxu0
    %v2470 = vadd.f32 0.0, %v2469
    %v2471 = vpop.f32.mrb[0].mxu0
    %v2472 = vpop.f32.mrb[0].mxu0
    %v2473 = vadd.f32 0.0, %v2472
    %v2474 = vpop.f32.mrb[0].mxu0
    %2475 = vmatprep.mubr.bf16.mxu0 0
    %2476 = vmatmul.mubr.bf16.gmra.mrb[0].mxu0 %v2365
    %v2477 = vpop.f32.mrb[0].mxu0
    %v2478 = vadd.f32 0.0, %v2477
    %v2479 = vpop.f32.mrb[0].mxu0
    %v2480 = vpop.f32.mrb[0].mxu0
    %v2481 = vadd.f32 0.0, %v2480
    %v2482 = vpop.f32.mrb[0].mxu0
    %2483 = vmatprep.mubr.bf16.mxu0 0
    %2484 = vmatmul.mubr.bf16.gmra.mrb[0].mxu0 %v2366
    %v2485 = vpop.f32.mrb[0].mxu0
    %v2486 = vadd.f32 0.0, %v2485
    %v2487 = vpop.f32.mrb[0].mxu0
    %v2488 = vpop.f32.mrb[0].mxu0
    %v2489 = vadd.f32 0.0, %v2488
    %v2490 = vpop.f32.mrb[0].mxu0
    %2491 = vmatprep.mubr.bf16.mxu0 0
    %2492 = vmatmul.mubr.bf16.gmra.mrb[0].mxu0 %v2367
    %v2493 = vpop.f32.mrb[0].mxu0
    %v2494 = vadd.f32 0.0, %v2493
    %v2495 = vpop.f32.mrb[0].mxu0
    %v2496 = vpop.f32.mrb[0].mxu0
    %v2497 = vadd.f32 0.0, %v2496
    %v2498 = vpop.f32.mrb[0].mxu0
    %2499 = vmatprep.mubr.bf16.mxu0 0
    %2500 = vmatmul.mubr.bf16.gmra.mrb[0].mxu0 %v2368
    %v2501 = vpop.f32.mrb[0].mxu0
    %v2502 = vadd.f32 0.0, %v2501
    %v2503 = vpop.f32.mrb[0].mxu0
    %v2504 = vpop.f32.mrb[0].mxu0
    %v2505 = vadd.f32 0.0, %v2504
    %v2506 = vpop.f32.mrb[0].mxu0
    %2507 = vmatprep.mubr.bf16.mxu0 0
    %2508 = vmatmul.mubr.bf16.gmra.mrb[0].mxu0 %v2369
    %v2509 = vpop.f32.mrb[0].mxu0
    %v2510 = vadd.f32 0.0, %v2509
    %v2511 = vpop.f32.mrb[0].mxu0
    %v2512 = vpop.f32.mrb[0].mxu0
    %v2513 = vadd.f32 0.0, %v2512
    %v2514 = vpop.f32.mrb[0].mxu0
    %2515 = vmatprep.mubr.bf16.mxu0 0
    %2516 = vmatmul.mubr.bf16.gmra.mrb[0].mxu0 %v2370
    %v2517 = vpop.f32.mrb[0].mxu0
    %v2518 = vadd.f32 0.0, %v2517
    %v2519 = vpop.f32.mrb[0].mxu0
    %v2520 = vpop.f32.mrb[0].mxu0
    %v2521 = vadd.f32 0.0, %v2520
    %v2522 = vpop.f32.mrb[0].mxu0
    %2523 = vmatprep.mubr.bf16.mxu0 0
    %2524 = vmatmul.mubr.bf16.gmra.mrb[0].mxu0 %v2371
    %v2525 = vpop.f32.mrb[0].mxu0
    %v2526 = vadd.f32 0.0, %v2525
    %v2527 = vpop.f32.mrb[0].mxu0
    %v2528 = vpop.f32.mrb[0].mxu0
    %v2529 = vadd.f32 0.0, %v2528
    %v2530 = vpop.f32.mrb[0].mxu0
    %2531 = vmatprep.mubr.bf16.mxu0 0
    %2532 = vmatmul.mubr.bf16.gmra.mrb[0].mxu0 %v2372
    %v2533 = vpop.f32.mrb[0].mxu0
    %v2534 = vadd.f32 0.0, %v2533
    %v2535 = vpop.f32.mrb[0].mxu0
    %v2536 = vpop.f32.mrb[0].mxu0
    %v2537 = vadd.f32 0.0, %v2536
    %v2538 = vpop.f32.mrb[0].mxu0
    %2539 = vmatprep.mubr.bf16.mxu0 0
    %2540 = vmatmul.mubr.bf16.gmra.mrb[0].mxu0 %v2373
    %v2541 = vpop.f32.mrb[0].mxu0
    %v2542 = vadd.f32 0.0, %v2541
    %v2543 = vpop.f32.mrb[0].mxu0
    %v2544 = vpop.f32.mrb[0].mxu0
    %v2545 = vadd.f32 0.0, %v2544
    %v2546 = vpop.f32.mrb[0].mxu0
    %2547 = vmatprep.mubr.bf16.mxu0 0
    %2548 = vmatmul.mubr.bf16.gmra.mrb[0].mxu0 %v2374
    %v2549 = vpop.f32.mrb[0].mxu0
    %v2550 = vadd.f32 0.0, %v2549
    %v2551 = vpop.f32.mrb[0].mxu0
    %v2552 = vpop.f32.mrb[0].mxu0
    %v2553 = vadd.f32 0.0, %v2552
    %v2554 = vpop.f32.mrb[0].mxu0
    %2555 = vmatprep.mubr.bf16.mxu0 0
    %2556 = vmatmul.mubr.bf16.gmra.mrb[0].mxu0 %v2375
    %v2557 = vpop.f32.mrb[0].mxu0
    %v2558 = vadd.f32 0.0, %v2557
    %v2559 = vpop.f32.mrb[0].mxu0
    %v2560 = vpop.f32.mrb[0].mxu0
    %v2561 = vadd.f32 0.0, %v2560
    %v2562 = vpop.f32.mrb[0].mxu0
    %2563 = vmatprep.mubr.bf16.mxu0 0
    %2564 = vmatmul.mubr.bf16.gmra.mrb[0].mxu0 %v2376
    %v2565 = vpop.f32.mrb[0].mxu0
    %v2566 = vadd.f32 0.0, %v2565
    %v2567 = vpop.f32.mrb[0].mxu0
    %v2568 = vpop.f32.mrb[0].mxu0
    %v2569 = vadd.f32 0.0, %v2568
    %v2570 = vpop.f32.mrb[0].mxu0
    %2571 = vmatprep.mubr.bf16.mxu0 0
    %2572 = vmatmul.mubr.bf16.gmra.mrb[0].mxu0 %v2377
    %v2573 = vpop.f32.mrb[0].mxu0
    %v2574 = vadd.f32 0.0, %v2573
    %v2575 = vpop.f32.mrb[0].mxu0
    %v2576 = vpop.f32.mrb[0].mxu0
    %v2577 = vadd.f32 0.0, %v2576
    %v2578 = vpop.f32.mrb[0].mxu0
    %2579 = vmatprep.mubr.bf16.mxu0 0
    %2580 = vmatmul.mubr.bf16.gmra.mrb[0].mxu0 %v2378
    %v2581 = vpop.f32.mrb[0].mxu0
    %v2582 = vadd.f32 0.0, %v2581
    %v2583 = vpop.f32.mrb[0].mxu0
    %v2584 = vpop.f32.mrb[0].mxu0
    %v2585 = vadd.f32 0.0, %v2584
    %v2586 = vpop.f32.mrb[0].mxu0
    %2587 = vdwg.mxu0
    %v2588 = vld [vmem:[%s3 + $0x6] sm:$0x1]
    %v2589 = vld [vmem:[%s3 + $0x7] sm:$0x1]
    %v2590 = vadd.f32 %v2462, %v2465
    %v2591 = vadd.f32 %v2590, %v2470
    %v2592 = vadd.f32 %v2591, %v2473
    %v2593 = vadd.f32 %v2592, %v2478
    %v2594 = vadd.f32 %v2593, %v2481
    %v2595 = vadd.f32 %v2594, %v2486
    %v2596 = vadd.f32 %v2595, %v2489
    %v2597 = vadd.f32 %v2596, %v2494
    %v2598 = vadd.f32 %v2597, %v2497
    %v2599 = vadd.f32 %v2598, %v2502
    %v2600 = vadd.f32 %v2599, %v2505
    %v2601 = vadd.f32 %v2600, %v2510
    %v2602 = vadd.f32 %v2601, %v2513
    %v2603 = vadd.f32 %v2602, %v2518
    %v2604 = vadd.f32 %v2603, %v2521
    %v2605 = vadd.f32 %v2604, %v2526
    %v2606 = vadd.f32 %v2605, %v2529
    %v2607 = vadd.f32 %v2606, %v2534
    %v2608 = vadd.f32 %v2607, %v2537
    %v2609 = vadd.f32 %v2608, %v2542
    %v2610 = vadd.f32 %v2609, %v2545
    %v2611 = vadd.f32 %v2610, %v2550
    %v2612 = vadd.f32 %v2611, %v2553
    %v2613 = vadd.f32 %v2612, %v2558
    %v2614 = vadd.f32 %v2613, %v2561
    %v2615 = vadd.f32 %v2614, %v2566
    %v2616 = vadd.f32 %v2615, %v2569
    %v2617 = vadd.f32 %v2616, %v2574
    %v2618 = vadd.f32 %v2617, %v2577
    %v2619 = vadd.f32 %v2618, %v2582
    %v2620 = vadd.f32 %v2619, %v2585
    %v2621 = vrot.slane %v2620, 4
    %v2622 = vadd.f32 %v2620, %v2621
    %v2623 = vrot.slane %v2622, 2
    %v2624 = vadd.f32 %v2622, %v2623
    %v2625 = vrot.slane %v2624, 1
    %v2626 = vadd.f32 %v2624, %v2625
    %v2627 = vmul.f32 %v2626, %v541
    %v2628 = vsub.f32 %v2462, %v2627
    %v2629 = vsub.f32 %v2465, %v2627
    %v2630 = vsub.f32 %v2470, %v2627
    %v2631 = vsub.f32 %v2473, %v2627
    %v2632 = vsub.f32 %v2478, %v2627
    %v2633 = vsub.f32 %v2481, %v2627
    %v2634 = vsub.f32 %v2486, %v2627
    %v2635 = vsub.f32 %v2489, %v2627
    %v2636 = vsub.f32 %v2494, %v2627
    %v2637 = vsub.f32 %v2497, %v2627
    %v2638 = vsub.f32 %v2502, %v2627
    %v2639 = vsub.f32 %v2505, %v2627
    %v2640 = vsub.f32 %v2510, %v2627
    %v2641 = vsub.f32 %v2513, %v2627
    %v2642 = vsub.f32 %v2518, %v2627
    %v2643 = vsub.f32 %v2521, %v2627
    %v2644 = vsub.f32 %v2526, %v2627
    %v2645 = vsub.f32 %v2529, %v2627
    %v2646 = vsub.f32 %v2534, %v2627
    %v2647 = vsub.f32 %v2537, %v2627
    %v2648 = vsub.f32 %v2542, %v2627
    %v2649 = vsub.f32 %v2545, %v2627
    %v2650 = vsub.f32 %v2550, %v2627
    %v2651 = vsub.f32 %v2553, %v2627
    %v2652 = vsub.f32 %v2558, %v2627
    %v2653 = vsub.f32 %v2561, %v2627
    %v2654 = vsub.f32 %v2566, %v2627
    %v2655 = vsub.f32 %v2569, %v2627
    %v2656 = vsub.f32 %v2574, %v2627
    %v2657 = vsub.f32 %v2577, %v2627
    %v2658 = vsub.f32 %v2582, %v2627
    %v2659 = vsub.f32 %v2585, %v2627
    %v2660 = vmul.f32 %v2628, %v2628
    %v2661 = vmul.f32 %v2629, %v2629
    %v2662 = vmul.f32 %v2630, %v2630
    %v2663 = vmul.f32 %v2631, %v2631
    %v2664 = vmul.f32 %v2632, %v2632
    %v2665 = vmul.f32 %v2633, %v2633
    %v2666 = vmul.f32 %v2634, %v2634
    %v2667 = vmul.f32 %v2635, %v2635
    %v2668 = vmul.f32 %v2636, %v2636
    %v2669 = vmul.f32 %v2637, %v2637
    %v2670 = vmul.f32 %v2638, %v2638
    %v2671 = vmul.f32 %v2639, %v2639
    %v2672 = vmul.f32 %v2640, %v2640
    %v2673 = vmul.f32 %v2641, %v2641
    %v2674 = vmul.f32 %v2642, %v2642
    %v2675 = vmul.f32 %v2643, %v2643
    %v2676 = vmul.f32 %v2644, %v2644
    %v2677 = vmul.f32 %v2645, %v2645
    %v2678 = vmul.f32 %v2646, %v2646
    %v2679 = vmul.f32 %v2647, %v2647
    %v2680 = vmul.f32 %v2648, %v2648
    %v2681 = vmul.f32 %v2649, %v2649
    %v2682 = vmul.f32 %v2650, %v2650
    %v2683 = vmul.f32 %v2651, %v2651
    %v2684 = vmul.f32 %v2652, %v2652
    %v2685 = vmul.f32 %v2653, %v2653
    %v2686 = vmul.f32 %v2654, %v2654
    %v2687 = vmul.f32 %v2655, %v2655
    %v2688 = vmul.f32 %v2656, %v2656
    %v2689 = vmul.f32 %v2657, %v2657
    %v2690 = vmul.f32 %v2658, %v2658
    %v2691 = vmul.f32 %v2659, %v2659
    %v2692 = vadd.f32 %v2660, %v2661
    %v2693 = vadd.f32 %v2692, %v2662
    %v2694 = vadd.f32 %v2693, %v2663
    %v2695 = vadd.f32 %v2694, %v2664
    %v2696 = vadd.f32 %v2695, %v2665
    %v2697 = vadd.f32 %v2696, %v2666
    %v2698 = vadd.f32 %v2697, %v2667
    %v2699 = vadd.f32 %v2698, %v2668
    %v2700 = vadd.f32 %v2699, %v2669
    %v2701 = vadd.f32 %v2700, %v2670
    %v2702 = vadd.f32 %v2701, %v2671
    %v2703 = vadd.f32 %v2702, %v2672
    %v2704 = vadd.f32 %v2703, %v2673
    %v2705 = vadd.f32 %v2704, %v2674
    %v2706 = vadd.f32 %v2705, %v2675
    %v2707 = vadd.f32 %v2706, %v2676
    %v2708 = vadd.f32 %v2707, %v2677
    %v2709 = vadd.f32 %v2708, %v2678
    %v2710 = vadd.f32 %v2709, %v2679
    %v2711 = vadd.f32 %v2710, %v2680
    %v2712 = vadd.f32 %v2711, %v2681
    %v2713 = vadd.f32 %v2712, %v2682
    %v2714 = vadd.f32 %v2713, %v2683
    %v2715 = vadd.f32 %v2714, %v2684
    %v2716 = vadd.f32 %v2715, %v2685
    %v2717 = vadd.f32 %v2716, %v2686
    %v2718 = vadd.f32 %v2717, %v2687
    %v2719 = vadd.f32 %v2718, %v2688
    %v2720 = vadd.f32 %v2719, %v2689
    %v2721 = vadd.f32 %v2720, %v2690
    %v2722 = vadd.f32 %v2721, %v2691
    %v2723 = vrot.slane %v2722, 4
    %v2724 = vadd.f32 %v2722, %v2723
    %v2725 = vrot.slane %v2724, 2
    %v2726 = vadd.f32 %v2724, %v2725
    %v2727 = vrot.slane %v2726, 1
    %v2728 = vadd.f32 %v2726, %v2727
    %v2729 = vmul.f32 %v2728, %v541
    %v2730 = vadd.f32 %v2729, 1e-05
    %v2731 = vrsqrt.pop %v2730
    %v2732 = vmul.f32 %v2588, %v2731
    %v2733 = vlaneseq
    %v2734 = vshrl.u32 %v2733, 7
    %v2735 = vsub.s32 0, %v2734
    %v2736 = vrot.slane %v2732, %v2735
    %v2737 = vmul.f32 %v2628, %v2736
    %v2738 = vmul.f32 %v2629, %v2736
    %v2739 = vmul.f32 %v2630, %v2736
    %v2740 = vmul.f32 %v2631, %v2736
    %v2741 = vmul.f32 %v2632, %v2736
    %v2742 = vmul.f32 %v2633, %v2736
    %v2743 = vmul.f32 %v2634, %v2736
    %v2744 = vmul.f32 %v2635, %v2736
    %v2745 = vmul.f32 %v2636, %v2736
    %v2746 = vmul.f32 %v2637, %v2736
    %v2747 = vmul.f32 %v2638, %v2736
    %v2748 = vmul.f32 %v2639, %v2736
    %v2749 = vmul.f32 %v2640, %v2736
    %v2750 = vmul.f32 %v2641, %v2736
    %v2751 = vmul.f32 %v2642, %v2736
    %v2752 = vmul.f32 %v2643, %v2736
    %v2753 = vmul.f32 %v2644, %v2736
    %v2754 = vmul.f32 %v2645, %v2736
    %v2755 = vmul.f32 %v2646, %v2736
    %v2756 = vmul.f32 %v2647, %v2736
    %v2757 = vmul.f32 %v2648, %v2736
    %v2758 = vmul.f32 %v2649, %v2736
    %v2759 = vmul.f32 %v2650, %v2736
    %v2760 = vmul.f32 %v2651, %v2736
    %v2761 = vmul.f32 %v2652, %v2736
    %v2762 = vmul.f32 %v2653, %v2736
    %v2763 = vmul.f32 %v2654, %v2736
    %v2764 = vmul.f32 %v2655, %v2736
    %v2765 = vmul.f32 %v2656, %v2736
    %v2766 = vmul.f32 %v2657, %v2736
    %v2767 = vmul.f32 %v2658, %v2736
    %v2768 = vmul.f32 %v2659, %v2736
    %v2769 = vlaneseq
    %v2770 = vshrl.u32 %v2769, 7
    %v2771 = vsub.s32 0, %v2770
    %v2772 = vrot.slane %v2589, %v2771
    %v2773 = vadd.f32 %v2737, %v2772
    %v2774 = vadd.f32 %v2738, %v2772
    %v2775 = vadd.f32 %v2739, %v2772
    %v2776 = vadd.f32 %v2740, %v2772
    %v2777 = vadd.f32 %v2741, %v2772
    %v2778 = vadd.f32 %v2742, %v2772
    %v2779 = vadd.f32 %v2743, %v2772
    %v2780 = vadd.f32 %v2744, %v2772
    %v2781 = vadd.f32 %v2745, %v2772
    %v2782 = vadd.f32 %v2746, %v2772
    %v2783 = vadd.f32 %v2747, %v2772
    %v2784 = vadd.f32 %v2748, %v2772
    %v2785 = vadd.f32 %v2749, %v2772
    %v2786 = vadd.f32 %v2750, %v2772
    %v2787 = vadd.f32 %v2751, %v2772
    %v2788 = vadd.f32 %v2752, %v2772
    %v2789 = vadd.f32 %v2753, %v2772
    %v2790 = vadd.f32 %v2754, %v2772
    %v2791 = vadd.f32 %v2755, %v2772
    %v2792 = vadd.f32 %v2756, %v2772
    %v2793 = vadd.f32 %v2757, %v2772
    %v2794 = vadd.f32 %v2758, %v2772
    %v2795 = vadd.f32 %v2759, %v2772
    %v2796 = vadd.f32 %v2760, %v2772
    %v2797 = vadd.f32 %v2761, %v2772
    %v2798 = vadd.f32 %v2762, %v2772
    %v2799 = vadd.f32 %v2763, %v2772
    %v2800 = vadd.f32 %v2764, %v2772
    %v2801 = vadd.f32 %v2765, %v2772
    %v2802 = vadd.f32 %v2766, %v2772
    %v2803 = vadd.f32 %v2767, %v2772
    %v2804 = vadd.f32 %v2768, %v2772
    %v2805 = vmax.f32 %v2773, 0.0
    %v2806 = vmax.f32 %v2774, 0.0
    %v2807 = vmax.f32 %v2775, 0.0
    %v2808 = vmax.f32 %v2776, 0.0
    %v2809 = vmax.f32 %v2777, 0.0
    %v2810 = vmax.f32 %v2778, 0.0
    %v2811 = vmax.f32 %v2779, 0.0
    %v2812 = vmax.f32 %v2780, 0.0
    %v2813 = vmax.f32 %v2781, 0.0
    %v2814 = vmax.f32 %v2782, 0.0
    %v2815 = vmax.f32 %v2783, 0.0
    %v2816 = vmax.f32 %v2784, 0.0
    %v2817 = vmax.f32 %v2785, 0.0
    %v2818 = vmax.f32 %v2786, 0.0
    %v2819 = vmax.f32 %v2787, 0.0
    %v2820 = vmax.f32 %v2788, 0.0
    %v2821 = vmax.f32 %v2789, 0.0
    %v2822 = vmax.f32 %v2790, 0.0
    %v2823 = vmax.f32 %v2791, 0.0
    %v2824 = vmax.f32 %v2792, 0.0
    %v2825 = vmax.f32 %v2793, 0.0
    %v2826 = vmax.f32 %v2794, 0.0
    %v2827 = vmax.f32 %v2795, 0.0
    %v2828 = vmax.f32 %v2796, 0.0
    %v2829 = vmax.f32 %v2797, 0.0
    %v2830 = vmax.f32 %v2798, 0.0
    %v2831 = vmax.f32 %v2799, 0.0
    %v2832 = vmax.f32 %v2800, 0.0
    %v2833 = vmax.f32 %v2801, 0.0
    %v2834 = vmax.f32 %v2802, 0.0
    %v2835 = vmax.f32 %v2803, 0.0
    %v2836 = vmax.f32 %v2804, 0.0
    %v2837 = vpack.c.bf16 %v2806, %v2805
    %v2838 = vpack.c.bf16 %v2808, %v2807
    %v2839 = vpack.c.bf16 %v2810, %v2809
    %v2840 = vpack.c.bf16 %v2812, %v2811
    %v2841 = vpack.c.bf16 %v2814, %v2813
    %v2842 = vpack.c.bf16 %v2816, %v2815
    %v2843 = vpack.c.bf16 %v2818, %v2817
    %v2844 = vpack.c.bf16 %v2820, %v2819
    %v2845 = vpack.c.bf16 %v2822, %v2821
    %v2846 = vpack.c.bf16 %v2824, %v2823
    %v2847 = vpack.c.bf16 %v2826, %v2825
    %v2848 = vpack.c.bf16 %v2828, %v2827
    %v2849 = vpack.c.bf16 %v2830, %v2829
    %v2850 = vpack.c.bf16 %v2832, %v2831
    %v2851 = vpack.c.bf16 %v2834, %v2833
    %v2852 = vpack.c.bf16 %v2836, %v2835
    %v2853 = vld [vmem:[%s2 + $0x160] sm:$0xf]
    %v2854 = vld [vmem:[%s2 + $0x164] sm:$0xf]
    %v2855 = vld [vmem:[%s2 + $0x168] sm:$0xf]
    %v2856 = vld [vmem:[%s2 + $0x16c] sm:$0xf]
    %v2857 = vld [vmem:[%s2 + $0x170] sm:$0xf]
    %v2858 = vld [vmem:[%s2 + $0x174] sm:$0xf]
    %v2859 = vld [vmem:[%s2 + $0x178] sm:$0xf]
    %v2860 = vld [vmem:[%s2 + $0x17c] sm:$0xf]
    %v2861 = vld [vmem:[%s2 + $0x180] sm:$0xf]
    %v2862 = vld [vmem:[%s2 + $0x184] sm:$0xf]
    %v2863 = vld [vmem:[%s2 + $0x188] sm:$0xf]
    %v2864 = vld [vmem:[%s2 + $0x18c] sm:$0xf]
    %v2865 = vld [vmem:[%s2 + $0x190] sm:$0xf]
    %v2866 = vld [vmem:[%s2 + $0x194] sm:$0xf]
    %v2867 = vld [vmem:[%s2 + $0x198] sm:$0xf]
    %v2868 = vld [vmem:[%s2 + $0x19c] sm:$0xf]
    %v2869 = vld [vmem:[%s3 + $0x9] sm:$0x1]
    %v2870 = vlaneseq
    %v2871 = vshrl.u32 %v2870, 7
    %v2872 = vsub.s32 0, %v2871
    %v2873 = vrot.slane %v2869, %v2872
    %v2890 = vunpack.c.l.b16 %v2853
    %v2891 = vunpack.c.l.b16 %v2854
    %v2892 = vunpack.c.l.b16 %v2855
    %v2893 = vunpack.c.l.b16 %v2856
    %v2894 = vunpack.c.l.b16 %v2857
    %v2895 = vunpack.c.l.b16 %v2858
    %v2896 = vunpack.c.l.b16 %v2859
    %v2897 = vunpack.c.l.b16 %v2860
    %v2898 = vunpack.c.l.b16 %v2861
    %v2899 = vunpack.c.l.b16 %v2862
    %v2900 = vunpack.c.l.b16 %v2863
    %v2901 = vunpack.c.l.b16 %v2864
    %v2902 = vunpack.c.l.b16 %v2865
    %v2903 = vunpack.c.l.b16 %v2866
    %v2904 = vunpack.c.l.b16 %v2867
    %v2905 = vunpack.c.l.b16 %v2868
    %v2906 = vpack.c.b16 %v2891, %v2890
    %v2907 = vpack.c.b16 %v2893, %v2892
    %v2908 = vpack.c.b16 %v2895, %v2894
    %v2909 = vpack.c.b16 %v2897, %v2896
    %v2910 = vpack.c.b16 %v2899, %v2898
    %v2911 = vpack.c.b16 %v2901, %v2900
    %v2912 = vpack.c.b16 %v2903, %v2902
    %v2913 = vpack.c.b16 %v2905, %v2904
    %2922 = vmatprep.subr.bf16.mxu0 0
    %2923 = vmatpush1.bf16.msra.mxu0 %v2906
    %2924 = vmatprep.subr.bf16.mxu0 0
    %2925 = vmatpush1.bf16.msra.mxu0 %v2907
    %2926 = vmatprep.subr.bf16.mxu0 0
    %2927 = vmatpush1.bf16.msra.mxu0 %v2908
    %2928 = vmatprep.subr.bf16.mxu0 0
    %2929 = vmatpush1.bf16.msra.mxu0 %v2909
    %2930 = vmatprep.subr.bf16.mxu0 0
    %2931 = vmatpush1.bf16.msra.mxu0 %v2910
    %2932 = vmatprep.subr.bf16.mxu0 0
    %2933 = vmatpush1.bf16.msra.mxu0 %v2911
    %2934 = vmatprep.subr.bf16.mxu0 0
    %2935 = vmatpush1.bf16.msra.mxu0 %v2912
    %2936 = vmatprep.subr.bf16.mxu0 0
    %2937 = vmatpush1.bf16.msra.mxu0 %v2913
    %2938 = vmatprep.subr.bf16.mxu0 0
    %2939 = vmatpush1.bf16.msra.mxu0 0
    %2940 = vmatprep.subr.bf16.mxu0 0
    %2941 = vmatpush1.bf16.msra.mxu0 0
    %2942 = vmatprep.subr.bf16.mxu0 0
    %2943 = vmatpush1.bf16.msra.mxu0 0
    %2944 = vmatprep.subr.bf16.mxu0 0
    %2945 = vmatpush1.bf16.msra.mxu0 0
    %2946 = vmatprep.subr.bf16.mxu0 0
    %2947 = vmatpush1.bf16.msra.mxu0 0
    %2948 = vmatprep.subr.bf16.mxu0 0
    %2949 = vmatpush1.bf16.msra.mxu0 0
    %2950 = vmatprep.subr.bf16.mxu0 0
    %2951 = vmatpush1.bf16.msra.mxu0 0
    %2952 = vmatprep.subr.bf16.mxu0 0
    %2953 = vmatpush1.bf16.msra.mxu0 0
    %2954 = vmatprep.mubr.bf16.mxu0 0
    %2955 = vmatmul.mubr.bf16.gmra.mrb[0].mxu0 %v2837
    %v2956 = vpop.f32.mrb[0].mxu0
    %v2957 = vadd.f32 %v2873, %v2956
    %v2958 = vpop.f32.mrb[0].mxu0
    %v2959 = vpop.f32.mrb[0].mxu0
    %v2960 = vadd.f32 %v2873, %v2959
    %v2961 = vpop.f32.mrb[0].mxu0
    %2962 = vmatprep.mubr.bf16.mxu0 0
    %2963 = vmatmul.mubr.bf16.gmra.mrb[0].mxu0 %v2838
    %v2964 = vpop.f32.mrb[0].mxu0
    %v2965 = vadd.f32 %v2873, %v2964
    %v2966 = vpop.f32.mrb[0].mxu0
    %v2967 = vpop.f32.mrb[0].mxu0
    %v2968 = vadd.f32 %v2873, %v2967
    %v2969 = vpop.f32.mrb[0].mxu0
    %2970 = vmatprep.mubr.bf16.mxu0 0
    %2971 = vmatmul.mubr.bf16.gmra.mrb[0].mxu0 %v2839
    %v2972 = vpop.f32.mrb[0].mxu0
    %v2973 = vadd.f32 %v2873, %v2972
    %v2974 = vpop.f32.mrb[0].mxu0
    %v2975 = vpop.f32.mrb[0].mxu0
    %v2976 = vadd.f32 %v2873, %v2975
    %v2977 = vpop.f32.mrb[0].mxu0
    %2978 = vmatprep.mubr.bf16.mxu0 0
    %2979 = vmatmul.mubr.bf16.gmra.mrb[0].mxu0 %v2840
    %v2980 = vpop.f32.mrb[0].mxu0
    %v2981 = vadd.f32 %v2873, %v2980
    %v2982 = vpop.f32.mrb[0].mxu0
    %v2983 = vpop.f32.mrb[0].mxu0
    %v2984 = vadd.f32 %v2873, %v2983
    %v2985 = vpop.f32.mrb[0].mxu0
    %2986 = vmatprep.mubr.bf16.mxu0 0
    %2987 = vmatmul.mubr.bf16.gmra.mrb[0].mxu0 %v2841
    %v2988 = vpop.f32.mrb[0].mxu0
    %v2989 = vadd.f32 %v2873, %v2988
    %v2990 = vpop.f32.mrb[0].mxu0
    %v2991 = vpop.f32.mrb[0].mxu0
    %v2992 = vadd.f32 %v2873, %v2991
    %v2993 = vpop.f32.mrb[0].mxu0
    %2994 = vmatprep.mubr.bf16.mxu0 0
    %2995 = vmatmul.mubr.bf16.gmra.mrb[0].mxu0 %v2842
    %v2996 = vpop.f32.mrb[0].mxu0
    %v2997 = vadd.f32 %v2873, %v2996
    %v2998 = vpop.f32.mrb[0].mxu0
    %v2999 = vpop.f32.mrb[0].mxu0
    %v3000 = vadd.f32 %v2873, %v2999
    %v3001 = vpop.f32.mrb[0].mxu0
    %3002 = vmatprep.mubr.bf16.mxu0 0
    %3003 = vmatmul.mubr.bf16.gmra.mrb[0].mxu0 %v2843
    %v3004 = vpop.f32.mrb[0].mxu0
    %v3005 = vadd.f32 %v2873, %v3004
    %v3006 = vpop.f32.mrb[0].mxu0
    %v3007 = vpop.f32.mrb[0].mxu0
    %v3008 = vadd.f32 %v2873, %v3007
    %v3009 = vpop.f32.mrb[0].mxu0
    %3010 = vmatprep.mubr.bf16.mxu0 0
    %3011 = vmatmul.mubr.bf16.gmra.mrb[0].mxu0 %v2844
    %v3012 = vpop.f32.mrb[0].mxu0
    %v3013 = vadd.f32 %v2873, %v3012
    %v3014 = vpop.f32.mrb[0].mxu0
    %v3015 = vpop.f32.mrb[0].mxu0
    %v3016 = vadd.f32 %v2873, %v3015
    %v3017 = vpop.f32.mrb[0].mxu0
    %3018 = vmatprep.mubr.bf16.mxu0 0
    %3019 = vmatmul.mubr.bf16.gmra.mrb[0].mxu0 %v2845
    %v3020 = vpop.f32.mrb[0].mxu0
    %v3021 = vadd.f32 %v2873, %v3020
    %v3022 = vpop.f32.mrb[0].mxu0
    %v3023 = vpop.f32.mrb[0].mxu0
    %v3024 = vadd.f32 %v2873, %v3023
    %v3025 = vpop.f32.mrb[0].mxu0
    %3026 = vmatprep.mubr.bf16.mxu0 0
    %3027 = vmatmul.mubr.bf16.gmra.mrb[0].mxu0 %v2846
    %v3028 = vpop.f32.mrb[0].mxu0
    %v3029 = vadd.f32 %v2873, %v3028
    %v3030 = vpop.f32.mrb[0].mxu0
    %v3031 = vpop.f32.mrb[0].mxu0
    %v3032 = vadd.f32 %v2873, %v3031
    %v3033 = vpop.f32.mrb[0].mxu0
    %3034 = vmatprep.mubr.bf16.mxu0 0
    %3035 = vmatmul.mubr.bf16.gmra.mrb[0].mxu0 %v2847
    %v3036 = vpop.f32.mrb[0].mxu0
    %v3037 = vadd.f32 %v2873, %v3036
    %v3038 = vpop.f32.mrb[0].mxu0
    %v3039 = vpop.f32.mrb[0].mxu0
    %v3040 = vadd.f32 %v2873, %v3039
    %v3041 = vpop.f32.mrb[0].mxu0
    %3042 = vmatprep.mubr.bf16.mxu0 0
    %3043 = vmatmul.mubr.bf16.gmra.mrb[0].mxu0 %v2848
    %v3044 = vpop.f32.mrb[0].mxu0
    %v3045 = vadd.f32 %v2873, %v3044
    %v3046 = vpop.f32.mrb[0].mxu0
    %v3047 = vpop.f32.mrb[0].mxu0
    %v3048 = vadd.f32 %v2873, %v3047
    %v3049 = vpop.f32.mrb[0].mxu0
    %3050 = vmatprep.mubr.bf16.mxu0 0
    %3051 = vmatmul.mubr.bf16.gmra.mrb[0].mxu0 %v2849
    %v3052 = vpop.f32.mrb[0].mxu0
    %v3053 = vadd.f32 %v2873, %v3052
    %v3054 = vpop.f32.mrb[0].mxu0
    %v3055 = vpop.f32.mrb[0].mxu0
    %v3056 = vadd.f32 %v2873, %v3055
    %v3057 = vpop.f32.mrb[0].mxu0
    %3058 = vmatprep.mubr.bf16.mxu0 0
    %3059 = vmatmul.mubr.bf16.gmra.mrb[0].mxu0 %v2850
    %v3060 = vpop.f32.mrb[0].mxu0
    %v3061 = vadd.f32 %v2873, %v3060
    %v3062 = vpop.f32.mrb[0].mxu0
    %v3063 = vpop.f32.mrb[0].mxu0
    %v3064 = vadd.f32 %v2873, %v3063
    %v3065 = vpop.f32.mrb[0].mxu0
    %3066 = vmatprep.mubr.bf16.mxu0 0
    %3067 = vmatmul.mubr.bf16.gmra.mrb[0].mxu0 %v2851
    %v3068 = vpop.f32.mrb[0].mxu0
    %v3069 = vadd.f32 %v2873, %v3068
    %v3070 = vpop.f32.mrb[0].mxu0
    %v3071 = vpop.f32.mrb[0].mxu0
    %v3072 = vadd.f32 %v2873, %v3071
    %v3073 = vpop.f32.mrb[0].mxu0
    %3074 = vmatprep.mubr.bf16.mxu0 0
    %3075 = vmatmul.mubr.bf16.gmra.mrb[0].mxu0 %v2852
    %v3076 = vpop.f32.mrb[0].mxu0
    %v3077 = vadd.f32 %v2873, %v3076
    %v3078 = vpop.f32.mrb[0].mxu0
    %v3079 = vpop.f32.mrb[0].mxu0
    %v3080 = vadd.f32 %v2873, %v3079
    %v3081 = vpop.f32.mrb[0].mxu0
    %3082 = vdwg.mxu0
    %v3083 = vxor.u32 %v2957, 2147483648
    %v3084 = vxor.u32 %v2960, 2147483648
    %v3085 = vxor.u32 %v2965, 2147483648
    %v3086 = vxor.u32 %v2968, 2147483648
    %v3087 = vxor.u32 %v2973, 2147483648
    %v3088 = vxor.u32 %v2976, 2147483648
    %v3089 = vxor.u32 %v2981, 2147483648
    %v3090 = vxor.u32 %v2984, 2147483648
    %v3091 = vxor.u32 %v2989, 2147483648
    %v3092 = vxor.u32 %v2992, 2147483648
    %v3093 = vxor.u32 %v2997, 2147483648
    %v3094 = vxor.u32 %v3000, 2147483648
    %v3095 = vxor.u32 %v3005, 2147483648
    %v3096 = vxor.u32 %v3008, 2147483648
    %v3097 = vxor.u32 %v3013, 2147483648
    %v3098 = vxor.u32 %v3016, 2147483648
    %v3099 = vxor.u32 %v3021, 2147483648
    %v3100 = vxor.u32 %v3024, 2147483648
    %v3101 = vxor.u32 %v3029, 2147483648
    %v3102 = vxor.u32 %v3032, 2147483648
    %v3103 = vxor.u32 %v3037, 2147483648
    %v3104 = vxor.u32 %v3040, 2147483648
    %v3105 = vxor.u32 %v3045, 2147483648
    %v3106 = vxor.u32 %v3048, 2147483648
    %v3107 = vxor.u32 %v3053, 2147483648
    %v3108 = vxor.u32 %v3056, 2147483648
    %v3109 = vxor.u32 %v3061, 2147483648
    %v3110 = vxor.u32 %v3064, 2147483648
    %v3111 = vxor.u32 %v3069, 2147483648
    %v3112 = vxor.u32 %v3072, 2147483648
    %v3113 = vxor.u32 %v3077, 2147483648
    %v3114 = vxor.u32 %v3080, 2147483648
    %v3115 = vmul.f32 %v3083, 1.442695
    %v3116 = vpow.pop %v3115
    %v3117 = vmul.f32 %v3084, 1.442695
    %v3118 = vpow.pop %v3117
    %v3119 = vmul.f32 %v3085, 1.442695
    %v3120 = vpow.pop %v3119
    %v3121 = vmul.f32 %v3086, 1.442695
    %v3122 = vpow.pop %v3121
    %v3123 = vmul.f32 %v3087, 1.442695
    %v3124 = vpow.pop %v3123
    %v3125 = vmul.f32 %v3088, 1.442695
    %v3126 = vpow.pop %v3125
    %v3127 = vmul.f32 %v3089, 1.442695
    %v3128 = vpow.pop %v3127
    %v3129 = vmul.f32 %v3090, 1.442695
    %v3130 = vpow.pop %v3129
    %v3131 = vmul.f32 %v3091, 1.442695
    %v3132 = vpow.pop %v3131
    %v3133 = vmul.f32 %v3092, 1.442695
    %v3134 = vpow.pop %v3133
    %v3135 = vmul.f32 %v3093, 1.442695
    %v3136 = vpow.pop %v3135
    %v3137 = vmul.f32 %v3094, 1.442695
    %v3138 = vpow.pop %v3137
    %v3139 = vmul.f32 %v3095, 1.442695
    %v3140 = vpow.pop %v3139
    %v3141 = vmul.f32 %v3096, 1.442695
    %v3142 = vpow.pop %v3141
    %v3143 = vmul.f32 %v3097, 1.442695
    %v3144 = vpow.pop %v3143
    %v3145 = vmul.f32 %v3098, 1.442695
    %v3146 = vpow.pop %v3145
    %v3147 = vmul.f32 %v3099, 1.442695
    %v3148 = vpow.pop %v3147
    %v3149 = vmul.f32 %v3100, 1.442695
    %v3150 = vpow.pop %v3149
    %v3151 = vmul.f32 %v3101, 1.442695
    %v3152 = vpow.pop %v3151
    %v3153 = vmul.f32 %v3102, 1.442695
    %v3154 = vpow.pop %v3153
    %v3155 = vmul.f32 %v3103, 1.442695
    %v3156 = vpow.pop %v3155
    %v3157 = vmul.f32 %v3104, 1.442695
    %v3158 = vpow.pop %v3157
    %v3159 = vmul.f32 %v3105, 1.442695
    %v3160 = vpow.pop %v3159
    %v3161 = vmul.f32 %v3106, 1.442695
    %v3162 = vpow.pop %v3161
    %v3163 = vmul.f32 %v3107, 1.442695
    %v3164 = vpow.pop %v3163
    %v3165 = vmul.f32 %v3108, 1.442695
    %v3166 = vpow.pop %v3165
    %v3167 = vmul.f32 %v3109, 1.442695
    %v3168 = vpow.pop %v3167
    %v3169 = vmul.f32 %v3110, 1.442695
    %v3170 = vpow.pop %v3169
    %v3171 = vmul.f32 %v3111, 1.442695
    %v3172 = vpow.pop %v3171
    %v3173 = vmul.f32 %v3112, 1.442695
    %v3174 = vpow.pop %v3173
    %v3175 = vmul.f32 %v3113, 1.442695
    %v3176 = vpow.pop %v3175
    %v3177 = vmul.f32 %v3114, 1.442695
    %v3178 = vpow.pop %v3177
    %v3179 = vadd.f32 %v3116, 1.0
    %v3180 = vadd.f32 %v3118, 1.0
    %v3181 = vadd.f32 %v3120, 1.0
    %v3182 = vadd.f32 %v3122, 1.0
    %v3183 = vadd.f32 %v3124, 1.0
    %v3184 = vadd.f32 %v3126, 1.0
    %v3185 = vadd.f32 %v3128, 1.0
    %v3186 = vadd.f32 %v3130, 1.0
    %v3187 = vadd.f32 %v3132, 1.0
    %v3188 = vadd.f32 %v3134, 1.0
    %v3189 = vadd.f32 %v3136, 1.0
    %v3190 = vadd.f32 %v3138, 1.0
    %v3191 = vadd.f32 %v3140, 1.0
    %v3192 = vadd.f32 %v3142, 1.0
    %v3193 = vadd.f32 %v3144, 1.0
    %v3194 = vadd.f32 %v3146, 1.0
    %v3195 = vadd.f32 %v3148, 1.0
    %v3196 = vadd.f32 %v3150, 1.0
    %v3197 = vadd.f32 %v3152, 1.0
    %v3198 = vadd.f32 %v3154, 1.0
    %v3199 = vadd.f32 %v3156, 1.0
    %v3200 = vadd.f32 %v3158, 1.0
    %v3201 = vadd.f32 %v3160, 1.0
    %v3202 = vadd.f32 %v3162, 1.0
    %v3203 = vadd.f32 %v3164, 1.0
    %v3204 = vadd.f32 %v3166, 1.0
    %v3205 = vadd.f32 %v3168, 1.0
    %v3206 = vadd.f32 %v3170, 1.0
    %v3207 = vadd.f32 %v3172, 1.0
    %v3208 = vadd.f32 %v3174, 1.0
    %v3209 = vadd.f32 %v3176, 1.0
    %v3210 = vadd.f32 %v3178, 1.0
    %v3211 = vrcp.pop %v3179
    %v3212 = vmul.f32 1.0, %v3211
    %v3213 = vrcp.pop %v3180
    %v3214 = vmul.f32 1.0, %v3213
    %v3215 = vrcp.pop %v3181
    %v3216 = vmul.f32 1.0, %v3215
    %v3217 = vrcp.pop %v3182
    %v3218 = vmul.f32 1.0, %v3217
    %v3219 = vrcp.pop %v3183
    %v3220 = vmul.f32 1.0, %v3219
    %v3221 = vrcp.pop %v3184
    %v3222 = vmul.f32 1.0, %v3221
    %v3223 = vrcp.pop %v3185
    %v3224 = vmul.f32 1.0, %v3223
    %v3225 = vrcp.pop %v3186
    %v3226 = vmul.f32 1.0, %v3225
    %v3227 = vrcp.pop %v3187
    %v3228 = vmul.f32 1.0, %v3227
    %v3229 = vrcp.pop %v3188
    %v3230 = vmul.f32 1.0, %v3229
    %v3231 = vrcp.pop %v3189
    %v3232 = vmul.f32 1.0, %v3231
    %v3233 = vrcp.pop %v3190
    %v3234 = vmul.f32 1.0, %v3233
    %v3235 = vrcp.pop %v3191
    %v3236 = vmul.f32 1.0, %v3235
    %v3237 = vrcp.pop %v3192
    %v3238 = vmul.f32 1.0, %v3237
    %v3239 = vrcp.pop %v3193
    %v3240 = vmul.f32 1.0, %v3239
    %v3241 = vrcp.pop %v3194
    %v3242 = vmul.f32 1.0, %v3241
    %v3243 = vrcp.pop %v3195
    %v3244 = vmul.f32 1.0, %v3243
    %v3245 = vrcp.pop %v3196
    %v3246 = vmul.f32 1.0, %v3245
    %v3247 = vrcp.pop %v3197
    %v3248 = vmul.f32 1.0, %v3247
    %v3249 = vrcp.pop %v3198
    %v3250 = vmul.f32 1.0, %v3249
    %v3251 = vrcp.pop %v3199
    %v3252 = vmul.f32 1.0, %v3251
    %v3253 = vrcp.pop %v3200
    %v3254 = vmul.f32 1.0, %v3253
    %v3255 = vrcp.pop %v3201
    %v3256 = vmul.f32 1.0, %v3255
    %v3257 = vrcp.pop %v3202
    %v3258 = vmul.f32 1.0, %v3257
    %v3259 = vrcp.pop %v3203
    %v3260 = vmul.f32 1.0, %v3259
    %v3261 = vrcp.pop %v3204
    %v3262 = vmul.f32 1.0, %v3261
    %v3263 = vrcp.pop %v3205
    %v3264 = vmul.f32 1.0, %v3263
    %v3265 = vrcp.pop %v3206
    %v3266 = vmul.f32 1.0, %v3265
    %v3267 = vrcp.pop %v3207
    %v3268 = vmul.f32 1.0, %v3267
    %v3269 = vrcp.pop %v3208
    %v3270 = vmul.f32 1.0, %v3269
    %v3271 = vrcp.pop %v3209
    %v3272 = vmul.f32 1.0, %v3271
    %v3273 = vrcp.pop %v3210
    %v3274 = vmul.f32 1.0, %v3273
    %3275 = vst [vmem:[#allocation2] sm:$0xff] %v3212
    %3276 = vst [vmem:[#allocation2 + $0x10] sm:$0xff] %v3214
    %3277 = vst [vmem:[#allocation2 + $0x20] sm:$0xff] %v3216
    %3278 = vst [vmem:[#allocation2 + $0x30] sm:$0xff] %v3218
    %3279 = vst [vmem:[#allocation2 + $0x40] sm:$0xff] %v3220
    %3280 = vst [vmem:[#allocation2 + $0x50] sm:$0xff] %v3222
    %3281 = vst [vmem:[#allocation2 + $0x60] sm:$0xff] %v3224
    %3282 = vst [vmem:[#allocation2 + $0x70] sm:$0xff] %v3226
    %3283 = vst [vmem:[#allocation2 + $0x80] sm:$0xff] %v3228
    %3284 = vst [vmem:[#allocation2 + $0x90] sm:$0xff] %v3230
    %3285 = vst [vmem:[#allocation2 + $0xa0] sm:$0xff] %v3232
    %3286 = vst [vmem:[#allocation2 + $0xb0] sm:$0xff] %v3234
    %3287 = vst [vmem:[#allocation2 + $0xc0] sm:$0xff] %v3236
    %3288 = vst [vmem:[#allocation2 + $0xd0] sm:$0xff] %v3238
    %3289 = vst [vmem:[#allocation2 + $0xe0] sm:$0xff] %v3240
    %3290 = vst [vmem:[#allocation2 + $0xf0] sm:$0xff] %v3242
    %3291 = vst [vmem:[#allocation2 + $0x100] sm:$0xff] %v3244
    %3292 = vst [vmem:[#allocation2 + $0x110] sm:$0xff] %v3246
    %3293 = vst [vmem:[#allocation2 + $0x120] sm:$0xff] %v3248
    %3294 = vst [vmem:[#allocation2 + $0x130] sm:$0xff] %v3250
    %3295 = vst [vmem:[#allocation2 + $0x140] sm:$0xff] %v3252
    %3296 = vst [vmem:[#allocation2 + $0x150] sm:$0xff] %v3254
    %3297 = vst [vmem:[#allocation2 + $0x160] sm:$0xff] %v3256
    %3298 = vst [vmem:[#allocation2 + $0x170] sm:$0xff] %v3258
    %3299 = vst [vmem:[#allocation2 + $0x180] sm:$0xff] %v3260
    %3300 = vst [vmem:[#allocation2 + $0x190] sm:$0xff] %v3262
    %3301 = vst [vmem:[#allocation2 + $0x1a0] sm:$0xff] %v3264
    %3302 = vst [vmem:[#allocation2 + $0x1b0] sm:$0xff] %v3266
    %3303 = vst [vmem:[#allocation2 + $0x1c0] sm:$0xff] %v3268
    %3304 = vst [vmem:[#allocation2 + $0x1d0] sm:$0xff] %v3270
    %3305 = vst [vmem:[#allocation2 + $0x1e0] sm:$0xff] %v3272
    %3306 = vst [vmem:[#allocation2 + $0x1f0] sm:$0xff] %v3274
    %v3307 = vld [vmem:[%s2 + $0x1a0] sm:$0xf]
    %v3308 = vld [vmem:[%s2 + $0x1a4] sm:$0xf]
    %v3309 = vld [vmem:[%s2 + $0x1a8] sm:$0xf]
    %v3310 = vld [vmem:[%s2 + $0x1ac] sm:$0xf]
    %v3311 = vld [vmem:[%s2 + $0x1b0] sm:$0xf]
    %v3312 = vld [vmem:[%s2 + $0x1b4] sm:$0xf]
    %v3313 = vld [vmem:[%s2 + $0x1b8] sm:$0xf]
    %v3314 = vld [vmem:[%s2 + $0x1bc] sm:$0xf]
    %v3315 = vld [vmem:[%s2 + $0x1c0] sm:$0xf]
    %v3316 = vld [vmem:[%s2 + $0x1c4] sm:$0xf]
    %v3317 = vld [vmem:[%s2 + $0x1c8] sm:$0xf]
    %v3318 = vld [vmem:[%s2 + $0x1cc] sm:$0xf]
    %v3319 = vld [vmem:[%s2 + $0x1d0] sm:$0xf]
    %v3320 = vld [vmem:[%s2 + $0x1d4] sm:$0xf]
    %v3321 = vld [vmem:[%s2 + $0x1d8] sm:$0xf]
    %v3322 = vld [vmem:[%s2 + $0x1dc] sm:$0xf]
    %v3323 = vld [vmem:[%s3 + $0xa] sm:$0x1]
    %v3324 = vlaneseq
    %v3325 = vshrl.u32 %v3324, 7
    %v3326 = vsub.s32 0, %v3325
    %v3327 = vrot.slane %v3323, %v3326
    %v3344 = vunpack.c.l.b16 %v3307
    %v3345 = vunpack.c.l.b16 %v3308
    %v3346 = vunpack.c.l.b16 %v3309
    %v3347 = vunpack.c.l.b16 %v3310
    %v3348 = vunpack.c.l.b16 %v3311
    %v3349 = vunpack.c.l.b16 %v3312
    %v3350 = vunpack.c.l.b16 %v3313
    %v3351 = vunpack.c.l.b16 %v3314
    %v3352 = vunpack.c.l.b16 %v3315
    %v3353 = vunpack.c.l.b16 %v3316
    %v3354 = vunpack.c.l.b16 %v3317
    %v3355 = vunpack.c.l.b16 %v3318
    %v3356 = vunpack.c.l.b16 %v3319
    %v3357 = vunpack.c.l.b16 %v3320
    %v3358 = vunpack.c.l.b16 %v3321
    %v3359 = vunpack.c.l.b16 %v3322
    %v3360 = vpack.c.b16 %v3345, %v3344
    %v3361 = vpack.c.b16 %v3347, %v3346
    %v3362 = vpack.c.b16 %v3349, %v3348
    %v3363 = vpack.c.b16 %v3351, %v3350
    %v3364 = vpack.c.b16 %v3353, %v3352
    %v3365 = vpack.c.b16 %v3355, %v3354
    %v3366 = vpack.c.b16 %v3357, %v3356
    %v3367 = vpack.c.b16 %v3359, %v3358
    %3376 = vmatprep.subr.bf16.mxu0 0
    %3377 = vmatpush1.bf16.msra.mxu0 %v3360
    %3378 = vmatprep.subr.bf16.mxu0 0
    %3379 = vmatpush1.bf16.msra.mxu0 %v3361
    %3380 = vmatprep.subr.bf16.mxu0 0
    %3381 = vmatpush1.bf16.msra.mxu0 %v3362
    %3382 = vmatprep.subr.bf16.mxu0 0
    %3383 = vmatpush1.bf16.msra.mxu0 %v3363
    %3384 = vmatprep.subr.bf16.mxu0 0
    %3385 = vmatpush1.bf16.msra.mxu0 %v3364
    %3386 = vmatprep.subr.bf16.mxu0 0
    %3387 = vmatpush1.bf16.msra.mxu0 %v3365
    %3388 = vmatprep.subr.bf16.mxu0 0
    %3389 = vmatpush1.bf16.msra.mxu0 %v3366
    %3390 = vmatprep.subr.bf16.mxu0 0
    %3391 = vmatpush1.bf16.msra.mxu0 %v3367
    %3392 = vmatprep.subr.bf16.mxu0 0
    %3393 = vmatpush1.bf16.msra.mxu0 0
    %3394 = vmatprep.subr.bf16.mxu0 0
    %3395 = vmatpush1.bf16.msra.mxu0 0
    %3396 = vmatprep.subr.bf16.mxu0 0
    %3397 = vmatpush1.bf16.msra.mxu0 0
    %3398 = vmatprep.subr.bf16.mxu0 0
    %3399 = vmatpush1.bf16.msra.mxu0 0
    %3400 = vmatprep.subr.bf16.mxu0 0
    %3401 = vmatpush1.bf16.msra.mxu0 0
    %3402 = vmatprep.subr.bf16.mxu0 0
    %3403 = vmatpush1.bf16.msra.mxu0 0
    %3404 = vmatprep.subr.bf16.mxu0 0
    %3405 = vmatpush1.bf16.msra.mxu0 0
    %3406 = vmatprep.subr.bf16.mxu0 0
    %3407 = vmatpush1.bf16.msra.mxu0 0
    %3408 = vmatprep.mubr.bf16.mxu0 0
    %3409 = vmatmul.mubr.bf16.gmra.mrb[0].mxu0 %v2837
    %v3410 = vpop.f32.mrb[0].mxu0
    %v3411 = vadd.f32 %v3327, %v3410
    %v3412 = vpop.f32.mrb[0].mxu0
    %v3413 = vpop.f32.mrb[0].mxu0
    %v3414 = vadd.f32 %v3327, %v3413
    %v3415 = vpop.f32.mrb[0].mxu0
    %3416 = vmatprep.mubr.bf16.mxu0 0
    %3417 = vmatmul.mubr.bf16.gmra.mrb[0].mxu0 %v2838
    %v3418 = vpop.f32.mrb[0].mxu0
    %v3419 = vadd.f32 %v3327, %v3418
    %v3420 = vpop.f32.mrb[0].mxu0
    %v3421 = vpop.f32.mrb[0].mxu0
    %v3422 = vadd.f32 %v3327, %v3421
    %v3423 = vpop.f32.mrb[0].mxu0
    %3424 = vmatprep.mubr.bf16.mxu0 0
    %3425 = vmatmul.mubr.bf16.gmra.mrb[0].mxu0 %v2839
    %v3426 = vpop.f32.mrb[0].mxu0
    %v3427 = vadd.f32 %v3327, %v3426
    %v3428 = vpop.f32.mrb[0].mxu0
    %v3429 = vpop.f32.mrb[0].mxu0
    %v3430 = vadd.f32 %v3327, %v3429
    %v3431 = vpop.f32.mrb[0].mxu0
    %3432 = vmatprep.mubr.bf16.mxu0 0
    %3433 = vmatmul.mubr.bf16.gmra.mrb[0].mxu0 %v2840
    %v3434 = vpop.f32.mrb[0].mxu0
    %v3435 = vadd.f32 %v3327, %v3434
    %v3436 = vpop.f32.mrb[0].mxu0
    %v3437 = vpop.f32.mrb[0].mxu0
    %v3438 = vadd.f32 %v3327, %v3437
    %v3439 = vpop.f32.mrb[0].mxu0
    %3440 = vmatprep.mubr.bf16.mxu0 0
    %3441 = vmatmul.mubr.bf16.gmra.mrb[0].mxu0 %v2841
    %v3442 = vpop.f32.mrb[0].mxu0
    %v3443 = vadd.f32 %v3327, %v3442
    %v3444 = vpop.f32.mrb[0].mxu0
    %v3445 = vpop.f32.mrb[0].mxu0
    %v3446 = vadd.f32 %v3327, %v3445
    %v3447 = vpop.f32.mrb[0].mxu0
    %3448 = vmatprep.mubr.bf16.mxu0 0
    %3449 = vmatmul.mubr.bf16.gmra.mrb[0].mxu0 %v2842
    %v3450 = vpop.f32.mrb[0].mxu0
    %v3451 = vadd.f32 %v3327, %v3450
    %v3452 = vpop.f32.mrb[0].mxu0
    %v3453 = vpop.f32.mrb[0].mxu0
    %v3454 = vadd.f32 %v3327, %v3453
    %v3455 = vpop.f32.mrb[0].mxu0
    %3456 = vmatprep.mubr.bf16.mxu0 0
    %3457 = vmatmul.mubr.bf16.gmra.mrb[0].mxu0 %v2843
    %v3458 = vpop.f32.mrb[0].mxu0
    %v3459 = vadd.f32 %v3327, %v3458
    %v3460 = vpop.f32.mrb[0].mxu0
    %v3461 = vpop.f32.mrb[0].mxu0
    %v3462 = vadd.f32 %v3327, %v3461
    %v3463 = vpop.f32.mrb[0].mxu0
    %3464 = vmatprep.mubr.bf16.mxu0 0
    %3465 = vmatmul.mubr.bf16.gmra.mrb[0].mxu0 %v2844
    %v3466 = vpop.f32.mrb[0].mxu0
    %v3467 = vadd.f32 %v3327, %v3466
    %v3468 = vpop.f32.mrb[0].mxu0
    %v3469 = vpop.f32.mrb[0].mxu0
    %v3470 = vadd.f32 %v3327, %v3469
    %v3471 = vpop.f32.mrb[0].mxu0
    %3472 = vmatprep.mubr.bf16.mxu0 0
    %3473 = vmatmul.mubr.bf16.gmra.mrb[0].mxu0 %v2845
    %v3474 = vpop.f32.mrb[0].mxu0
    %v3475 = vadd.f32 %v3327, %v3474
    %v3476 = vpop.f32.mrb[0].mxu0
    %v3477 = vpop.f32.mrb[0].mxu0
    %v3478 = vadd.f32 %v3327, %v3477
    %v3479 = vpop.f32.mrb[0].mxu0
    %3480 = vmatprep.mubr.bf16.mxu0 0
    %3481 = vmatmul.mubr.bf16.gmra.mrb[0].mxu0 %v2846
    %v3482 = vpop.f32.mrb[0].mxu0
    %v3483 = vadd.f32 %v3327, %v3482
    %v3484 = vpop.f32.mrb[0].mxu0
    %v3485 = vpop.f32.mrb[0].mxu0
    %v3486 = vadd.f32 %v3327, %v3485
    %v3487 = vpop.f32.mrb[0].mxu0
    %3488 = vmatprep.mubr.bf16.mxu0 0
    %3489 = vmatmul.mubr.bf16.gmra.mrb[0].mxu0 %v2847
    %v3490 = vpop.f32.mrb[0].mxu0
    %v3491 = vadd.f32 %v3327, %v3490
    %v3492 = vpop.f32.mrb[0].mxu0
    %v3493 = vpop.f32.mrb[0].mxu0
    %v3494 = vadd.f32 %v3327, %v3493
    %v3495 = vpop.f32.mrb[0].mxu0
    %3496 = vmatprep.mubr.bf16.mxu0 0
    %3497 = vmatmul.mubr.bf16.gmra.mrb[0].mxu0 %v2848
    %v3498 = vpop.f32.mrb[0].mxu0
    %v3499 = vadd.f32 %v3327, %v3498
    %v3500 = vpop.f32.mrb[0].mxu0
    %v3501 = vpop.f32.mrb[0].mxu0
    %v3502 = vadd.f32 %v3327, %v3501
    %v3503 = vpop.f32.mrb[0].mxu0
    %3504 = vmatprep.mubr.bf16.mxu0 0
    %3505 = vmatmul.mubr.bf16.gmra.mrb[0].mxu0 %v2849
    %v3506 = vpop.f32.mrb[0].mxu0
    %v3507 = vadd.f32 %v3327, %v3506
    %v3508 = vpop.f32.mrb[0].mxu0
    %v3509 = vpop.f32.mrb[0].mxu0
    %v3510 = vadd.f32 %v3327, %v3509
    %v3511 = vpop.f32.mrb[0].mxu0
    %3512 = vmatprep.mubr.bf16.mxu0 0
    %3513 = vmatmul.mubr.bf16.gmra.mrb[0].mxu0 %v2850
    %v3514 = vpop.f32.mrb[0].mxu0
    %v3515 = vadd.f32 %v3327, %v3514
    %v3516 = vpop.f32.mrb[0].mxu0
    %v3517 = vpop.f32.mrb[0].mxu0
    %v3518 = vadd.f32 %v3327, %v3517
    %v3519 = vpop.f32.mrb[0].mxu0
    %3520 = vmatprep.mubr.bf16.mxu0 0
    %3521 = vmatmul.mubr.bf16.gmra.mrb[0].mxu0 %v2851
    %v3522 = vpop.f32.mrb[0].mxu0
    %v3523 = vadd.f32 %v3327, %v3522
    %v3524 = vpop.f32.mrb[0].mxu0
    %v3525 = vpop.f32.mrb[0].mxu0
    %v3526 = vadd.f32 %v3327, %v3525
    %v3527 = vpop.f32.mrb[0].mxu0
    %3528 = vmatprep.mubr.bf16.mxu0 0
    %3529 = vmatmul.mubr.bf16.gmra.mrb[0].mxu0 %v2852
    %v3530 = vpop.f32.mrb[0].mxu0
    %v3531 = vadd.f32 %v3327, %v3530
    %v3532 = vpop.f32.mrb[0].mxu0
    %v3533 = vpop.f32.mrb[0].mxu0
    %v3534 = vadd.f32 %v3327, %v3533
    %v3535 = vpop.f32.mrb[0].mxu0
    %3536 = vdwg.mxu0
    %v3537 = vxor.u32 %v3411, 2147483648
    %v3538 = vxor.u32 %v3414, 2147483648
    %v3539 = vxor.u32 %v3419, 2147483648
    %v3540 = vxor.u32 %v3422, 2147483648
    %v3541 = vxor.u32 %v3427, 2147483648
    %v3542 = vxor.u32 %v3430, 2147483648
    %v3543 = vxor.u32 %v3435, 2147483648
    %v3544 = vxor.u32 %v3438, 2147483648
    %v3545 = vxor.u32 %v3443, 2147483648
    %v3546 = vxor.u32 %v3446, 2147483648
    %v3547 = vxor.u32 %v3451, 2147483648
    %v3548 = vxor.u32 %v3454, 2147483648
    %v3549 = vxor.u32 %v3459, 2147483648
    %v3550 = vxor.u32 %v3462, 2147483648
    %v3551 = vxor.u32 %v3467, 2147483648
    %v3552 = vxor.u32 %v3470, 2147483648
    %v3553 = vxor.u32 %v3475, 2147483648
    %v3554 = vxor.u32 %v3478, 2147483648
    %v3555 = vxor.u32 %v3483, 2147483648
    %v3556 = vxor.u32 %v3486, 2147483648
    %v3557 = vxor.u32 %v3491, 2147483648
    %v3558 = vxor.u32 %v3494, 2147483648
    %v3559 = vxor.u32 %v3499, 2147483648
    %v3560 = vxor.u32 %v3502, 2147483648
    %v3561 = vxor.u32 %v3507, 2147483648
    %v3562 = vxor.u32 %v3510, 2147483648
    %v3563 = vxor.u32 %v3515, 2147483648
    %v3564 = vxor.u32 %v3518, 2147483648
    %v3565 = vxor.u32 %v3523, 2147483648
    %v3566 = vxor.u32 %v3526, 2147483648
    %v3567 = vxor.u32 %v3531, 2147483648
    %v3568 = vxor.u32 %v3534, 2147483648
    %v3569 = vmul.f32 %v3537, 1.442695
    %v3570 = vpow.pop %v3569
    %v3571 = vmul.f32 %v3538, 1.442695
    %v3572 = vpow.pop %v3571
    %v3573 = vmul.f32 %v3539, 1.442695
    %v3574 = vpow.pop %v3573
    %v3575 = vmul.f32 %v3540, 1.442695
    %v3576 = vpow.pop %v3575
    %v3577 = vmul.f32 %v3541, 1.442695
    %v3578 = vpow.pop %v3577
    %v3579 = vmul.f32 %v3542, 1.442695
    %v3580 = vpow.pop %v3579
    %v3581 = vmul.f32 %v3543, 1.442695
    %v3582 = vpow.pop %v3581
    %v3583 = vmul.f32 %v3544, 1.442695
    %v3584 = vpow.pop %v3583
    %v3585 = vmul.f32 %v3545, 1.442695
    %v3586 = vpow.pop %v3585
    %v3587 = vmul.f32 %v3546, 1.442695
    %v3588 = vpow.pop %v3587
    %v3589 = vmul.f32 %v3547, 1.442695
    %v3590 = vpow.pop %v3589
    %v3591 = vmul.f32 %v3548, 1.442695
    %v3592 = vpow.pop %v3591
    %v3593 = vmul.f32 %v3549, 1.442695
    %v3594 = vpow.pop %v3593
    %v3595 = vmul.f32 %v3550, 1.442695
    %v3596 = vpow.pop %v3595
    %v3597 = vmul.f32 %v3551, 1.442695
    %v3598 = vpow.pop %v3597
    %v3599 = vmul.f32 %v3552, 1.442695
    %v3600 = vpow.pop %v3599
    %v3601 = vmul.f32 %v3553, 1.442695
    %v3602 = vpow.pop %v3601
    %v3603 = vmul.f32 %v3554, 1.442695
    %v3604 = vpow.pop %v3603
    %v3605 = vmul.f32 %v3555, 1.442695
    %v3606 = vpow.pop %v3605
    %v3607 = vmul.f32 %v3556, 1.442695
    %v3608 = vpow.pop %v3607
    %v3609 = vmul.f32 %v3557, 1.442695
    %v3610 = vpow.pop %v3609
    %v3611 = vmul.f32 %v3558, 1.442695
    %v3612 = vpow.pop %v3611
    %v3613 = vmul.f32 %v3559, 1.442695
    %v3614 = vpow.pop %v3613
    %v3615 = vmul.f32 %v3560, 1.442695
    %v3616 = vpow.pop %v3615
    %v3617 = vmul.f32 %v3561, 1.442695
    %v3618 = vpow.pop %v3617
    %v3619 = vmul.f32 %v3562, 1.442695
    %v3620 = vpow.pop %v3619
    %v3621 = vmul.f32 %v3563, 1.442695
    %v3622 = vpow.pop %v3621
    %v3623 = vmul.f32 %v3564, 1.442695
    %v3624 = vpow.pop %v3623
    %v3625 = vmul.f32 %v3565, 1.442695
    %v3626 = vpow.pop %v3625
    %v3627 = vmul.f32 %v3566, 1.442695
    %v3628 = vpow.pop %v3627
    %v3629 = vmul.f32 %v3567, 1.442695
    %v3630 = vpow.pop %v3629
    %v3631 = vmul.f32 %v3568, 1.442695
    %v3632 = vpow.pop %v3631
    %v3633 = vadd.f32 %v3570, 1.0
    %v3634 = vadd.f32 %v3572, 1.0
    %v3635 = vadd.f32 %v3574, 1.0
    %v3636 = vadd.f32 %v3576, 1.0
    %v3637 = vadd.f32 %v3578, 1.0
    %v3638 = vadd.f32 %v3580, 1.0
    %v3639 = vadd.f32 %v3582, 1.0
    %v3640 = vadd.f32 %v3584, 1.0
    %v3641 = vadd.f32 %v3586, 1.0
    %v3642 = vadd.f32 %v3588, 1.0
    %v3643 = vadd.f32 %v3590, 1.0
    %v3644 = vadd.f32 %v3592, 1.0
    %v3645 = vadd.f32 %v3594, 1.0
    %v3646 = vadd.f32 %v3596, 1.0
    %v3647 = vadd.f32 %v3598, 1.0
    %v3648 = vadd.f32 %v3600, 1.0
    %v3649 = vadd.f32 %v3602, 1.0
    %v3650 = vadd.f32 %v3604, 1.0
    %v3651 = vadd.f32 %v3606, 1.0
    %v3652 = vadd.f32 %v3608, 1.0
    %v3653 = vadd.f32 %v3610, 1.0
    %v3654 = vadd.f32 %v3612, 1.0
    %v3655 = vadd.f32 %v3614, 1.0
    %v3656 = vadd.f32 %v3616, 1.0
    %v3657 = vadd.f32 %v3618, 1.0
    %v3658 = vadd.f32 %v3620, 1.0
    %v3659 = vadd.f32 %v3622, 1.0
    %v3660 = vadd.f32 %v3624, 1.0
    %v3661 = vadd.f32 %v3626, 1.0
    %v3662 = vadd.f32 %v3628, 1.0
    %v3663 = vadd.f32 %v3630, 1.0
    %v3664 = vadd.f32 %v3632, 1.0
    %v3665 = vrcp.pop %v3633
    %v3666 = vmul.f32 1.0, %v3665
    %v3667 = vrcp.pop %v3634
    %v3668 = vmul.f32 1.0, %v3667
    %v3669 = vrcp.pop %v3635
    %v3670 = vmul.f32 1.0, %v3669
    %v3671 = vrcp.pop %v3636
    %v3672 = vmul.f32 1.0, %v3671
    %v3673 = vrcp.pop %v3637
    %v3674 = vmul.f32 1.0, %v3673
    %v3675 = vrcp.pop %v3638
    %v3676 = vmul.f32 1.0, %v3675
    %v3677 = vrcp.pop %v3639
    %v3678 = vmul.f32 1.0, %v3677
    %v3679 = vrcp.pop %v3640
    %v3680 = vmul.f32 1.0, %v3679
    %v3681 = vrcp.pop %v3641
    %v3682 = vmul.f32 1.0, %v3681
    %v3683 = vrcp.pop %v3642
    %v3684 = vmul.f32 1.0, %v3683
    %v3685 = vrcp.pop %v3643
    %v3686 = vmul.f32 1.0, %v3685
    %v3687 = vrcp.pop %v3644
    %v3688 = vmul.f32 1.0, %v3687
    %v3689 = vrcp.pop %v3645
    %v3690 = vmul.f32 1.0, %v3689
    %v3691 = vrcp.pop %v3646
    %v3692 = vmul.f32 1.0, %v3691
    %v3693 = vrcp.pop %v3647
    %v3694 = vmul.f32 1.0, %v3693
    %v3695 = vrcp.pop %v3648
    %v3696 = vmul.f32 1.0, %v3695
    %v3697 = vrcp.pop %v3649
    %v3698 = vmul.f32 1.0, %v3697
    %v3699 = vrcp.pop %v3650
    %v3700 = vmul.f32 1.0, %v3699
    %v3701 = vrcp.pop %v3651
    %v3702 = vmul.f32 1.0, %v3701
    %v3703 = vrcp.pop %v3652
    %v3704 = vmul.f32 1.0, %v3703
    %v3705 = vrcp.pop %v3653
    %v3706 = vmul.f32 1.0, %v3705
    %v3707 = vrcp.pop %v3654
    %v3708 = vmul.f32 1.0, %v3707
    %v3709 = vrcp.pop %v3655
    %v3710 = vmul.f32 1.0, %v3709
    %v3711 = vrcp.pop %v3656
    %v3712 = vmul.f32 1.0, %v3711
    %v3713 = vrcp.pop %v3657
    %v3714 = vmul.f32 1.0, %v3713
    %v3715 = vrcp.pop %v3658
    %v3716 = vmul.f32 1.0, %v3715
    %v3717 = vrcp.pop %v3659
    %v3718 = vmul.f32 1.0, %v3717
    %v3719 = vrcp.pop %v3660
    %v3720 = vmul.f32 1.0, %v3719
    %v3721 = vrcp.pop %v3661
    %v3722 = vmul.f32 1.0, %v3721
    %v3723 = vrcp.pop %v3662
    %v3724 = vmul.f32 1.0, %v3723
    %v3725 = vrcp.pop %v3663
    %v3726 = vmul.f32 1.0, %v3725
    %v3727 = vrcp.pop %v3664
    %v3728 = vmul.f32 1.0, %v3727
    %3729 = vst [vmem:[#allocation2 + $0x8] sm:$0xff] %v3666
    %3730 = vst [vmem:[#allocation2 + $0x18] sm:$0xff] %v3668
    %3731 = vst [vmem:[#allocation2 + $0x28] sm:$0xff] %v3670
    %3732 = vst [vmem:[#allocation2 + $0x38] sm:$0xff] %v3672
    %3733 = vst [vmem:[#allocation2 + $0x48] sm:$0xff] %v3674
    %3734 = vst [vmem:[#allocation2 + $0x58] sm:$0xff] %v3676
    %3735 = vst [vmem:[#allocation2 + $0x68] sm:$0xff] %v3678
    %3736 = vst [vmem:[#allocation2 + $0x78] sm:$0xff] %v3680
    %3737 = vst [vmem:[#allocation2 + $0x88] sm:$0xff] %v3682
    %3738 = vst [vmem:[#allocation2 + $0x98] sm:$0xff] %v3684
    %3739 = vst [vmem:[#allocation2 + $0xa8] sm:$0xff] %v3686
    %3740 = vst [vmem:[#allocation2 + $0xb8] sm:$0xff] %v3688
    %3741 = vst [vmem:[#allocation2 + $0xc8] sm:$0xff] %v3690
    %3742 = vst [vmem:[#allocation2 + $0xd8] sm:$0xff] %v3692
    %3743 = vst [vmem:[#allocation2 + $0xe8] sm:$0xff] %v3694
    %3744 = vst [vmem:[#allocation2 + $0xf8] sm:$0xff] %v3696
    %3745 = vst [vmem:[#allocation2 + $0x108] sm:$0xff] %v3698
    %3746 = vst [vmem:[#allocation2 + $0x118] sm:$0xff] %v3700
    %3747 = vst [vmem:[#allocation2 + $0x128] sm:$0xff] %v3702
    %3748 = vst [vmem:[#allocation2 + $0x138] sm:$0xff] %v3704
    %3749 = vst [vmem:[#allocation2 + $0x148] sm:$0xff] %v3706
    %3750 = vst [vmem:[#allocation2 + $0x158] sm:$0xff] %v3708
    %3751 = vst [vmem:[#allocation2 + $0x168] sm:$0xff] %v3710
    %3752 = vst [vmem:[#allocation2 + $0x178] sm:$0xff] %v3712
    %3753 = vst [vmem:[#allocation2 + $0x188] sm:$0xff] %v3714
    %3754 = vst [vmem:[#allocation2 + $0x198] sm:$0xff] %v3716
    %3755 = vst [vmem:[#allocation2 + $0x1a8] sm:$0xff] %v3718
    %3756 = vst [vmem:[#allocation2 + $0x1b8] sm:$0xff] %v3720
    %3757 = vst [vmem:[#allocation2 + $0x1c8] sm:$0xff] %v3722
    %3758 = vst [vmem:[#allocation2 + $0x1d8] sm:$0xff] %v3724
    %3759 = vst [vmem:[#allocation2 + $0x1e8] sm:$0xff] %v3726
    %3760 = vst [vmem:[#allocation2 + $0x1f8] sm:$0xff] %v3728
    // Predicated region
    $region18: #{vae_forward.1} parent=1 // pred_check
      _
    $region19: #{vae_forward.1} parent=1 // pred_check_branch
      %3762 = sbr.rel (0) target = $region21
    $region20: #{vae_forward.1} parent=1 // pred_region
      %s3764 = ssub.s32 8192, 8192
      %3765 = vsyncadd [#allocation3], %s3764
      %s3766 = sshll.u32 [#allocation2], 4
      %s3767 = int_to_ptr.vmem [resolvable:$true] %s3766
      %3772 = dma.vmem_to_hbm [thread:$0]  %s3767, 8192, %s4, [#allocation3], 256, 256, 16
    $region21: #{vae_forward.1} parent=1 // pred_fallthru
      _
    // Predicated region
    $region22: #{vae_forward.1} parent=1 // pred_check
      _
    $region23: #{vae_forward.1} parent=1 // pred_check_branch
      %3774 = sbr.rel (0) target = $region25
    $region24: #{vae_forward.1} parent=1 // pred_region
      _
    $region25: #{vae_forward.1} parent=1 // pred_fallthru
      _
    // Predicated region
    $region26: #{vae_forward.1} parent=1 // pred_check
      _
    $region27: #{vae_forward.1} parent=1 // pred_check_branch
      %3776 = sbr.rel (0) target = $region29
    $region28: #{vae_forward.1} parent=1 // pred_region
      %3777 = dma.done [#allocation3], 8192
    $region29: #{vae_forward.1} parent=1 // pred_fallthru
      _
    // Predicated region
    $region30: #{vae_forward.1} parent=1 // pred_check
      _
    $region31: #{vae_forward.1} parent=1 // pred_check_branch
      %3779 = sbr.rel (0) target = $region33
    $region32: #{vae_forward.1} parent=1 // pred_region
      _
    $region33: #{vae_forward.1} parent=1 // pred_fallthru
      _
    %3780 = vsyncpa [#allocation3], 1

</llo_original>
